<compile_context>
chip_gen: v7x
topology: tpu7x:2x2x1
jax: 0.10.0
libtpu: 0.0.40
codegen_flags: <defaults>
</compile_context>

<pallas_src>
import jax
import jax.numpy as jnp
from jax.experimental import pallas as pl
from jax.experimental.pallas import tpu as pltpu


def _ceil_div(a, b):
    return -(-a // b)


def _round_up(a, b):
    return _ceil_div(a, b) * b


def _make_conv_kernel(TH, Wt, Cin, Cpad, K, compute_dtype, relu):
    KC = K * Cin

    def conv_kernel(xm_ref, xh_ref, w_ref, b_ref, o_ref, patch_a, patch_b):
        # xm_ref:  (1, TH,  WP, Cin)   padded rows [h*TH, h*TH+TH)
        # xh_ref:  (1, K-1, WP, Cin)   padded rows [h*TH+TH, h*TH+TH+K-1)
        # w_ref:   (K, K*Cin, Cpad)    weight slab (compute dtype), dy-major
        # b_ref:   (1, Cpad)           f32 bias (zero-padded lanes)
        # o_ref:   (1, TH, Wt, Cpad)   output row tile
        # patch_a/patch_b: (TH, Wt, K*Cin) ping-pong im2col scratch
        patches = (patch_a, patch_b)

        def build_taps(dy, patch):
            # Tap dy needs padded rows [h*TH+dy, h*TH+dy+TH):
            #   main-block rows [dy, TH) -> patch rows [0, TH-dy)
            #   halo rows       [0, dy)  -> patch rows [TH-dy, TH)
            # The dx shift is a static sublane-offset slice (see v5e note above).
            for dx in range(K):
                c0 = dx * Cin
                if TH - dy > 0:
                    patch[0:TH - dy, :, c0:c0 + Cin] = (
                        xm_ref[0, dy:TH, dx:dx + Wt, :].astype(compute_dtype))
                if dy > 0:
                    patch[TH - dy:TH, :, c0:c0 + Cin] = (
                        xh_ref[0, 0:dy, dx:dx + Wt, :].astype(compute_dtype))

        build_taps(0, patches[0])
        acc = None
        for dy in range(K):
            # Write the taps for dy+1 into the *other* buffer before the dy
            # matmul: the two are independent, so the scheduler can overlap the
            # im2col stores with the MXU work for dy.
            if dy + 1 < K:
                build_taps(dy + 1, patches[(dy + 1) % 2])
            patch2d = patches[dy % 2][...].reshape(TH * Wt, KC)
            part = jnp.dot(patch2d, w_ref[dy],
                           preferred_element_type=jnp.float32)
            acc = part if acc is None else acc + part

        # Fused bias (+ ReLU) epilogue in f32.
        acc = acc + b_ref[...]
        if relu:
            acc = jnp.maximum(acc, 0.0)
        o_ref[...] = acc.reshape(1, TH, Wt, Cpad).astype(o_ref.dtype)

    return conv_kernel


def _padded_block_bytes(shape, dtype):
    """VMEM footprint of a block after (8, 128) tiling of the minor dims."""
    s = [int(d) for d in shape]
    s[-1] = _round_up(s[-1], 128)
    if len(s) >= 2:
        s[-2] = _round_up(s[-2], 8)
    n = 1
    for d in s:
        n *= d
    return n * jnp.dtype(dtype).itemsize


def _vmem_estimate(TH, WP, Wt, Cin, Cpad, K, x_dtype, compute_dtype, out_dtype):
    halo = K - 1
    KC = K * Cin
    est = 0
    # Auto-pipelined blocks are double-buffered by Pallas (buffer_count = 2).
    est += 2 * _padded_block_bytes((1, TH, WP, Cin), x_dtype)      # main rows
    est += 2 * _padded_block_bytes((1, halo, WP, Cin), x_dtype)    # halo rows
    est += 2 * _padded_block_bytes((K, KC, Cpad), compute_dtype)   # weights
    est += 2 * _padded_block_bytes((1, Cpad), jnp.float32)         # bias
    est += 2 * _padded_block_bytes((1, TH, Wt, Cpad), out_dtype)   # output
    # Scratch (single-buffered, x2 ping-pong) + f32 accumulator temporaries.
    est += 2 * _padded_block_bytes((TH, Wt, KC), compute_dtype)
    est += 2 * _padded_block_bytes((TH * Wt, Cpad), jnp.float32)
    return est


def _conv_relu_reference(x, weight, bias, *, stride, padding, relu):
    out = jax.lax.conv_general_dilated(
        x, weight, window_strides=(stride, stride),
        padding=((padding, padding), (padding, padding)),
        dimension_numbers=("NCHW", "OIHW", "NCHW"),
        precision=jax.lax.Precision.HIGHEST)
    out = out + bias.reshape(1, -1, 1, 1)
    return jnp.maximum(out, 0.0) if relu else out


def conv_forward(x_nchw, weight, bias=None, *, kernel_size=3, stride=1,
                 relu=True, compute_dtype=jnp.bfloat16, use_pallas=None):
    """Forward of Conv (Mnet.py, bn=False): 'same' conv + bias (+ ReLU), NCHW."""
    # TODO(synk): optional BatchNorm2d branch (bn=True) is not implemented; the
    # module's default configuration (bn=False) is what this kernel covers.
    N, Cin, H, W = x_nchw.shape
    Cout = weight.shape[0]
    K = int(kernel_size)
    assert x_nchw.shape[1] == weight.shape[1], (x_nchw.shape, weight.shape)
    if bias is None:
        bias = jnp.zeros((Cout,), x_nchw.dtype)

    pallas_ok = (stride == 1 and K % 2 == 1 and K >= 3)
    if use_pallas is None:
        # Tiny-channel layers (e.g. the RGB stem) starve the MXU contraction
        # and make every im2col store a narrow masked lane write: XLA's conv
        # is the better tool there.
        use_pallas = pallas_ok and (Cin * K >= 24) and (Cout >= 8)
    if not (use_pallas and pallas_ok):
        return _conv_relu_reference(x_nchw, weight, bias, stride=stride,
                                    padding=(K - 1) // 2, relu=relu)

    halo = K - 1
    pad = halo // 2
    LANE = 128

    # Cout lane-padding guard: pad to 128 lanes only if writeback inflation
    # stays <= 1.5x; otherwise keep it tight (multiple of 8).
    c_lane = _round_up(Cout, LANE)
    Cpad = c_lane if 2 * c_lane <= 3 * Cout else _round_up(Cout, 8)

    # Spatial padding: W to a multiple of 8 sublanes (layout-free reshapes),
    # H to a multiple of the row tile.
    Wt = _round_up(W, 8)
    WP = Wt + halo

    # Row-tile choice: ~1024 output pixels (M rows) per matmul, at least 8 rows
    # so the K-1 halo rows stay a small fraction of the input traffic; shrink
    # until the working set fits the VMEM budget.
    TH = max(8, _ceil_div(1024, Wt))
    TH = _round_up(TH, halo)
    TH = min(TH, _round_up(H, halo))
    TH = max(TH, halo)
    budget = 40 << 20            # headroom under v7x's 64 MiB physical VMEM
    while True:
        est = _vmem_estimate(TH, WP, Wt, Cin, Cpad, K, x_nchw.dtype,
                             compute_dtype, x_nchw.dtype)
        if est <= budget or TH <= halo:
            break
        TH = max(halo, (TH // 2 // halo) * halo)
    vmem_limit = int(min(max(est + (8 << 20), 16 << 20), 48 << 20))
    if est + (2 << 20) > vmem_limit:
        raise ValueError(
            f"Conv Pallas working set (~{est >> 20} MiB) does not fit the "
            "per-core VMEM budget; reduce the tile or use the lax fallback.")

    Ht = _round_up(H, TH)
    nH = Ht // TH
    KC = K * Cin
    th_blocks = TH // halo       # row-tile size in halo-block units

    # ---- wrapper-side layout glue (forced by the NCHW module interface) -----
    x_nhwc = jnp.transpose(x_nchw, (0, 2, 3, 1))
    x_pad = jnp.pad(x_nhwc, ((0, 0),
                             (pad, pad + Ht - H),
                             (pad, pad + Wt - W),
                             (0, 0)))                  # (N, Ht+K-1, Wt+K-1, Cin)
    # (Cout,Cin,K,K) -> (dy, dx*Cin+ci, co), zero-padded lanes, compute dtype.
    w_slab = jnp.transpose(weight, (2, 3, 1, 0)).reshape(K, KC, Cout)
    w_slab = jnp.pad(w_slab, ((0, 0), (0, 0), (0, Cpad - Cout))).astype(compute_dtype)
    b2d = jnp.pad(bias.astype(jnp.float32), (0, Cpad - Cout)).reshape(1, Cpad)

    kernel = _make_conv_kernel(TH, Wt, Cin, Cpad, K, compute_dtype, relu)

    out_padded = pl.pallas_call(
        kernel,
        out_shape=jax.ShapeDtypeStruct((N, Ht, Wt, Cpad), x_nchw.dtype),
        grid_spec=pltpu.PrefetchScalarGridSpec(
            num_scalar_prefetch=0,
            grid=(N, nH),
            in_specs=[
                # Main rows [h*TH, h*TH+TH) of the padded image.
                pl.BlockSpec((1, TH, WP, Cin), lambda n, h: (n, h, 0, 0)),
                # Halo rows [h*TH+TH, h*TH+TH+K-1): same array, blocked with a
                # K-1 row block so the overlapping window is an ordinary block
                # index and stays inside the auto pipeline (only K-1 extra rows
                # resident instead of the whole image).
                pl.BlockSpec((1, halo, WP, Cin),
                             lambda n, h: (n, (h + 1) * th_blocks, 0, 0)),
                # Weight slab / bias: constant block index -> DMA'd once and
                # kept resident across the grid (double-buffer *allocation*
                # costs <1-2 MiB at Mnet shapes, acceptable under halo tiling).
                pl.BlockSpec((K, KC, Cpad), lambda n, h: (0, 0, 0)),
                pl.BlockSpec((1, Cpad), lambda n, h: (0, 0)),
            ],
            out_specs=pl.BlockSpec((1, TH, Wt, Cpad), lambda n, h: (n, h, 0, 0)),
            scratch_shapes=[pltpu.VMEM((TH, Wt, KC), compute_dtype),
                            pltpu.VMEM((TH, Wt, KC), compute_dtype)],
        ),
        compiler_params=pltpu.CompilerParams(
            dimension_semantics=("parallel", "parallel"),
            vmem_limit_bytes=vmem_limit,
        ),
    )(x_pad, x_pad, w_slab, b2d)

    # Drop the spatial / lane padding, back to NCHW for the PyTorch interface.
    return jnp.transpose(out_padded[:, :H, :W, :Cout], (0, 3, 1, 2))


if __name__ == "__main__":
    key = jax.random.PRNGKey(0)
    k1, k2, k3, k4, k5, k6 = jax.random.split(key, 6)

    # ---- Test 1: module-spec small shapes, forced through the Pallas path ----
    N, Cin, H, W, Cout, K = 2, 4, 16, 16, 8, 3
    x = jax.random.normal(k1, (N, Cin, H, W), jnp.float32)
    fan_in = Cin * K * K
    bound = 1.0 / (fan_in ** 0.5)
    weight = jax.random.uniform(k2, (Cout, Cin, K, K), jnp.float32, -bound, bound)
    bias = jax.random.uniform(k3, (Cout,), jnp.float32, -bound, bound)
    ref = _conv_relu_reference(x, weight, bias, stride=1, padding=1, relu=True)

    # f32 compute path: tight check.
    out_f32 = jax.block_until_ready(
        conv_forward(x, weight, bias, compute_dtype=jnp.float32, use_pallas=True))
    assert out_f32.shape == (N, Cout, H, W)
    assert jnp.allclose(out_f32, ref, atol=1e-4, rtol=1e-4)

    # Default bf16 MXU path: f32-accumulated, looser tolerance.
    out_bf16 = jax.block_until_ready(conv_forward(x, weight, bias, use_pallas=True))
    assert jnp.allclose(out_bf16, ref, atol=5e-2, rtol=5e-2)

    # ---- Test 2: channel counts the auto-dispatch sends through Pallas -------
    N2, C2i, H2, W2, C2o = 2, 32, 16, 16, 64
    x2 = jax.random.normal(k4, (N2, C2i, H2, W2), jnp.float32)
    fan2 = C2i * K * K
    bound2 = 1.0 / (fan2 ** 0.5)
    w2 = jax.random.uniform(k5, (C2o, C2i, K, K), jnp.float32, -bound2, bound2)
    b2 = jax.random.uniform(k6, (C2o,), jnp.float32, -bound2, bound2)
    out2 = jax.block_until_ready(conv_forward(x2, w2, b2))
    ref2 = _conv_relu_reference(x2, w2, b2, stride=1, padding=1, relu=True)
    assert out2.shape == (N2, C2o, H2, W2)
    assert jnp.allclose(out2, ref2, atol=5e-2, rtol=5e-2)

    print("KERNEL_OK")
</pallas_src>

<mosaic_0001>
module attributes {stable_mosaic.version = 11 : i64} {
  func.func @conv_kernel(%arg0: i32, %arg1: i32, %arg2: memref<1x16x18x4xf32, #tpu.memory_space<vmem>>, %arg3: memref<1x2x18x4xf32, #tpu.memory_space<vmem>>, %arg4: memref<3x12x8xf32, #tpu.memory_space<vmem>>, %arg5: memref<1x8xf32, #tpu.memory_space<vmem>>, %arg6: memref<1x16x16x8xf32, #tpu.memory_space<vmem>>, %arg7: memref<16x16x12xf32, #tpu.memory_space<vmem>>, %arg8: memref<16x16x12xf32, #tpu.memory_space<vmem>>) attributes {dimension_semantics = [#tpu.dimension_semantics<parallel>, #tpu.dimension_semantics<parallel>], iteration_bounds = array<i64: 2, 1>, scalar_prefetch = 0 : i64, scratch_operands = 2 : i64, tpu.core_type = #tpu.core_type<tc>, window_params = [{transform_indices = @transform_0, window_bounds = array<i64: 1, 16, 18, 4>}, {transform_indices = @transform_1, window_bounds = array<i64: 1, 2, 18, 4>}, {pipeline_mode = #tpu.pipeline_mode<synchronous>, transform_indices = @transform_2, window_bounds = array<i64: 3, 12, 8>}, {pipeline_mode = #tpu.pipeline_mode<synchronous>, transform_indices = @transform_3, window_bounds = array<i64: 1, 8>}, {transform_indices = @transform_4, window_bounds = array<i64: 1, 16, 16, 8>}]} {
    %c0 = arith.constant 0 : index
    %c0_0 = arith.constant 0 : index
    %c0_1 = arith.constant 0 : index
    %c0_2 = arith.constant 0 : index
    %0 = vector.load %arg2[%c0, %c0_0, %c0_1, %c0_2] : memref<1x16x18x4xf32, #tpu.memory_space<vmem>>, vector<1x16x16x4xf32>
    %1 = vector.shape_cast %0 : vector<1x16x16x4xf32> to vector<16x16x4xf32>
    %c0_3 = arith.constant 0 : index
    %c0_4 = arith.constant 0 : index
    %c0_5 = arith.constant 0 : index
    %2 = vector.load %arg7[%c0_3, %c0_4, %c0_5] : memref<16x16x12xf32, #tpu.memory_space<vmem>>, vector<16x16x4xf32>
    tpu.vector_store %arg7[%c0_3, %c0_4, %c0_5], %1 {strides = array<i32>} : memref<16x16x12xf32, #tpu.memory_space<vmem>>, vector<16x16x4xf32>,
    %c0_6 = arith.constant 0 : index
    %c0_7 = arith.constant 0 : index
    %c1 = arith.constant 1 : index
    %c0_8 = arith.constant 0 : index
    %3 = vector.load %arg2[%c0_6, %c0_7, %c1, %c0_8] : memref<1x16x18x4xf32, #tpu.memory_space<vmem>>, vector<1x16x16x4xf32>
    %4 = vector.shape_cast %3 : vector<1x16x16x4xf32> to vector<16x16x4xf32>
    %c0_9 = arith.constant 0 : index
    %c0_10 = arith.constant 0 : index
    %c4 = arith.constant 4 : index
    %5 = vector.load %arg7[%c0_9, %c0_10, %c4] : memref<16x16x12xf32, #tpu.memory_space<vmem>>, vector<16x16x4xf32>
    tpu.vector_store %arg7[%c0_9, %c0_10, %c4], %4 {strides = array<i32>} : memref<16x16x12xf32, #tpu.memory_space<vmem>>, vector<16x16x4xf32>,
    %c0_11 = arith.constant 0 : index
    %c0_12 = arith.constant 0 : index
    %c2 = arith.constant 2 : index
    %c0_13 = arith.constant 0 : index
    %6 = vector.load %arg2[%c0_11, %c0_12, %c2, %c0_13] : memref<1x16x18x4xf32, #tpu.memory_space<vmem>>, vector<1x16x16x4xf32>
    %7 = vector.shape_cast %6 : vector<1x16x16x4xf32> to vector<16x16x4xf32>
    %c0_14 = arith.constant 0 : index
    %c0_15 = arith.constant 0 : index
    %c8 = arith.constant 8 : index
    %8 = vector.load %arg7[%c0_14, %c0_15, %c8] : memref<16x16x12xf32, #tpu.memory_space<vmem>>, vector<16x16x4xf32>
    tpu.vector_store %arg7[%c0_14, %c0_15, %c8], %7 {strides = array<i32>} : memref<16x16x12xf32, #tpu.memory_space<vmem>>, vector<16x16x4xf32>,
    %c0_16 = arith.constant 0 : index
    %c1_17 = arith.constant 1 : index
    %c0_18 = arith.constant 0 : index
    %c0_19 = arith.constant 0 : index
    %9 = vector.load %arg2[%c0_16, %c1_17, %c0_18, %c0_19] : memref<1x16x18x4xf32, #tpu.memory_space<vmem>>, vector<1x15x16x4xf32>
    %10 = vector.shape_cast %9 : vector<1x15x16x4xf32> to vector<15x16x4xf32>
    %c0_20 = arith.constant 0 : index
    %c0_21 = arith.constant 0 : index
    %c0_22 = arith.constant 0 : index
    %11 = vector.load %arg8[%c0_20, %c0_21, %c0_22] : memref<16x16x12xf32, #tpu.memory_space<vmem>>, vector<15x16x4xf32>
    tpu.vector_store %arg8[%c0_20, %c0_21, %c0_22], %10 {strides = array<i32>} : memref<16x16x12xf32, #tpu.memory_space<vmem>>, vector<15x16x4xf32>,
    %c0_23 = arith.constant 0 : index
    %c0_24 = arith.constant 0 : index
    %c0_25 = arith.constant 0 : index
    %c0_26 = arith.constant 0 : index
    %12 = vector.load %arg3[%c0_23, %c0_24, %c0_25, %c0_26] : memref<1x2x18x4xf32, #tpu.memory_space<vmem>>, vector<1x1x16x4xf32>
    %13 = vector.shape_cast %12 : vector<1x1x16x4xf32> to vector<1x16x4xf32>
    %c15 = arith.constant 15 : index
    %c0_27 = arith.constant 0 : index
    %c0_28 = arith.constant 0 : index
    %14 = vector.load %arg8[%c15, %c0_27, %c0_28] : memref<16x16x12xf32, #tpu.memory_space<vmem>>, vector<1x16x4xf32>
    tpu.vector_store %arg8[%c15, %c0_27, %c0_28], %13 {strides = array<i32>} : memref<16x16x12xf32, #tpu.memory_space<vmem>>, vector<1x16x4xf32>,
    %c0_29 = arith.constant 0 : index
    %c1_30 = arith.constant 1 : index
    %c1_31 = arith.constant 1 : index
    %c0_32 = arith.constant 0 : index
    %15 = vector.load %arg2[%c0_29, %c1_30, %c1_31, %c0_32] : memref<1x16x18x4xf32, #tpu.memory_space<vmem>>, vector<1x15x16x4xf32>
    %16 = vector.shape_cast %15 : vector<1x15x16x4xf32> to vector<15x16x4xf32>
    %c0_33 = arith.constant 0 : index
    %c0_34 = arith.constant 0 : index
    %c4_35 = arith.constant 4 : index
    %17 = vector.load %arg8[%c0_33, %c0_34, %c4_35] : memref<16x16x12xf32, #tpu.memory_space<vmem>>, vector<15x16x4xf32>
    tpu.vector_store %arg8[%c0_33, %c0_34, %c4_35], %16 {strides = array<i32>} : memref<16x16x12xf32, #tpu.memory_space<vmem>>, vector<15x16x4xf32>,
    %c0_36 = arith.constant 0 : index
    %c0_37 = arith.constant 0 : index
    %c1_38 = arith.constant 1 : index
    %c0_39 = arith.constant 0 : index
    %18 = vector.load %arg3[%c0_36, %c0_37, %c1_38, %c0_39] : memref<1x2x18x4xf32, #tpu.memory_space<vmem>>, vector<1x1x16x4xf32>
    %19 = vector.shape_cast %18 : vector<1x1x16x4xf32> to vector<1x16x4xf32>
    %c15_40 = arith.constant 15 : index
    %c0_41 = arith.constant 0 : index
    %c4_42 = arith.constant 4 : index
    %20 = vector.load %arg8[%c15_40, %c0_41, %c4_42] : memref<16x16x12xf32, #tpu.memory_space<vmem>>, vector<1x16x4xf32>
    tpu.vector_store %arg8[%c15_40, %c0_41, %c4_42], %19 {strides = array<i32>} : memref<16x16x12xf32, #tpu.memory_space<vmem>>, vector<1x16x4xf32>,
    %c0_43 = arith.constant 0 : index
    %c1_44 = arith.constant 1 : index
    %c2_45 = arith.constant 2 : index
    %c0_46 = arith.constant 0 : index
    %21 = vector.load %arg2[%c0_43, %c1_44, %c2_45, %c0_46] : memref<1x16x18x4xf32, #tpu.memory_space<vmem>>, vector<1x15x16x4xf32>
    %22 = vector.shape_cast %21 : vector<1x15x16x4xf32> to vector<15x16x4xf32>
    %c0_47 = arith.constant 0 : index
    %c0_48 = arith.constant 0 : index
    %c8_49 = arith.constant 8 : index
    %23 = vector.load %arg8[%c0_47, %c0_48, %c8_49] : memref<16x16x12xf32, #tpu.memory_space<vmem>>, vector<15x16x4xf32>
    tpu.vector_store %arg8[%c0_47, %c0_48, %c8_49], %22 {strides = array<i32>} : memref<16x16x12xf32, #tpu.memory_space<vmem>>, vector<15x16x4xf32>,
    %c0_50 = arith.constant 0 : index
    %c0_51 = arith.constant 0 : index
    %c2_52 = arith.constant 2 : index
    %c0_53 = arith.constant 0 : index
    %24 = vector.load %arg3[%c0_50, %c0_51, %c2_52, %c0_53] : memref<1x2x18x4xf32, #tpu.memory_space<vmem>>, vector<1x1x16x4xf32>
    %25 = vector.shape_cast %24 : vector<1x1x16x4xf32> to vector<1x16x4xf32>
    %c15_54 = arith.constant 15 : index
    %c0_55 = arith.constant 0 : index
    %c8_56 = arith.constant 8 : index
    %26 = vector.load %arg8[%c15_54, %c0_55, %c8_56] : memref<16x16x12xf32, #tpu.memory_space<vmem>>, vector<1x16x4xf32>
    tpu.vector_store %arg8[%c15_54, %c0_55, %c8_56], %25 {strides = array<i32>} : memref<16x16x12xf32, #tpu.memory_space<vmem>>, vector<1x16x4xf32>,
    %c0_57 = arith.constant 0 : index
    %c0_58 = arith.constant 0 : index
    %c0_59 = arith.constant 0 : index
    %27 = vector.load %arg7[%c0_57, %c0_58, %c0_59] : memref<16x16x12xf32, #tpu.memory_space<vmem>>, vector<16x16x12xf32>
    %28 = vector.shape_cast %27 : vector<16x16x12xf32> to vector<256x12xf32>
    %c0_60 = arith.constant 0 : index
    %c0_61 = arith.constant 0 : index
    %c0_62 = arith.constant 0 : index
    %29 = vector.load %arg4[%c0_60, %c0_61, %c0_62] : memref<3x12x8xf32, #tpu.memory_space<vmem>>, vector<1x12x8xf32>
    %30 = vector.shape_cast %29 : vector<1x12x8xf32> to vector<12x8xf32>
    %cst = arith.constant dense<0.000000e+00> : vector<256x8xf32>
    %31 = tpu.matmul %28, %30, %cst {dimension_numbers = #tpu.dot_dimension_numbers<[1], [0], [0], [1], [0, 0, 1, 1], [], []>} : vector<256x12xf32>, vector<12x8xf32>, vector<256x8xf32> -> vector<256x8xf32>
    %c0_63 = arith.constant 0 : index
    %c2_64 = arith.constant 2 : index
    %c0_65 = arith.constant 0 : index
    %c0_66 = arith.constant 0 : index
    %32 = vector.load %arg2[%c0_63, %c2_64, %c0_65, %c0_66] : memref<1x16x18x4xf32, #tpu.memory_space<vmem>>, vector<1x14x16x4xf32>
    %33 = vector.shape_cast %32 : vector<1x14x16x4xf32> to vector<14x16x4xf32>
    %c0_67 = arith.constant 0 : index
    %c0_68 = arith.constant 0 : index
    %c0_69 = arith.constant 0 : index
    %34 = vector.load %arg7[%c0_67, %c0_68, %c0_69] : memref<16x16x12xf32, #tpu.memory_space<vmem>>, vector<14x16x4xf32>
    tpu.vector_store %arg7[%c0_67, %c0_68, %c0_69], %33 {strides = array<i32>} : memref<16x16x12xf32, #tpu.memory_space<vmem>>, vector<14x16x4xf32>,
    %c0_70 = arith.constant 0 : index
    %c0_71 = arith.constant 0 : index
    %c0_72 = arith.constant 0 : index
    %c0_73 = arith.constant 0 : index
    %35 = vector.load %arg3[%c0_70, %c0_71, %c0_72, %c0_73] : memref<1x2x18x4xf32, #tpu.memory_space<vmem>>, vector<1x2x16x4xf32>
    %36 = vector.shape_cast %35 : vector<1x2x16x4xf32> to vector<2x16x4xf32>
    %c14 = arith.constant 14 : index
    %c0_74 = arith.constant 0 : index
    %c0_75 = arith.constant 0 : index
    %37 = vector.load %arg7[%c14, %c0_74, %c0_75] : memref<16x16x12xf32, #tpu.memory_space<vmem>>, vector<2x16x4xf32>
    tpu.vector_store %arg7[%c14, %c0_74, %c0_75], %36 {strides = array<i32>} : memref<16x16x12xf32, #tpu.memory_space<vmem>>, vector<2x16x4xf32>,
    %c0_76 = arith.constant 0 : index
    %c2_77 = arith.constant 2 : index
    %c1_78 = arith.constant 1 : index
    %c0_79 = arith.constant 0 : index
    %38 = vector.load %arg2[%c0_76, %c2_77, %c1_78, %c0_79] : memref<1x16x18x4xf32, #tpu.memory_space<vmem>>, vector<1x14x16x4xf32>
    %39 = vector.shape_cast %38 : vector<1x14x16x4xf32> to vector<14x16x4xf32>
    %c0_80 = arith.constant 0 : index
    %c0_81 = arith.constant 0 : index
    %c4_82 = arith.constant 4 : index
    %40 = vector.load %arg7[%c0_80, %c0_81, %c4_82] : memref<16x16x12xf32, #tpu.memory_space<vmem>>, vector<14x16x4xf32>
    tpu.vector_store %arg7[%c0_80, %c0_81, %c4_82], %39 {strides = array<i32>} : memref<16x16x12xf32, #tpu.memory_space<vmem>>, vector<14x16x4xf32>,
    %c0_83 = arith.constant 0 : index
    %c0_84 = arith.constant 0 : index
    %c1_85 = arith.constant 1 : index
    %c0_86 = arith.constant 0 : index
    %41 = vector.load %arg3[%c0_83, %c0_84, %c1_85, %c0_86] : memref<1x2x18x4xf32, #tpu.memory_space<vmem>>, vector<1x2x16x4xf32>
    %42 = vector.shape_cast %41 : vector<1x2x16x4xf32> to vector<2x16x4xf32>
    %c14_87 = arith.constant 14 : index
    %c0_88 = arith.constant 0 : index
    %c4_89 = arith.constant 4 : index
    %43 = vector.load %arg7[%c14_87, %c0_88, %c4_89] : memref<16x16x12xf32, #tpu.memory_space<vmem>>, vector<2x16x4xf32>
    tpu.vector_store %arg7[%c14_87, %c0_88, %c4_89], %42 {strides = array<i32>} : memref<16x16x12xf32, #tpu.memory_space<vmem>>, vector<2x16x4xf32>,
    %c0_90 = arith.constant 0 : index
    %c2_91 = arith.constant 2 : index
    %c2_92 = arith.constant 2 : index
    %c0_93 = arith.constant 0 : index
    %44 = vector.load %arg2[%c0_90, %c2_91, %c2_92, %c0_93] : memref<1x16x18x4xf32, #tpu.memory_space<vmem>>, vector<1x14x16x4xf32>
    %45 = vector.shape_cast %44 : vector<1x14x16x4xf32> to vector<14x16x4xf32>
    %c0_94 = arith.constant 0 : index
    %c0_95 = arith.constant 0 : index
    %c8_96 = arith.constant 8 : index
    %46 = vector.load %arg7[%c0_94, %c0_95, %c8_96] : memref<16x16x12xf32, #tpu.memory_space<vmem>>, vector<14x16x4xf32>
    tpu.vector_store %arg7[%c0_94, %c0_95, %c8_96], %45 {strides = array<i32>} : memref<16x16x12xf32, #tpu.memory_space<vmem>>, vector<14x16x4xf32>,
    %c0_97 = arith.constant 0 : index
    %c0_98 = arith.constant 0 : index
    %c2_99 = arith.constant 2 : index
    %c0_100 = arith.constant 0 : index
    %47 = vector.load %arg3[%c0_97, %c0_98, %c2_99, %c0_100] : memref<1x2x18x4xf32, #tpu.memory_space<vmem>>, vector<1x2x16x4xf32>
    %48 = vector.shape_cast %47 : vector<1x2x16x4xf32> to vector<2x16x4xf32>
    %c14_101 = arith.constant 14 : index
    %c0_102 = arith.constant 0 : index
    %c8_103 = arith.constant 8 : index
    %49 = vector.load %arg7[%c14_101, %c0_102, %c8_103] : memref<16x16x12xf32, #tpu.memory_space<vmem>>, vector<2x16x4xf32>
    tpu.vector_store %arg7[%c14_101, %c0_102, %c8_103], %48 {strides = array<i32>} : memref<16x16x12xf32, #tpu.memory_space<vmem>>, vector<2x16x4xf32>,
    %c0_104 = arith.constant 0 : index
    %c0_105 = arith.constant 0 : index
    %c0_106 = arith.constant 0 : index
    %50 = vector.load %arg8[%c0_104, %c0_105, %c0_106] : memref<16x16x12xf32, #tpu.memory_space<vmem>>, vector<16x16x12xf32>
    %51 = vector.shape_cast %50 : vector<16x16x12xf32> to vector<256x12xf32>
    %c1_107 = arith.constant 1 : index
    %c0_108 = arith.constant 0 : index
    %c0_109 = arith.constant 0 : index
    %52 = vector.load %arg4[%c1_107, %c0_108, %c0_109] : memref<3x12x8xf32, #tpu.memory_space<vmem>>, vector<1x12x8xf32>
    %53 = vector.shape_cast %52 : vector<1x12x8xf32> to vector<12x8xf32>
    %cst_110 = arith.constant dense<0.000000e+00> : vector<256x8xf32>
    %54 = tpu.matmul %51, %53, %cst_110 {dimension_numbers = #tpu.dot_dimension_numbers<[1], [0], [0], [1], [0, 0, 1, 1], [], []>} : vector<256x12xf32>, vector<12x8xf32>, vector<256x8xf32> -> vector<256x8xf32>
    %55 = arith.addf %31, %54 : vector<256x8xf32>
    %c0_111 = arith.constant 0 : index
    %c0_112 = arith.constant 0 : index
    %c0_113 = arith.constant 0 : index
    %56 = vector.load %arg7[%c0_111, %c0_112, %c0_113] : memref<16x16x12xf32, #tpu.memory_space<vmem>>, vector<16x16x12xf32>
    %57 = vector.shape_cast %56 : vector<16x16x12xf32> to vector<256x12xf32>
    %c2_114 = arith.constant 2 : index
    %c0_115 = arith.constant 0 : index
    %c0_116 = arith.constant 0 : index
    %58 = vector.load %arg4[%c2_114, %c0_115, %c0_116] : memref<3x12x8xf32, #tpu.memory_space<vmem>>, vector<1x12x8xf32>
    %59 = vector.shape_cast %58 : vector<1x12x8xf32> to vector<12x8xf32>
    %cst_117 = arith.constant dense<0.000000e+00> : vector<256x8xf32>
    %60 = tpu.matmul %57, %59, %cst_117 {dimension_numbers = #tpu.dot_dimension_numbers<[1], [0], [0], [1], [0, 0, 1, 1], [], []>} : vector<256x12xf32>, vector<12x8xf32>, vector<256x8xf32> -> vector<256x8xf32>
    %61 = arith.addf %55, %60 : vector<256x8xf32>
    %c0_118 = arith.constant 0 : index
    %c0_119 = arith.constant 0 : index
    %62 = vector.load %arg5[%c0_118, %c0_119] : memref<1x8xf32, #tpu.memory_space<vmem>>, vector<1x8xf32>
    %63 = vector.broadcast %62 : vector<1x8xf32> to vector<256x8xf32>
    %64 = arith.addf %61, %63 : vector<256x8xf32>
    %cst_120 = arith.constant 0.000000e+00 : f32
    %65 = vector.broadcast %cst_120 : f32 to vector<256x8xf32>
    %66 = arith.maximumf %64, %65 : vector<256x8xf32>
    %67 = vector.shape_cast %66 : vector<256x8xf32> to vector<1x16x16x8xf32>
    %c0_121 = arith.constant 0 : index
    %c0_122 = arith.constant 0 : index
    %c0_123 = arith.constant 0 : index
    %c0_124 = arith.constant 0 : index
    %68 = vector.load %arg6[%c0_121, %c0_122, %c0_123, %c0_124] : memref<1x16x16x8xf32, #tpu.memory_space<vmem>>, vector<1x16x16x8xf32>
    tpu.vector_store %arg6[%c0_121, %c0_122, %c0_123, %c0_124], %67 {strides = array<i32>} : memref<1x16x16x8xf32, #tpu.memory_space<vmem>>, vector<1x16x16x8xf32>,
    return
  }
  func.func @transform_0(%arg0: i32, %arg1: i32) -> (i32, i32, i32, i32) {
    %c0_i32 = arith.constant 0 : i32
    %c0_i32_0 = arith.constant 0 : i32
    %c0_i32_1 = arith.constant 0 : i32
    return %arg0, %arg1, %c0_i32, %c0_i32_0 : i32, i32, i32, i32
  }
  func.func @transform_1(%arg0: i32, %arg1: i32) -> (i32, i32, i32, i32) {
    %c1_i32 = arith.constant 1 : i32
    %0 = arith.addi %arg1, %c1_i32 : i32
    %c8_i32 = arith.constant 8 : i32
    %1 = arith.muli %0, %c8_i32 : i32
    %c0_i32 = arith.constant 0 : i32
    %c0_i32_0 = arith.constant 0 : i32
    %c0_i32_1 = arith.constant 0 : i32
    return %arg0, %1, %c0_i32, %c0_i32_0 : i32, i32, i32, i32
  }
  func.func @transform_2(%arg0: i32, %arg1: i32) -> (i32, i32, i32) {
    %c0_i32 = arith.constant 0 : i32
    %c0_i32_0 = arith.constant 0 : i32
    %c0_i32_1 = arith.constant 0 : i32
    %c0_i32_2 = arith.constant 0 : i32
    return %c0_i32, %c0_i32_0, %c0_i32_1 : i32, i32, i32
  }
  func.func @transform_3(%arg0: i32, %arg1: i32) -> (i32, i32) {
    %c0_i32 = arith.constant 0 : i32
    %c0_i32_0 = arith.constant 0 : i32
    %c0_i32_1 = arith.constant 0 : i32
    return %c0_i32, %c0_i32_0 : i32, i32
  }
  func.func @transform_4(%arg0: i32, %arg1: i32) -> (i32, i32, i32, i32) {
    %c0_i32 = arith.constant 0 : i32
    %c0_i32_0 = arith.constant 0 : i32
    %c0_i32_1 = arith.constant 0 : i32
    return %arg0, %arg1, %c0_i32, %c0_i32_0 : i32, i32, i32, i32
  }
}

</mosaic_0001>

<llo_original>
// kernel: tpu_custom_call.1
$region0: #{tpu_custom_call.1}
  #allocation0 [shape = 'u32[]', space=smem, size = 0x4, offset = 0x4, fixed_abs, tag = 'smem constant byte address 0x4 - core index']
  #allocation1 [shape = 'u32[144,128]{1,0:T(1,128)}', space=vmem, size = 0x12000, scoped, tag = 'internal scratch']
  #allocation2 [shape = 'f32[16,16,12]{2,1,0:T(8,128)}', space=vmem, size = 0x20000, scoped, tag = 'scratch operand']
  #allocation3 [shape = 'f32[16,16,12]{2,1,0:T(8,128)}', space=vmem, size = 0x20000, scoped, tag = 'scratch operand']
  %s0 = inlined_call_operand.vmem [shape: f32[2,18,18,4], index: 0, kind: input, shape index: {}]
  %s1 = inlined_call_operand.vmem [shape: f32[2,18,18,4], index: 1, kind: input, shape index: {}]
  %s2 = inlined_call_operand.vmem [shape: f32[3,12,8], index: 2, kind: input, shape index: {}]
  %s3 = inlined_call_operand.vmem [shape: f32[1,8], index: 3, kind: input, shape index: {}]
  %s4 = inlined_call_operand.vmem [shape: f32[2,16,16,8], index: 4, kind: output, shape index: {}]
  %s5 = sld [smem:[#allocation0]]
  $region49: #{tpu_custom_call.1} parent=0
    _
  %s7 = ssub.s32 1, %s5
  %s8 = scalar_select 0, %s7, %s5
  loop: start=0, step=1, limit=4
  $region2: #{tpu_custom_call.1} parent=0 // loop_pre_header
    _
  $region3: #{tpu_custom_call.1} parent=0 // loop_header
    %s10 = sphi 0, %s14
    %p11 = scmp.ge.s32.totalorder %s10, 4
    %s17 = sphi 0, %s29
    %s18 = sphi 0, %s25
    %s19 = sphi 0, %s17
    %s20 = sphi 0, %s18
    %s21 = sphi 0, %s19
    %s22 = sphi 0, %s20
    %s34 = sphi 0, %s36
    %s37 = sphi 0, %s34
    %s38 = sphi 0, %s37
    %s54 = sphi 0, %s38
    %s66 = sphi 0, %s68
    %s69 = sphi 0, %s66
    %s70 = sphi 0, %s69
    %s86 = sphi 0, %s70
    %s90 = sphi 0, %s90
    %s92 = sphi 0, %s90
    %s93 = sphi 0, %s92
    %s107 = sphi 0, %s93
    %s111 = sphi 0, %s111
    %s113 = sphi 0, %s111
    %s114 = sphi 0, %s113
    %s128 = sphi 0, %s114
    %s136 = sphi 0, %s138
    %s139 = sphi 0, %s136
    %s140 = sphi 0, %s139
    %s156 = sphi 0, %s140
  $region4: #{tpu_custom_call.1} parent=0 // loop_header_branch
    %13 = sbr.rel (%p11) target = $region8
  $region5: #{tpu_custom_call.1} parent=0 // loop_body
    %s15 = ssub.s32 %s10, 1
    %s16 = ssub.s32 %s10, 2
    %s23 = sadd.s32 1, %s18
    %p24 = scmp.ge.s32.totalorder %s23, 1
    %s25 = scalar_select %p24, 0, %s23
    %s26 = sadd.s32 1, %s17
    %s27 = scalar_select %p24, %s26, %s17
    %p28 = scmp.ge.s32.totalorder %s27, 2
    %s29 = scalar_select %p28, 0, %s27
    %s30 = ssub.s32 %s17, %s29
    %s31 = ssub.s32 %s18, %s25
    %s32 = sor.u32 %s30, %s31
    %p33 = scmp.eq.s32.totalorder %s32, 0
    %s35 = sadd.s32 %s34, 1
    %s36 = scalar_select %p33, %s34, %s35
    %p39 = pneg %p33
    %p40 = scmp.eq.s32.totalorder %s10, 1
    %p41 = por %p39, %p40
    %p42 = scmp.ne.s32.totalorder %s34, %s37
    %p43 = scmp.eq.s32.totalorder %s10, 0
    %p44 = por %p42, %p43
    %p45 = scmp.ne.s32.totalorder %s34, %s37
    %p46 = scmp.eq.s32.totalorder %s15, 1
    %p47 = por %p45, %p46
    %p48 = scmp.ne.s32.totalorder %s37, %s38
    %p49 = scmp.eq.s32.totalorder %s15, 0
    %p50 = por %p48, %p49
    %p51 = scmp.ne.s32.totalorder %s37, %s38
    %p52 = scmp.eq.s32.totalorder %s16, 1
    %p53 = por %p51, %p52
    %p55 = scmp.ne.s32.totalorder %s38, %s54
    %p56 = scmp.eq.s32.totalorder %s16, 0
    %p57 = por %p55, %p56
    %s58 = sadd.s32 %s18, 1
    %s59 = smul.u32 %s58, 8
    %s60 = sadd.s32 %s25, 1
    %s61 = smul.u32 %s60, 8
    %s62 = ssub.s32 %s17, %s29
    %s63 = ssub.s32 %s59, %s61
    %s64 = sor.u32 %s62, %s63
    %p65 = scmp.eq.s32.totalorder %s64, 0
    %s67 = sadd.s32 %s66, 1
    %s68 = scalar_select %p65, %s66, %s67
    %p71 = pneg %p65
    %p72 = scmp.eq.s32.totalorder %s10, 1
    %p73 = por %p71, %p72
    %p74 = scmp.ne.s32.totalorder %s66, %s69
    %p75 = scmp.eq.s32.totalorder %s10, 0
    %p76 = por %p74, %p75
    %p77 = scmp.ne.s32.totalorder %s66, %s69
    %p78 = scmp.eq.s32.totalorder %s15, 1
    %p79 = por %p77, %p78
    %p80 = scmp.ne.s32.totalorder %s69, %s70
    %p81 = scmp.eq.s32.totalorder %s15, 0
    %p82 = por %p80, %p81
    %p83 = scmp.ne.s32.totalorder %s69, %s70
    %p84 = scmp.eq.s32.totalorder %s16, 1
    %p85 = por %p83, %p84
    %p87 = scmp.ne.s32.totalorder %s70, %s86
    %p88 = scmp.eq.s32.totalorder %s16, 0
    %p89 = por %p87, %p88
    %s91 = sadd.s32 %s90, 1
    %p94 = scmp.eq.s32.totalorder %s10, 1
    %p95 = scmp.ne.s32.totalorder %s90, %s92
    %p96 = scmp.eq.s32.totalorder %s10, 0
    %p97 = por %p95, %p96
    %p98 = scmp.ne.s32.totalorder %s90, %s92
    %p99 = scmp.eq.s32.totalorder %s15, 1
    %p100 = por %p98, %p99
    %p101 = scmp.ne.s32.totalorder %s92, %s93
    %p102 = scmp.eq.s32.totalorder %s15, 0
    %p103 = por %p101, %p102
    %p104 = scmp.ne.s32.totalorder %s92, %s93
    %p105 = scmp.eq.s32.totalorder %s16, 1
    %p106 = por %p104, %p105
    %p108 = scmp.ne.s32.totalorder %s93, %s107
    %p109 = scmp.eq.s32.totalorder %s16, 0
    %p110 = por %p108, %p109
    %s112 = sadd.s32 %s111, 1
    %p115 = scmp.eq.s32.totalorder %s10, 1
    %p116 = scmp.ne.s32.totalorder %s111, %s113
    %p117 = scmp.eq.s32.totalorder %s10, 0
    %p118 = por %p116, %p117
    %p119 = scmp.ne.s32.totalorder %s111, %s113
    %p120 = scmp.eq.s32.totalorder %s15, 1
    %p121 = por %p119, %p120
    %p122 = scmp.ne.s32.totalorder %s113, %s114
    %p123 = scmp.eq.s32.totalorder %s15, 0
    %p124 = por %p122, %p123
    %p125 = scmp.ne.s32.totalorder %s113, %s114
    %p126 = scmp.eq.s32.totalorder %s16, 1
    %p127 = por %p125, %p126
    %p129 = scmp.ne.s32.totalorder %s114, %s128
    %p130 = scmp.eq.s32.totalorder %s16, 0
    %p131 = por %p129, %p130
    %s132 = ssub.s32 %s17, %s29
    %s133 = ssub.s32 %s18, %s25
    %s134 = sor.u32 %s132, %s133
    %p135 = scmp.eq.s32.totalorder %s134, 0
    %s137 = sadd.s32 %s136, 1
    %s138 = scalar_select %p135, %s136, %s137
    %p141 = pneg %p135
    %p142 = scmp.eq.s32.totalorder %s10, 1
    %p143 = por %p141, %p142
    %p144 = scmp.ne.s32.totalorder %s136, %s139
    %p145 = scmp.eq.s32.totalorder %s10, 0
    %p146 = por %p144, %p145
    %p147 = scmp.ne.s32.totalorder %s136, %s139
    %p148 = scmp.eq.s32.totalorder %s15, 1
    %p149 = por %p147, %p148
    %p150 = scmp.ne.s32.totalorder %s139, %s140
    %p151 = scmp.eq.s32.totalorder %s15, 0
    %p152 = por %p150, %p151
    %p153 = scmp.ne.s32.totalorder %s139, %s140
    %p154 = scmp.eq.s32.totalorder %s16, 1
    %p155 = por %p153, %p154
    %p157 = scmp.ne.s32.totalorder %s140, %s156
    %p158 = scmp.eq.s32.totalorder %s16, 0
    %p159 = por %p157, %p158
    %p160 = scmp.le.s32.totalorder 1, %s10
    %p161 = scmp.lt.s32.totalorder %s10, 3
    %p162 = pnand %p160, %p161
    %p163 = pneg %p162
    // Predicated region
    $region9: #{tpu_custom_call.1} parent=5 // pred_check
      _
    $region10: #{tpu_custom_call.1} parent=5 // pred_check_branch
      %165 = sbr.rel (%p162) target = $region12
    $region11: #{tpu_custom_call.1} parent=5 // pred_region
      %s166 = ssub.s32 %s10, 1
      // Predicated region
      $region13: #{tpu_custom_call.1} parent=11 // pred_check
        %p167 = pneg %p103
      $region14: #{tpu_custom_call.1} parent=11 // pred_check_branch
        %169 = sbr.rel (%p167) target = $region16
      $region15: #{tpu_custom_call.1} parent=11 // pred_region
        _
      $region16: #{tpu_custom_call.1} parent=11 // pred_fallthru
        _
      // Predicated region
      $region17: #{tpu_custom_call.1} parent=11 // pred_check
        %p170 = pneg %p124
      $region18: #{tpu_custom_call.1} parent=11 // pred_check_branch
        %172 = sbr.rel (%p170) target = $region20
      $region19: #{tpu_custom_call.1} parent=11 // pred_region
        _
      $region20: #{tpu_custom_call.1} parent=11 // pred_fallthru
        _
    $region12: #{tpu_custom_call.1} parent=5 // pred_fallthru
      _
    %p173 = scmp.lt.s32.totalorder %s10, 2
    // Predicated region
    $region21: #{tpu_custom_call.1} parent=5 // pred_check
      %p174 = pneg %p173
    $region22: #{tpu_custom_call.1} parent=5 // pred_check_branch
      %176 = sbr.rel (%p174) target = $region24
    $region23: #{tpu_custom_call.1} parent=5 // pred_region
      // Predicated region
      $region25: #{tpu_custom_call.1} parent=23 // pred_check
        %p177 = pneg %p44
      $region26: #{tpu_custom_call.1} parent=23 // pred_check_branch
        %179 = sbr.rel (%p177) target = $region28
      $region27: #{tpu_custom_call.1} parent=23 // pred_region
        %s180 = smul.u32 16, %s18
        %s181 = ssub.s32 18, %s180
        %p182 = scmp.lt.s32.totalorder %s181, 16
        %s183 = scalar_select %p182, %s181, 16
        %s184 = smul.u32 128, %s183
        %s185 = smul.u32 %s184, 3
        %p186 = scmp.lt.s32.totalorder %s17, 1
        %s187 = scalar_select %p186, %s17, 1
        %p188 = scmp.lt.s32.totalorder %s180, 17
        %s189 = scalar_select %p188, %s180, 17
        %s190 = smul.addr %s189, 3
        %s191 = smul.addr %s187, 54
        %s192 = sadd.s32 %s190, %s191
        %s193 = smul.addr %s192, 8
        %s194 = scalar_lea.vmem %s0, %s193
        %s195 = smul.u32 16, %s18
        %s196 = ssub.s32 18, %s195
        %p197 = scmp.lt.s32.totalorder %s196, 16
        %s198 = scalar_select %p197, %s196, 16
        %s199 = smul.u32 128, %s198
        %s200 = smul.u32 %s199, 3
      $region28: #{tpu_custom_call.1} parent=23 // pred_fallthru
        _
      // Predicated region
      $region29: #{tpu_custom_call.1} parent=23 // pred_check
        %p201 = pneg %p76
      $region30: #{tpu_custom_call.1} parent=23 // pred_check_branch
        %203 = sbr.rel (%p201) target = $region32
      $region31: #{tpu_custom_call.1} parent=23 // pred_region
        %s204 = sadd.s32 %s18, 1
        %s205 = smul.u32 %s204, 8
        %s206 = smul.u32 2, %s205
        %p207 = scmp.lt.s32.totalorder %s17, 1
        %s208 = scalar_select %p207, %s17, 1
        %p209 = scmp.lt.s32.totalorder %s206, 17
        %s210 = scalar_select %p209, %s206, 17
        %s211 = smul.addr %s210, 3
        %s212 = smul.addr %s208, 54
        %s213 = sadd.s32 %s211, %s212
        %s214 = smul.addr %s213, 8
        %s215 = scalar_lea.vmem %s1, %s214
        %s216 = sadd.s32 %s18, 1
        %s217 = smul.u32 %s216, 8
        %s218 = smul.u32 2, %s217
      $region32: #{tpu_custom_call.1} parent=23 // pred_fallthru
        _
    $region24: #{tpu_custom_call.1} parent=5 // pred_fallthru
      _
    %p219 = scmp.le.s32.totalorder 1, %s10
    %p220 = scmp.lt.s32.totalorder %s10, 3
    %p221 = pnand %p219, %p220
    %p222 = pneg %p221
    // Predicated region
    $region33: #{tpu_custom_call.1} parent=5 // pred_check
      _
    $region34: #{tpu_custom_call.1} parent=5 // pred_check_branch
      %224 = sbr.rel (%p221) target = $region36
    $region35: #{tpu_custom_call.1} parent=5 // pred_region
      %s225 = ssub.s32 %s10, 1
      %s226 = smul.u32 16, %s20
      %s227 = ssub.s32 18, %s226
      %p228 = scmp.lt.s32.totalorder %s227, 16
      %s229 = scalar_select %p228, %s227, 16
      %s230 = smul.u32 128, %s229
      %s231 = smul.u32 %s230, 3
      %p232 = scmp.lt.s32.totalorder %s19, 1
      %s233 = scalar_select %p232, %s19, 1
      %p234 = scmp.lt.s32.totalorder %s226, 17
      %s235 = scalar_select %p234, %s226, 17
      %s236 = smul.addr %s235, 3
      %s237 = smul.addr %s233, 54
      %s238 = sadd.s32 %s236, %s237
      %s239 = smul.addr %s238, 8
      %s240 = scalar_lea.vmem %s0, %s239
      %p241 = pneg %p50
      %p242 = pneg %p47
      %s243 = sadd.s32 %s20, 1
      %s244 = smul.u32 %s243, 8
      %s245 = smul.u32 2, %s244
      %p246 = scmp.lt.s32.totalorder %s19, 1
      %s247 = scalar_select %p246, %s19, 1
      %p248 = scmp.lt.s32.totalorder %s245, 17
      %s249 = scalar_select %p248, %s245, 17
      %s250 = smul.addr %s249, 3
      %s251 = smul.addr %s247, 54
      %s252 = sadd.s32 %s250, %s251
      %s253 = smul.addr %s252, 8
      %s254 = scalar_lea.vmem %s1, %s253
      %p255 = pneg %p82
      %p256 = pneg %p79
      %p257 = pneg %p103
      %p258 = pneg %p100
      %p259 = pneg %p124
      %p260 = pneg %p121
      %p261 = pneg %p152
      %p262 = pneg %p149
      %s263 = smul.u32 16, %s20
      %p264 = scmp.lt.s32.totalorder %s19, 1
      %s265 = scalar_select %p264, %s19, 1
      %p266 = scmp.lt.s32.totalorder %s263, 15
      %s267 = scalar_select %p266, %s263, 15
      %s268 = smul.addr %s267, 2
      %s269 = smul.addr %s265, 32
      %s270 = sadd.s32 %s268, %s269
      %s271 = smul.addr %s270, 8
      %s272 = scalar_lea.vmem %s4, %s271
      %s273 = smul.u32 16, %s20
      %s274 = ssub.s32 18, %s273
      %p275 = scmp.lt.s32.totalorder %s274, 16
      %s276 = scalar_select %p275, %s274, 16
      %s277 = smul.u32 128, %s276
      %s278 = smul.u32 %s277, 3
      %p279 = scmp.lt.s32.totalorder %s19, 1
      %s280 = scalar_select %p279, %s19, 1
      %p281 = scmp.lt.s32.totalorder %s273, 17
      %s282 = scalar_select %p281, %s273, 17
      %s283 = smul.addr %s282, 3
      %s284 = smul.addr %s280, 54
      %s285 = sadd.s32 %s283, %s284
      %s286 = smul.addr %s285, 8
      %s287 = scalar_lea.vmem %s0, %s286
      %s288 = smul.u32 16, %s20
      %s289 = ssub.s32 18, %s288
      %p290 = scmp.lt.s32.totalorder %s289, 16
      %s291 = scalar_select %p290, %s289, 16
      %s292 = smul.u32 128, %s291
      %s293 = smul.u32 %s292, 3
      %s294 = sadd.s32 %s20, 1
      %s295 = smul.u32 %s294, 8
      %s296 = smul.u32 2, %s295
      %p297 = scmp.lt.s32.totalorder %s19, 1
      %s298 = scalar_select %p297, %s19, 1
      %p299 = scmp.lt.s32.totalorder %s296, 17
      %s300 = scalar_select %p299, %s296, 17
      %s301 = smul.addr %s300, 3
      %s302 = smul.addr %s298, 54
      %s303 = sadd.s32 %s301, %s302
      %s304 = smul.addr %s303, 8
      %s305 = scalar_lea.vmem %s1, %s304
      %s306 = sadd.s32 %s20, 1
      %s307 = smul.u32 %s306, 8
      %s308 = smul.u32 2, %s307
      %s309 = smul.u32 16, %s20
      %p310 = scmp.lt.s32.totalorder %s19, 1
      %s311 = scalar_select %p310, %s19, 1
      %p312 = scmp.lt.s32.totalorder %s309, 15
      %s313 = scalar_select %p312, %s309, 15
      %s314 = smul.addr %s313, 2
      %s315 = smul.addr %s311, 32
      %s316 = sadd.s32 %s314, %s315
      %s317 = smul.addr %s316, 8
      %s318 = scalar_lea.vmem %s4, %s317
      %s319 = smul.u32 16, %s20
      %v320 = vld [vmem:[%s287] sm:$0xff]
      %v321 = vld [vmem:[%s287 + $0x8] sm:$0xff]
      %v322 = vld [vmem:[%s287 + $0x18] sm:$0xff]
      %v323 = vld [vmem:[%s287 + $0x20] sm:$0xff]
      %v324 = vld [vmem:[%s287 + $0x30] sm:$0xff]
      %v325 = vld [vmem:[%s287 + $0x38] sm:$0xff]
      %v326 = vld [vmem:[%s287 + $0x48] sm:$0xff]
      %v327 = vld [vmem:[%s287 + $0x50] sm:$0xff]
      %v328 = vld [vmem:[%s287 + $0x60] sm:$0xff]
      %v329 = vld [vmem:[%s287 + $0x68] sm:$0xff]
      %v330 = vld [vmem:[%s287 + $0x78] sm:$0xff]
      %v331 = vld [vmem:[%s287 + $0x80] sm:$0xff]
      %v332 = vld [vmem:[%s287 + $0x90] sm:$0xff]
      %v333 = vld [vmem:[%s287 + $0x98] sm:$0xff]
      %v334 = vld [vmem:[%s287 + $0xa8] sm:$0xff]
      %v335 = vld [vmem:[%s287 + $0xb0] sm:$0xff]
      %v336 = vld [vmem:[%s287 + $0xc0] sm:$0xff]
      %v337 = vld [vmem:[%s287 + $0xc8] sm:$0xff]
      %v338 = vld [vmem:[%s287 + $0xd8] sm:$0xff]
      %v339 = vld [vmem:[%s287 + $0xe0] sm:$0xff]
      %v340 = vld [vmem:[%s287 + $0xf0] sm:$0xff]
      %v341 = vld [vmem:[%s287 + $0xf8] sm:$0xff]
      %v342 = vld [vmem:[%s287 + $0x108] sm:$0xff]
      %v343 = vld [vmem:[%s287 + $0x110] sm:$0xff]
      %v344 = vld [vmem:[%s287 + $0x120] sm:$0xff]
      %v345 = vld [vmem:[%s287 + $0x128] sm:$0xff]
      %v346 = vld [vmem:[%s287 + $0x138] sm:$0xff]
      %v347 = vld [vmem:[%s287 + $0x140] sm:$0xff]
      %v348 = vld [vmem:[%s287 + $0x150] sm:$0xff]
      %v349 = vld [vmem:[%s287 + $0x158] sm:$0xff]
      %v350 = vld [vmem:[%s287 + $0x168] sm:$0xff]
      %v351 = vld [vmem:[%s287 + $0x170] sm:$0xff]
      %vm352 = vcmask 31744
      %353 = vst.msk [vmem:[#allocation2] sm:$0xff] %vm352, %v320
      %354 = vst.msk [vmem:[#allocation2 + $0x8] sm:$0xff] %vm352, %v321
      %355 = vst.msk [vmem:[#allocation2 + $0x10] sm:$0xff] %vm352, %v322
      %356 = vst.msk [vmem:[#allocation2 + $0x18] sm:$0xff] %vm352, %v323
      %357 = vst.msk [vmem:[#allocation2 + $0x20] sm:$0xff] %vm352, %v324
      %358 = vst.msk [vmem:[#allocation2 + $0x28] sm:$0xff] %vm352, %v325
      %359 = vst.msk [vmem:[#allocation2 + $0x30] sm:$0xff] %vm352, %v326
      %360 = vst.msk [vmem:[#allocation2 + $0x38] sm:$0xff] %vm352, %v327
      %361 = vst.msk [vmem:[#allocation2 + $0x40] sm:$0xff] %vm352, %v328
      %362 = vst.msk [vmem:[#allocation2 + $0x48] sm:$0xff] %vm352, %v329
      %363 = vst.msk [vmem:[#allocation2 + $0x50] sm:$0xff] %vm352, %v330
      %364 = vst.msk [vmem:[#allocation2 + $0x58] sm:$0xff] %vm352, %v331
      %365 = vst.msk [vmem:[#allocation2 + $0x60] sm:$0xff] %vm352, %v332
      %366 = vst.msk [vmem:[#allocation2 + $0x68] sm:$0xff] %vm352, %v333
      %367 = vst.msk [vmem:[#allocation2 + $0x70] sm:$0xff] %vm352, %v334
      %368 = vst.msk [vmem:[#allocation2 + $0x78] sm:$0xff] %vm352, %v335
      %369 = vst.msk [vmem:[#allocation2 + $0x80] sm:$0xff] %vm352, %v336
      %370 = vst.msk [vmem:[#allocation2 + $0x88] sm:$0xff] %vm352, %v337
      %371 = vst.msk [vmem:[#allocation2 + $0x90] sm:$0xff] %vm352, %v338
      %372 = vst.msk [vmem:[#allocation2 + $0x98] sm:$0xff] %vm352, %v339
      %373 = vst.msk [vmem:[#allocation2 + $0xa0] sm:$0xff] %vm352, %v340
      %374 = vst.msk [vmem:[#allocation2 + $0xa8] sm:$0xff] %vm352, %v341
      %375 = vst.msk [vmem:[#allocation2 + $0xb0] sm:$0xff] %vm352, %v342
      %376 = vst.msk [vmem:[#allocation2 + $0xb8] sm:$0xff] %vm352, %v343
      %377 = vst.msk [vmem:[#allocation2 + $0xc0] sm:$0xff] %vm352, %v344
      %378 = vst.msk [vmem:[#allocation2 + $0xc8] sm:$0xff] %vm352, %v345
      %379 = vst.msk [vmem:[#allocation2 + $0xd0] sm:$0xff] %vm352, %v346
      %380 = vst.msk [vmem:[#allocation2 + $0xd8] sm:$0xff] %vm352, %v347
      %381 = vst.msk [vmem:[#allocation2 + $0xe0] sm:$0xff] %vm352, %v348
      %382 = vst.msk [vmem:[#allocation2 + $0xe8] sm:$0xff] %vm352, %v349
      %383 = vst.msk [vmem:[#allocation2 + $0xf0] sm:$0xff] %vm352, %v350
      %384 = vst.msk [vmem:[#allocation2 + $0xf8] sm:$0xff] %vm352, %v351
      %v385 = vld [vmem:[%s287 + $0x1] sm:$0xff]
      %v386 = vld [vmem:[%s287 + $0x9] sm:$0xff]
      %v387 = vld [vmem:[%s287 + $0x19] sm:$0xff]
      %v388 = vld [vmem:[%s287 + $0x21] sm:$0xff]
      %v389 = vld [vmem:[%s287 + $0x31] sm:$0xff]
      %v390 = vld [vmem:[%s287 + $0x39] sm:$0xff]
      %v391 = vld [vmem:[%s287 + $0x49] sm:$0xff]
      %v392 = vld [vmem:[%s287 + $0x51] sm:$0xff]
      %v393 = vld [vmem:[%s287 + $0x61] sm:$0xff]
      %v394 = vld [vmem:[%s287 + $0x69] sm:$0xff]
      %v395 = vld [vmem:[%s287 + $0x79] sm:$0xff]
      %v396 = vld [vmem:[%s287 + $0x81] sm:$0xff]
      %v397 = vld [vmem:[%s287 + $0x91] sm:$0xff]
      %v398 = vld [vmem:[%s287 + $0x99] sm:$0xff]
      %v399 = vld [vmem:[%s287 + $0xa9] sm:$0xff]
      %v400 = vld [vmem:[%s287 + $0xb1] sm:$0xff]
      %v401 = vld [vmem:[%s287 + $0xc1] sm:$0xff]
      %v402 = vld [vmem:[%s287 + $0xc9] sm:$0xff]
      %v403 = vld [vmem:[%s287 + $0xd9] sm:$0xff]
      %v404 = vld [vmem:[%s287 + $0xe1] sm:$0xff]
      %v405 = vld [vmem:[%s287 + $0xf1] sm:$0xff]
      %v406 = vld [vmem:[%s287 + $0xf9] sm:$0xff]
      %v407 = vld [vmem:[%s287 + $0x109] sm:$0xff]
      %v408 = vld [vmem:[%s287 + $0x111] sm:$0xff]
      %v409 = vld [vmem:[%s287 + $0x121] sm:$0xff]
      %v410 = vld [vmem:[%s287 + $0x129] sm:$0xff]
      %v411 = vld [vmem:[%s287 + $0x139] sm:$0xff]
      %v412 = vld [vmem:[%s287 + $0x141] sm:$0xff]
      %v413 = vld [vmem:[%s287 + $0x151] sm:$0xff]
      %v414 = vld [vmem:[%s287 + $0x159] sm:$0xff]
      %v415 = vld [vmem:[%s287 + $0x169] sm:$0xff]
      %v416 = vld [vmem:[%s287 + $0x171] sm:$0xff]
      %449 = vrot.lane.b32.xlu0 %v385, 4
      %v450 = vpop.permute.xlu0 %449
      %451 = vrot.lane.b32.xlu0 %v386, 4
      %v452 = vpop.permute.xlu0 %451
      %453 = vrot.lane.b32.xlu0 %v387, 4
      %v454 = vpop.permute.xlu0 %453
      %455 = vrot.lane.b32.xlu0 %v388, 4
      %v456 = vpop.permute.xlu0 %455
      %457 = vrot.lane.b32.xlu0 %v389, 4
      %v458 = vpop.permute.xlu0 %457
      %459 = vrot.lane.b32.xlu0 %v390, 4
      %v460 = vpop.permute.xlu0 %459
      %461 = vrot.lane.b32.xlu0 %v391, 4
      %v462 = vpop.permute.xlu0 %461
      %463 = vrot.lane.b32.xlu0 %v392, 4
      %v464 = vpop.permute.xlu0 %463
      %465 = vrot.lane.b32.xlu0 %v393, 4
      %v466 = vpop.permute.xlu0 %465
      %467 = vrot.lane.b32.xlu0 %v394, 4
      %v468 = vpop.permute.xlu0 %467
      %469 = vrot.lane.b32.xlu0 %v395, 4
      %v470 = vpop.permute.xlu0 %469
      %471 = vrot.lane.b32.xlu0 %v396, 4
      %v472 = vpop.permute.xlu0 %471
      %473 = vrot.lane.b32.xlu0 %v397, 4
      %v474 = vpop.permute.xlu0 %473
      %475 = vrot.lane.b32.xlu0 %v398, 4
      %v476 = vpop.permute.xlu0 %475
      %477 = vrot.lane.b32.xlu0 %v399, 4
      %v478 = vpop.permute.xlu0 %477
      %479 = vrot.lane.b32.xlu0 %v400, 4
      %v480 = vpop.permute.xlu0 %479
      %481 = vrot.lane.b32.xlu0 %v401, 4
      %v482 = vpop.permute.xlu0 %481
      %483 = vrot.lane.b32.xlu0 %v402, 4
      %v484 = vpop.permute.xlu0 %483
      %485 = vrot.lane.b32.xlu0 %v403, 4
      %v486 = vpop.permute.xlu0 %485
      %487 = vrot.lane.b32.xlu0 %v404, 4
      %v488 = vpop.permute.xlu0 %487
      %489 = vrot.lane.b32.xlu0 %v405, 4
      %v490 = vpop.permute.xlu0 %489
      %491 = vrot.lane.b32.xlu0 %v406, 4
      %v492 = vpop.permute.xlu0 %491
      %493 = vrot.lane.b32.xlu0 %v407, 4
      %v494 = vpop.permute.xlu0 %493
      %495 = vrot.lane.b32.xlu0 %v408, 4
      %v496 = vpop.permute.xlu0 %495
      %497 = vrot.lane.b32.xlu0 %v409, 4
      %v498 = vpop.permute.xlu0 %497
      %499 = vrot.lane.b32.xlu0 %v410, 4
      %v500 = vpop.permute.xlu0 %499
      %501 = vrot.lane.b32.xlu0 %v411, 4
      %v502 = vpop.permute.xlu0 %501
      %503 = vrot.lane.b32.xlu0 %v412, 4
      %v504 = vpop.permute.xlu0 %503
      %505 = vrot.lane.b32.xlu0 %v413, 4
      %v506 = vpop.permute.xlu0 %505
      %507 = vrot.lane.b32.xlu0 %v414, 4
      %v508 = vpop.permute.xlu0 %507
      %509 = vrot.lane.b32.xlu0 %v415, 4
      %v510 = vpop.permute.xlu0 %509
      %511 = vrot.lane.b32.xlu0 %v416, 4
      %v512 = vpop.permute.xlu0 %511
      %vm545 = vcmask 64544
      %546 = vst.msk [vmem:[#allocation2] sm:$0xff] %vm545, %v450
      %547 = vst.msk [vmem:[#allocation2 + $0x8] sm:$0xff] %vm545, %v452
      %548 = vst.msk [vmem:[#allocation2 + $0x10] sm:$0xff] %vm545, %v454
      %549 = vst.msk [vmem:[#allocation2 + $0x18] sm:$0xff] %vm545, %v456
      %550 = vst.msk [vmem:[#allocation2 + $0x20] sm:$0xff] %vm545, %v458
      %551 = vst.msk [vmem:[#allocation2 + $0x28] sm:$0xff] %vm545, %v460
      %552 = vst.msk [vmem:[#allocation2 + $0x30] sm:$0xff] %vm545, %v462
      %553 = vst.msk [vmem:[#allocation2 + $0x38] sm:$0xff] %vm545, %v464
      %554 = vst.msk [vmem:[#allocation2 + $0x40] sm:$0xff] %vm545, %v466
      %555 = vst.msk [vmem:[#allocation2 + $0x48] sm:$0xff] %vm545, %v468
      %556 = vst.msk [vmem:[#allocation2 + $0x50] sm:$0xff] %vm545, %v470
      %557 = vst.msk [vmem:[#allocation2 + $0x58] sm:$0xff] %vm545, %v472
      %558 = vst.msk [vmem:[#allocation2 + $0x60] sm:$0xff] %vm545, %v474
      %559 = vst.msk [vmem:[#allocation2 + $0x68] sm:$0xff] %vm545, %v476
      %560 = vst.msk [vmem:[#allocation2 + $0x70] sm:$0xff] %vm545, %v478
      %561 = vst.msk [vmem:[#allocation2 + $0x78] sm:$0xff] %vm545, %v480
      %562 = vst.msk [vmem:[#allocation2 + $0x80] sm:$0xff] %vm545, %v482
      %563 = vst.msk [vmem:[#allocation2 + $0x88] sm:$0xff] %vm545, %v484
      %564 = vst.msk [vmem:[#allocation2 + $0x90] sm:$0xff] %vm545, %v486
      %565 = vst.msk [vmem:[#allocation2 + $0x98] sm:$0xff] %vm545, %v488
      %566 = vst.msk [vmem:[#allocation2 + $0xa0] sm:$0xff] %vm545, %v490
      %567 = vst.msk [vmem:[#allocation2 + $0xa8] sm:$0xff] %vm545, %v492
      %568 = vst.msk [vmem:[#allocation2 + $0xb0] sm:$0xff] %vm545, %v494
      %569 = vst.msk [vmem:[#allocation2 + $0xb8] sm:$0xff] %vm545, %v496
      %570 = vst.msk [vmem:[#allocation2 + $0xc0] sm:$0xff] %vm545, %v498
      %571 = vst.msk [vmem:[#allocation2 + $0xc8] sm:$0xff] %vm545, %v500
      %572 = vst.msk [vmem:[#allocation2 + $0xd0] sm:$0xff] %vm545, %v502
      %573 = vst.msk [vmem:[#allocation2 + $0xd8] sm:$0xff] %vm545, %v504
      %574 = vst.msk [vmem:[#allocation2 + $0xe0] sm:$0xff] %vm545, %v506
      %575 = vst.msk [vmem:[#allocation2 + $0xe8] sm:$0xff] %vm545, %v508
      %576 = vst.msk [vmem:[#allocation2 + $0xf0] sm:$0xff] %vm545, %v510
      %577 = vst.msk [vmem:[#allocation2 + $0xf8] sm:$0xff] %vm545, %v512
      %v578 = vld [vmem:[%s287 + $0x2] sm:$0xff]
      %v579 = vld [vmem:[%s287 + $0xa] sm:$0xff]
      %v580 = vld [vmem:[%s287 + $0x1a] sm:$0xff]
      %v581 = vld [vmem:[%s287 + $0x22] sm:$0xff]
      %v582 = vld [vmem:[%s287 + $0x32] sm:$0xff]
      %v583 = vld [vmem:[%s287 + $0x3a] sm:$0xff]
      %v584 = vld [vmem:[%s287 + $0x4a] sm:$0xff]
      %v585 = vld [vmem:[%s287 + $0x52] sm:$0xff]
      %v586 = vld [vmem:[%s287 + $0x62] sm:$0xff]
      %v587 = vld [vmem:[%s287 + $0x6a] sm:$0xff]
      %v588 = vld [vmem:[%s287 + $0x7a] sm:$0xff]
      %v589 = vld [vmem:[%s287 + $0x82] sm:$0xff]
      %v590 = vld [vmem:[%s287 + $0x92] sm:$0xff]
      %v591 = vld [vmem:[%s287 + $0x9a] sm:$0xff]
      %v592 = vld [vmem:[%s287 + $0xaa] sm:$0xff]
      %v593 = vld [vmem:[%s287 + $0xb2] sm:$0xff]
      %v594 = vld [vmem:[%s287 + $0xc2] sm:$0xff]
      %v595 = vld [vmem:[%s287 + $0xca] sm:$0xff]
      %v596 = vld [vmem:[%s287 + $0xda] sm:$0xff]
      %v597 = vld [vmem:[%s287 + $0xe2] sm:$0xff]
      %v598 = vld [vmem:[%s287 + $0xf2] sm:$0xff]
      %v599 = vld [vmem:[%s287 + $0xfa] sm:$0xff]
      %v600 = vld [vmem:[%s287 + $0x10a] sm:$0xff]
      %v601 = vld [vmem:[%s287 + $0x112] sm:$0xff]
      %v602 = vld [vmem:[%s287 + $0x122] sm:$0xff]
      %v603 = vld [vmem:[%s287 + $0x12a] sm:$0xff]
      %v604 = vld [vmem:[%s287 + $0x13a] sm:$0xff]
      %v605 = vld [vmem:[%s287 + $0x142] sm:$0xff]
      %v606 = vld [vmem:[%s287 + $0x152] sm:$0xff]
      %v607 = vld [vmem:[%s287 + $0x15a] sm:$0xff]
      %v608 = vld [vmem:[%s287 + $0x16a] sm:$0xff]
      %v609 = vld [vmem:[%s287 + $0x172] sm:$0xff]
      %642 = vrot.lane.b32.xlu0 %v578, 8
      %v643 = vpop.permute.xlu0 %642
      %644 = vrot.lane.b32.xlu0 %v579, 8
      %v645 = vpop.permute.xlu0 %644
      %646 = vrot.lane.b32.xlu0 %v580, 8
      %v647 = vpop.permute.xlu0 %646
      %648 = vrot.lane.b32.xlu0 %v581, 8
      %v649 = vpop.permute.xlu0 %648
      %650 = vrot.lane.b32.xlu0 %v582, 8
      %v651 = vpop.permute.xlu0 %650
      %652 = vrot.lane.b32.xlu0 %v583, 8
      %v653 = vpop.permute.xlu0 %652
      %654 = vrot.lane.b32.xlu0 %v584, 8
      %v655 = vpop.permute.xlu0 %654
      %656 = vrot.lane.b32.xlu0 %v585, 8
      %v657 = vpop.permute.xlu0 %656
      %658 = vrot.lane.b32.xlu0 %v586, 8
      %v659 = vpop.permute.xlu0 %658
      %660 = vrot.lane.b32.xlu0 %v587, 8
      %v661 = vpop.permute.xlu0 %660
      %662 = vrot.lane.b32.xlu0 %v588, 8
      %v663 = vpop.permute.xlu0 %662
      %664 = vrot.lane.b32.xlu0 %v589, 8
      %v665 = vpop.permute.xlu0 %664
      %666 = vrot.lane.b32.xlu0 %v590, 8
      %v667 = vpop.permute.xlu0 %666
      %668 = vrot.lane.b32.xlu0 %v591, 8
      %v669 = vpop.permute.xlu0 %668
      %670 = vrot.lane.b32.xlu0 %v592, 8
      %v671 = vpop.permute.xlu0 %670
      %672 = vrot.lane.b32.xlu0 %v593, 8
      %v673 = vpop.permute.xlu0 %672
      %674 = vrot.lane.b32.xlu0 %v594, 8
      %v675 = vpop.permute.xlu0 %674
      %676 = vrot.lane.b32.xlu0 %v595, 8
      %v677 = vpop.permute.xlu0 %676
      %678 = vrot.lane.b32.xlu0 %v596, 8
      %v679 = vpop.permute.xlu0 %678
      %680 = vrot.lane.b32.xlu0 %v597, 8
      %v681 = vpop.permute.xlu0 %680
      %682 = vrot.lane.b32.xlu0 %v598, 8
      %v683 = vpop.permute.xlu0 %682
      %684 = vrot.lane.b32.xlu0 %v599, 8
      %v685 = vpop.permute.xlu0 %684
      %686 = vrot.lane.b32.xlu0 %v600, 8
      %v687 = vpop.permute.xlu0 %686
      %688 = vrot.lane.b32.xlu0 %v601, 8
      %v689 = vpop.permute.xlu0 %688
      %690 = vrot.lane.b32.xlu0 %v602, 8
      %v691 = vpop.permute.xlu0 %690
      %692 = vrot.lane.b32.xlu0 %v603, 8
      %v693 = vpop.permute.xlu0 %692
      %694 = vrot.lane.b32.xlu0 %v604, 8
      %v695 = vpop.permute.xlu0 %694
      %696 = vrot.lane.b32.xlu0 %v605, 8
      %v697 = vpop.permute.xlu0 %696
      %698 = vrot.lane.b32.xlu0 %v606, 8
      %v699 = vpop.permute.xlu0 %698
      %700 = vrot.lane.b32.xlu0 %v607, 8
      %v701 = vpop.permute.xlu0 %700
      %702 = vrot.lane.b32.xlu0 %v608, 8
      %v703 = vpop.permute.xlu0 %702
      %704 = vrot.lane.b32.xlu0 %v609, 8
      %v705 = vpop.permute.xlu0 %704
      %vm738 = vcmask 97344
      %739 = vst.msk [vmem:[#allocation2] sm:$0xff] %vm738, %v643
      %740 = vst.msk [vmem:[#allocation2 + $0x8] sm:$0xff] %vm738, %v645
      %741 = vst.msk [vmem:[#allocation2 + $0x10] sm:$0xff] %vm738, %v647
      %742 = vst.msk [vmem:[#allocation2 + $0x18] sm:$0xff] %vm738, %v649
      %743 = vst.msk [vmem:[#allocation2 + $0x20] sm:$0xff] %vm738, %v651
      %744 = vst.msk [vmem:[#allocation2 + $0x28] sm:$0xff] %vm738, %v653
      %745 = vst.msk [vmem:[#allocation2 + $0x30] sm:$0xff] %vm738, %v655
      %746 = vst.msk [vmem:[#allocation2 + $0x38] sm:$0xff] %vm738, %v657
      %747 = vst.msk [vmem:[#allocation2 + $0x40] sm:$0xff] %vm738, %v659
      %748 = vst.msk [vmem:[#allocation2 + $0x48] sm:$0xff] %vm738, %v661
      %749 = vst.msk [vmem:[#allocation2 + $0x50] sm:$0xff] %vm738, %v663
      %750 = vst.msk [vmem:[#allocation2 + $0x58] sm:$0xff] %vm738, %v665
      %751 = vst.msk [vmem:[#allocation2 + $0x60] sm:$0xff] %vm738, %v667
      %752 = vst.msk [vmem:[#allocation2 + $0x68] sm:$0xff] %vm738, %v669
      %753 = vst.msk [vmem:[#allocation2 + $0x70] sm:$0xff] %vm738, %v671
      %754 = vst.msk [vmem:[#allocation2 + $0x78] sm:$0xff] %vm738, %v673
      %755 = vst.msk [vmem:[#allocation2 + $0x80] sm:$0xff] %vm738, %v675
      %756 = vst.msk [vmem:[#allocation2 + $0x88] sm:$0xff] %vm738, %v677
      %757 = vst.msk [vmem:[#allocation2 + $0x90] sm:$0xff] %vm738, %v679
      %758 = vst.msk [vmem:[#allocation2 + $0x98] sm:$0xff] %vm738, %v681
      %759 = vst.msk [vmem:[#allocation2 + $0xa0] sm:$0xff] %vm738, %v683
      %760 = vst.msk [vmem:[#allocation2 + $0xa8] sm:$0xff] %vm738, %v685
      %761 = vst.msk [vmem:[#allocation2 + $0xb0] sm:$0xff] %vm738, %v687
      %762 = vst.msk [vmem:[#allocation2 + $0xb8] sm:$0xff] %vm738, %v689
      %763 = vst.msk [vmem:[#allocation2 + $0xc0] sm:$0xff] %vm738, %v691
      %764 = vst.msk [vmem:[#allocation2 + $0xc8] sm:$0xff] %vm738, %v693
      %765 = vst.msk [vmem:[#allocation2 + $0xd0] sm:$0xff] %vm738, %v695
      %766 = vst.msk [vmem:[#allocation2 + $0xd8] sm:$0xff] %vm738, %v697
      %767 = vst.msk [vmem:[#allocation2 + $0xe0] sm:$0xff] %vm738, %v699
      %768 = vst.msk [vmem:[#allocation2 + $0xe8] sm:$0xff] %vm738, %v701
      %769 = vst.msk [vmem:[#allocation2 + $0xf0] sm:$0xff] %vm738, %v703
      %770 = vst.msk [vmem:[#allocation2 + $0xf8] sm:$0xff] %vm738, %v705
      %s771 = scalar_lea.vmem %s287, 24
      %v772 = vld [vmem:[%s771] sm:$0xff]
      %v773 = vld [vmem:[%s771 + $0x8] sm:$0xff]
      %v774 = vld [vmem:[%s771 + $0x18] sm:$0xff]
      %v775 = vld [vmem:[%s771 + $0x20] sm:$0xff]
      %v776 = vld [vmem:[%s771 + $0x30] sm:$0xff]
      %v777 = vld [vmem:[%s771 + $0x38] sm:$0xff]
      %v778 = vld [vmem:[%s771 + $0x48] sm:$0xff]
      %v779 = vld [vmem:[%s771 + $0x50] sm:$0xff]
      %v780 = vld [vmem:[%s771 + $0x60] sm:$0xff]
      %v781 = vld [vmem:[%s771 + $0x68] sm:$0xff]
      %v782 = vld [vmem:[%s771 + $0x78] sm:$0xff]
      %v783 = vld [vmem:[%s771 + $0x80] sm:$0xff]
      %v784 = vld [vmem:[%s771 + $0x90] sm:$0xff]
      %v785 = vld [vmem:[%s771 + $0x98] sm:$0xff]
      %v786 = vld [vmem:[%s771 + $0xa8] sm:$0xff]
      %v787 = vld [vmem:[%s771 + $0xb0] sm:$0xff]
      %v788 = vld [vmem:[%s771 + $0xc0] sm:$0xff]
      %v789 = vld [vmem:[%s771 + $0xc8] sm:$0xff]
      %v790 = vld [vmem:[%s771 + $0xd8] sm:$0xff]
      %v791 = vld [vmem:[%s771 + $0xe0] sm:$0xff]
      %v792 = vld [vmem:[%s771 + $0xf0] sm:$0xff]
      %v793 = vld [vmem:[%s771 + $0xf8] sm:$0xff]
      %v794 = vld [vmem:[%s771 + $0x108] sm:$0xff]
      %v795 = vld [vmem:[%s771 + $0x110] sm:$0xff]
      %v796 = vld [vmem:[%s771 + $0x120] sm:$0xff]
      %v797 = vld [vmem:[%s771 + $0x128] sm:$0xff]
      %v798 = vld [vmem:[%s771 + $0x138] sm:$0xff]
      %v799 = vld [vmem:[%s771 + $0x140] sm:$0xff]
      %v800 = vld [vmem:[%s771 + $0x150] sm:$0xff]
      %v801 = vld [vmem:[%s771 + $0x158] sm:$0xff]
      %802 = vst.msk [vmem:[#allocation3] sm:$0xff] %vm352, %v772
      %803 = vst.msk [vmem:[#allocation3 + $0x8] sm:$0xff] %vm352, %v773
      %804 = vst.msk [vmem:[#allocation3 + $0x10] sm:$0xff] %vm352, %v774
      %805 = vst.msk [vmem:[#allocation3 + $0x18] sm:$0xff] %vm352, %v775
      %806 = vst.msk [vmem:[#allocation3 + $0x20] sm:$0xff] %vm352, %v776
      %807 = vst.msk [vmem:[#allocation3 + $0x28] sm:$0xff] %vm352, %v777
      %808 = vst.msk [vmem:[#allocation3 + $0x30] sm:$0xff] %vm352, %v778
      %809 = vst.msk [vmem:[#allocation3 + $0x38] sm:$0xff] %vm352, %v779
      %810 = vst.msk [vmem:[#allocation3 + $0x40] sm:$0xff] %vm352, %v780
      %811 = vst.msk [vmem:[#allocation3 + $0x48] sm:$0xff] %vm352, %v781
      %812 = vst.msk [vmem:[#allocation3 + $0x50] sm:$0xff] %vm352, %v782
      %813 = vst.msk [vmem:[#allocation3 + $0x58] sm:$0xff] %vm352, %v783
      %814 = vst.msk [vmem:[#allocation3 + $0x60] sm:$0xff] %vm352, %v784
      %815 = vst.msk [vmem:[#allocation3 + $0x68] sm:$0xff] %vm352, %v785
      %816 = vst.msk [vmem:[#allocation3 + $0x70] sm:$0xff] %vm352, %v786
      %817 = vst.msk [vmem:[#allocation3 + $0x78] sm:$0xff] %vm352, %v787
      %818 = vst.msk [vmem:[#allocation3 + $0x80] sm:$0xff] %vm352, %v788
      %819 = vst.msk [vmem:[#allocation3 + $0x88] sm:$0xff] %vm352, %v789
      %820 = vst.msk [vmem:[#allocation3 + $0x90] sm:$0xff] %vm352, %v790
      %821 = vst.msk [vmem:[#allocation3 + $0x98] sm:$0xff] %vm352, %v791
      %822 = vst.msk [vmem:[#allocation3 + $0xa0] sm:$0xff] %vm352, %v792
      %823 = vst.msk [vmem:[#allocation3 + $0xa8] sm:$0xff] %vm352, %v793
      %824 = vst.msk [vmem:[#allocation3 + $0xb0] sm:$0xff] %vm352, %v794
      %825 = vst.msk [vmem:[#allocation3 + $0xb8] sm:$0xff] %vm352, %v795
      %826 = vst.msk [vmem:[#allocation3 + $0xc0] sm:$0xff] %vm352, %v796
      %827 = vst.msk [vmem:[#allocation3 + $0xc8] sm:$0xff] %vm352, %v797
      %828 = vst.msk [vmem:[#allocation3 + $0xd0] sm:$0xff] %vm352, %v798
      %829 = vst.msk [vmem:[#allocation3 + $0xd8] sm:$0xff] %vm352, %v799
      %830 = vst.msk [vmem:[#allocation3 + $0xe0] sm:$0xff] %vm352, %v800
      %831 = vst.msk [vmem:[#allocation3 + $0xe8] sm:$0xff] %vm352, %v801
      %v832 = vld [vmem:[%s305] sm:$0xff]
      %v833 = vld [vmem:[%s305 + $0x8] sm:$0xff]
      %s834 = scalar_lea.vmem [#allocation3], 240
      %835 = vst.msk [vmem:[%s834] sm:$0xff] %vm352, %v832
      %836 = vst.msk [vmem:[%s834 + $0x8] sm:$0xff] %vm352, %v833
      %v837 = vld [vmem:[%s771 + $0x1] sm:$0xff]
      %v838 = vld [vmem:[%s771 + $0x9] sm:$0xff]
      %v839 = vld [vmem:[%s771 + $0x19] sm:$0xff]
      %v840 = vld [vmem:[%s771 + $0x21] sm:$0xff]
      %v841 = vld [vmem:[%s771 + $0x31] sm:$0xff]
      %v842 = vld [vmem:[%s771 + $0x39] sm:$0xff]
      %v843 = vld [vmem:[%s771 + $0x49] sm:$0xff]
      %v844 = vld [vmem:[%s771 + $0x51] sm:$0xff]
      %v845 = vld [vmem:[%s771 + $0x61] sm:$0xff]
      %v846 = vld [vmem:[%s771 + $0x69] sm:$0xff]
      %v847 = vld [vmem:[%s771 + $0x79] sm:$0xff]
      %v848 = vld [vmem:[%s771 + $0x81] sm:$0xff]
      %v849 = vld [vmem:[%s771 + $0x91] sm:$0xff]
      %v850 = vld [vmem:[%s771 + $0x99] sm:$0xff]
      %v851 = vld [vmem:[%s771 + $0xa9] sm:$0xff]
      %v852 = vld [vmem:[%s771 + $0xb1] sm:$0xff]
      %v853 = vld [vmem:[%s771 + $0xc1] sm:$0xff]
      %v854 = vld [vmem:[%s771 + $0xc9] sm:$0xff]
      %v855 = vld [vmem:[%s771 + $0xd9] sm:$0xff]
      %v856 = vld [vmem:[%s771 + $0xe1] sm:$0xff]
      %v857 = vld [vmem:[%s771 + $0xf1] sm:$0xff]
      %v858 = vld [vmem:[%s771 + $0xf9] sm:$0xff]
      %v859 = vld [vmem:[%s771 + $0x109] sm:$0xff]
      %v860 = vld [vmem:[%s771 + $0x111] sm:$0xff]
      %v861 = vld [vmem:[%s771 + $0x121] sm:$0xff]
      %v862 = vld [vmem:[%s771 + $0x129] sm:$0xff]
      %v863 = vld [vmem:[%s771 + $0x139] sm:$0xff]
      %v864 = vld [vmem:[%s771 + $0x141] sm:$0xff]
      %v865 = vld [vmem:[%s771 + $0x151] sm:$0xff]
      %v866 = vld [vmem:[%s771 + $0x159] sm:$0xff]
      %897 = vrot.lane.b32.xlu0 %v837, 4
      %v898 = vpop.permute.xlu0 %897
      %899 = vrot.lane.b32.xlu0 %v838, 4
      %v900 = vpop.permute.xlu0 %899
      %901 = vrot.lane.b32.xlu0 %v839, 4
      %v902 = vpop.permute.xlu0 %901
      %903 = vrot.lane.b32.xlu0 %v840, 4
      %v904 = vpop.permute.xlu0 %903
      %905 = vrot.lane.b32.xlu0 %v841, 4
      %v906 = vpop.permute.xlu0 %905
      %907 = vrot.lane.b32.xlu0 %v842, 4
      %v908 = vpop.permute.xlu0 %907
      %909 = vrot.lane.b32.xlu0 %v843, 4
      %v910 = vpop.permute.xlu0 %909
      %911 = vrot.lane.b32.xlu0 %v844, 4
      %v912 = vpop.permute.xlu0 %911
      %913 = vrot.lane.b32.xlu0 %v845, 4
      %v914 = vpop.permute.xlu0 %913
      %915 = vrot.lane.b32.xlu0 %v846, 4
      %v916 = vpop.permute.xlu0 %915
      %917 = vrot.lane.b32.xlu0 %v847, 4
      %v918 = vpop.permute.xlu0 %917
      %919 = vrot.lane.b32.xlu0 %v848, 4
      %v920 = vpop.permute.xlu0 %919
      %921 = vrot.lane.b32.xlu0 %v849, 4
      %v922 = vpop.permute.xlu0 %921
      %923 = vrot.lane.b32.xlu0 %v850, 4
      %v924 = vpop.permute.xlu0 %923
      %925 = vrot.lane.b32.xlu0 %v851, 4
      %v926 = vpop.permute.xlu0 %925
      %927 = vrot.lane.b32.xlu0 %v852, 4
      %v928 = vpop.permute.xlu0 %927
      %929 = vrot.lane.b32.xlu0 %v853, 4
      %v930 = vpop.permute.xlu0 %929
      %931 = vrot.lane.b32.xlu0 %v854, 4
      %v932 = vpop.permute.xlu0 %931
      %933 = vrot.lane.b32.xlu0 %v855, 4
      %v934 = vpop.permute.xlu0 %933
      %935 = vrot.lane.b32.xlu0 %v856, 4
      %v936 = vpop.permute.xlu0 %935
      %937 = vrot.lane.b32.xlu0 %v857, 4
      %v938 = vpop.permute.xlu0 %937
      %939 = vrot.lane.b32.xlu0 %v858, 4
      %v940 = vpop.permute.xlu0 %939
      %941 = vrot.lane.b32.xlu0 %v859, 4
      %v942 = vpop.permute.xlu0 %941
      %943 = vrot.lane.b32.xlu0 %v860, 4
      %v944 = vpop.permute.xlu0 %943
      %945 = vrot.lane.b32.xlu0 %v861, 4
      %v946 = vpop.permute.xlu0 %945
      %947 = vrot.lane.b32.xlu0 %v862, 4
      %v948 = vpop.permute.xlu0 %947
      %949 = vrot.lane.b32.xlu0 %v863, 4
      %v950 = vpop.permute.xlu0 %949
      %951 = vrot.lane.b32.xlu0 %v864, 4
      %v952 = vpop.permute.xlu0 %951
      %953 = vrot.lane.b32.xlu0 %v865, 4
      %v954 = vpop.permute.xlu0 %953
      %955 = vrot.lane.b32.xlu0 %v866, 4
      %v956 = vpop.permute.xlu0 %955
      %987 = vst.msk [vmem:[#allocation3] sm:$0xff] %vm545, %v898
      %988 = vst.msk [vmem:[#allocation3 + $0x8] sm:$0xff] %vm545, %v900
      %989 = vst.msk [vmem:[#allocation3 + $0x10] sm:$0xff] %vm545, %v902
      %990 = vst.msk [vmem:[#allocation3 + $0x18] sm:$0xff] %vm545, %v904
      %991 = vst.msk [vmem:[#allocation3 + $0x20] sm:$0xff] %vm545, %v906
      %992 = vst.msk [vmem:[#allocation3 + $0x28] sm:$0xff] %vm545, %v908
      %993 = vst.msk [vmem:[#allocation3 + $0x30] sm:$0xff] %vm545, %v910
      %994 = vst.msk [vmem:[#allocation3 + $0x38] sm:$0xff] %vm545, %v912
      %995 = vst.msk [vmem:[#allocation3 + $0x40] sm:$0xff] %vm545, %v914
      %996 = vst.msk [vmem:[#allocation3 + $0x48] sm:$0xff] %vm545, %v916
      %997 = vst.msk [vmem:[#allocation3 + $0x50] sm:$0xff] %vm545, %v918
      %998 = vst.msk [vmem:[#allocation3 + $0x58] sm:$0xff] %vm545, %v920
      %999 = vst.msk [vmem:[#allocation3 + $0x60] sm:$0xff] %vm545, %v922
      %1000 = vst.msk [vmem:[#allocation3 + $0x68] sm:$0xff] %vm545, %v924
      %1001 = vst.msk [vmem:[#allocation3 + $0x70] sm:$0xff] %vm545, %v926
      %1002 = vst.msk [vmem:[#allocation3 + $0x78] sm:$0xff] %vm545, %v928
      %1003 = vst.msk [vmem:[#allocation3 + $0x80] sm:$0xff] %vm545, %v930
      %1004 = vst.msk [vmem:[#allocation3 + $0x88] sm:$0xff] %vm545, %v932
      %1005 = vst.msk [vmem:[#allocation3 + $0x90] sm:$0xff] %vm545, %v934
      %1006 = vst.msk [vmem:[#allocation3 + $0x98] sm:$0xff] %vm545, %v936
      %1007 = vst.msk [vmem:[#allocation3 + $0xa0] sm:$0xff] %vm545, %v938
      %1008 = vst.msk [vmem:[#allocation3 + $0xa8] sm:$0xff] %vm545, %v940
      %1009 = vst.msk [vmem:[#allocation3 + $0xb0] sm:$0xff] %vm545, %v942
      %1010 = vst.msk [vmem:[#allocation3 + $0xb8] sm:$0xff] %vm545, %v944
      %1011 = vst.msk [vmem:[#allocation3 + $0xc0] sm:$0xff] %vm545, %v946
      %1012 = vst.msk [vmem:[#allocation3 + $0xc8] sm:$0xff] %vm545, %v948
      %1013 = vst.msk [vmem:[#allocation3 + $0xd0] sm:$0xff] %vm545, %v950
      %1014 = vst.msk [vmem:[#allocation3 + $0xd8] sm:$0xff] %vm545, %v952
      %1015 = vst.msk [vmem:[#allocation3 + $0xe0] sm:$0xff] %vm545, %v954
      %1016 = vst.msk [vmem:[#allocation3 + $0xe8] sm:$0xff] %vm545, %v956
      %v1017 = vld [vmem:[%s305 + $0x1] sm:$0xff]
      %v1018 = vld [vmem:[%s305 + $0x9] sm:$0xff]
      %1021 = vrot.lane.b32.xlu0 %v1017, 4
      %v1022 = vpop.permute.xlu0 %1021
      %1023 = vrot.lane.b32.xlu0 %v1018, 4
      %v1024 = vpop.permute.xlu0 %1023
      %1027 = vst.msk [vmem:[%s834] sm:$0xff] %vm545, %v1022
      %1028 = vst.msk [vmem:[%s834 + $0x8] sm:$0xff] %vm545, %v1024
      %v1029 = vld [vmem:[%s771 + $0x2] sm:$0xff]
      %v1030 = vld [vmem:[%s771 + $0xa] sm:$0xff]
      %v1031 = vld [vmem:[%s771 + $0x1a] sm:$0xff]
      %v1032 = vld [vmem:[%s771 + $0x22] sm:$0xff]
      %v1033 = vld [vmem:[%s771 + $0x32] sm:$0xff]
      %v1034 = vld [vmem:[%s771 + $0x3a] sm:$0xff]
      %v1035 = vld [vmem:[%s771 + $0x4a] sm:$0xff]
      %v1036 = vld [vmem:[%s771 + $0x52] sm:$0xff]
      %v1037 = vld [vmem:[%s771 + $0x62] sm:$0xff]
      %v1038 = vld [vmem:[%s771 + $0x6a] sm:$0xff]
      %v1039 = vld [vmem:[%s771 + $0x7a] sm:$0xff]
      %v1040 = vld [vmem:[%s771 + $0x82] sm:$0xff]
      %v1041 = vld [vmem:[%s771 + $0x92] sm:$0xff]
      %v1042 = vld [vmem:[%s771 + $0x9a] sm:$0xff]
      %v1043 = vld [vmem:[%s771 + $0xaa] sm:$0xff]
      %v1044 = vld [vmem:[%s771 + $0xb2] sm:$0xff]
      %v1045 = vld [vmem:[%s771 + $0xc2] sm:$0xff]
      %v1046 = vld [vmem:[%s771 + $0xca] sm:$0xff]
      %v1047 = vld [vmem:[%s771 + $0xda] sm:$0xff]
      %v1048 = vld [vmem:[%s771 + $0xe2] sm:$0xff]
      %v1049 = vld [vmem:[%s771 + $0xf2] sm:$0xff]
      %v1050 = vld [vmem:[%s771 + $0xfa] sm:$0xff]
      %v1051 = vld [vmem:[%s771 + $0x10a] sm:$0xff]
      %v1052 = vld [vmem:[%s771 + $0x112] sm:$0xff]
      %v1053 = vld [vmem:[%s771 + $0x122] sm:$0xff]
      %v1054 = vld [vmem:[%s771 + $0x12a] sm:$0xff]
      %v1055 = vld [vmem:[%s771 + $0x13a] sm:$0xff]
      %v1056 = vld [vmem:[%s771 + $0x142] sm:$0xff]
      %v1057 = vld [vmem:[%s771 + $0x152] sm:$0xff]
      %v1058 = vld [vmem:[%s771 + $0x15a] sm:$0xff]
      %1089 = vrot.lane.b32.xlu0 %v1029, 8
      %v1090 = vpop.permute.xlu0 %1089
      %1091 = vrot.lane.b32.xlu0 %v1030, 8
      %v1092 = vpop.permute.xlu0 %1091
      %1093 = vrot.lane.b32.xlu0 %v1031, 8
      %v1094 = vpop.permute.xlu0 %1093
      %1095 = vrot.lane.b32.xlu0 %v1032, 8
      %v1096 = vpop.permute.xlu0 %1095
      %1097 = vrot.lane.b32.xlu0 %v1033, 8
      %v1098 = vpop.permute.xlu0 %1097
      %1099 = vrot.lane.b32.xlu0 %v1034, 8
      %v1100 = vpop.permute.xlu0 %1099
      %1101 = vrot.lane.b32.xlu0 %v1035, 8
      %v1102 = vpop.permute.xlu0 %1101
      %1103 = vrot.lane.b32.xlu0 %v1036, 8
      %v1104 = vpop.permute.xlu0 %1103
      %1105 = vrot.lane.b32.xlu0 %v1037, 8
      %v1106 = vpop.permute.xlu0 %1105
      %1107 = vrot.lane.b32.xlu0 %v1038, 8
      %v1108 = vpop.permute.xlu0 %1107
      %1109 = vrot.lane.b32.xlu0 %v1039, 8
      %v1110 = vpop.permute.xlu0 %1109
      %1111 = vrot.lane.b32.xlu0 %v1040, 8
      %v1112 = vpop.permute.xlu0 %1111
      %1113 = vrot.lane.b32.xlu0 %v1041, 8
      %v1114 = vpop.permute.xlu0 %1113
      %1115 = vrot.lane.b32.xlu0 %v1042, 8
      %v1116 = vpop.permute.xlu0 %1115
      %1117 = vrot.lane.b32.xlu0 %v1043, 8
      %v1118 = vpop.permute.xlu0 %1117
      %1119 = vrot.lane.b32.xlu0 %v1044, 8
      %v1120 = vpop.permute.xlu0 %1119
      %1121 = vrot.lane.b32.xlu0 %v1045, 8
      %v1122 = vpop.permute.xlu0 %1121
      %1123 = vrot.lane.b32.xlu0 %v1046, 8
      %v1124 = vpop.permute.xlu0 %1123
      %1125 = vrot.lane.b32.xlu0 %v1047, 8
      %v1126 = vpop.permute.xlu0 %1125
      %1127 = vrot.lane.b32.xlu0 %v1048, 8
      %v1128 = vpop.permute.xlu0 %1127
      %1129 = vrot.lane.b32.xlu0 %v1049, 8
      %v1130 = vpop.permute.xlu0 %1129
      %1131 = vrot.lane.b32.xlu0 %v1050, 8
      %v1132 = vpop.permute.xlu0 %1131
      %1133 = vrot.lane.b32.xlu0 %v1051, 8
      %v1134 = vpop.permute.xlu0 %1133
      %1135 = vrot.lane.b32.xlu0 %v1052, 8
      %v1136 = vpop.permute.xlu0 %1135
      %1137 = vrot.lane.b32.xlu0 %v1053, 8
      %v1138 = vpop.permute.xlu0 %1137
      %1139 = vrot.lane.b32.xlu0 %v1054, 8
      %v1140 = vpop.permute.xlu0 %1139
      %1141 = vrot.lane.b32.xlu0 %v1055, 8
      %v1142 = vpop.permute.xlu0 %1141
      %1143 = vrot.lane.b32.xlu0 %v1056, 8
      %v1144 = vpop.permute.xlu0 %1143
      %1145 = vrot.lane.b32.xlu0 %v1057, 8
      %v1146 = vpop.permute.xlu0 %1145
      %1147 = vrot.lane.b32.xlu0 %v1058, 8
      %v1148 = vpop.permute.xlu0 %1147
      %1179 = vst.msk [vmem:[#allocation3] sm:$0xff] %vm738, %v1090
      %1180 = vst.msk [vmem:[#allocation3 + $0x8] sm:$0xff] %vm738, %v1092
      %1181 = vst.msk [vmem:[#allocation3 + $0x10] sm:$0xff] %vm738, %v1094
      %1182 = vst.msk [vmem:[#allocation3 + $0x18] sm:$0xff] %vm738, %v1096
      %1183 = vst.msk [vmem:[#allocation3 + $0x20] sm:$0xff] %vm738, %v1098
      %1184 = vst.msk [vmem:[#allocation3 + $0x28] sm:$0xff] %vm738, %v1100
      %1185 = vst.msk [vmem:[#allocation3 + $0x30] sm:$0xff] %vm738, %v1102
      %1186 = vst.msk [vmem:[#allocation3 + $0x38] sm:$0xff] %vm738, %v1104
      %1187 = vst.msk [vmem:[#allocation3 + $0x40] sm:$0xff] %vm738, %v1106
      %1188 = vst.msk [vmem:[#allocation3 + $0x48] sm:$0xff] %vm738, %v1108
      %1189 = vst.msk [vmem:[#allocation3 + $0x50] sm:$0xff] %vm738, %v1110
      %1190 = vst.msk [vmem:[#allocation3 + $0x58] sm:$0xff] %vm738, %v1112
      %1191 = vst.msk [vmem:[#allocation3 + $0x60] sm:$0xff] %vm738, %v1114
      %1192 = vst.msk [vmem:[#allocation3 + $0x68] sm:$0xff] %vm738, %v1116
      %1193 = vst.msk [vmem:[#allocation3 + $0x70] sm:$0xff] %vm738, %v1118
      %1194 = vst.msk [vmem:[#allocation3 + $0x78] sm:$0xff] %vm738, %v1120
      %1195 = vst.msk [vmem:[#allocation3 + $0x80] sm:$0xff] %vm738, %v1122
      %1196 = vst.msk [vmem:[#allocation3 + $0x88] sm:$0xff] %vm738, %v1124
      %1197 = vst.msk [vmem:[#allocation3 + $0x90] sm:$0xff] %vm738, %v1126
      %1198 = vst.msk [vmem:[#allocation3 + $0x98] sm:$0xff] %vm738, %v1128
      %1199 = vst.msk [vmem:[#allocation3 + $0xa0] sm:$0xff] %vm738, %v1130
      %1200 = vst.msk [vmem:[#allocation3 + $0xa8] sm:$0xff] %vm738, %v1132
      %1201 = vst.msk [vmem:[#allocation3 + $0xb0] sm:$0xff] %vm738, %v1134
      %1202 = vst.msk [vmem:[#allocation3 + $0xb8] sm:$0xff] %vm738, %v1136
      %1203 = vst.msk [vmem:[#allocation3 + $0xc0] sm:$0xff] %vm738, %v1138
      %1204 = vst.msk [vmem:[#allocation3 + $0xc8] sm:$0xff] %vm738, %v1140
      %1205 = vst.msk [vmem:[#allocation3 + $0xd0] sm:$0xff] %vm738, %v1142
      %1206 = vst.msk [vmem:[#allocation3 + $0xd8] sm:$0xff] %vm738, %v1144
      %1207 = vst.msk [vmem:[#allocation3 + $0xe0] sm:$0xff] %vm738, %v1146
      %1208 = vst.msk [vmem:[#allocation3 + $0xe8] sm:$0xff] %vm738, %v1148
      %v1209 = vld [vmem:[%s305 + $0x2] sm:$0xff]
      %v1210 = vld [vmem:[%s305 + $0xa] sm:$0xff]
      %1213 = vrot.lane.b32.xlu0 %v1209, 8
      %v1214 = vpop.permute.xlu0 %1213
      %1215 = vrot.lane.b32.xlu0 %v1210, 8
      %v1216 = vpop.permute.xlu0 %1215
      %1219 = vst.msk [vmem:[%s834] sm:$0xff] %vm738, %v1214
      %1220 = vst.msk [vmem:[%s834 + $0x8] sm:$0xff] %vm738, %v1216
      %v1221 = vld [vmem:[#allocation2] sm:$0xff]
      %v1222 = vld [vmem:[#allocation2 + $0x8] sm:$0xff]
      %v1223 = vld [vmem:[#allocation2 + $0x10] sm:$0xff]
      %v1224 = vld [vmem:[#allocation2 + $0x18] sm:$0xff]
      %v1225 = vld [vmem:[#allocation2 + $0x20] sm:$0xff]
      %v1226 = vld [vmem:[#allocation2 + $0x28] sm:$0xff]
      %v1227 = vld [vmem:[#allocation2 + $0x30] sm:$0xff]
      %v1228 = vld [vmem:[#allocation2 + $0x38] sm:$0xff]
      %v1229 = vld [vmem:[#allocation2 + $0x40] sm:$0xff]
      %v1230 = vld [vmem:[#allocation2 + $0x48] sm:$0xff]
      %v1231 = vld [vmem:[#allocation2 + $0x50] sm:$0xff]
      %v1232 = vld [vmem:[#allocation2 + $0x58] sm:$0xff]
      %v1233 = vld [vmem:[#allocation2 + $0x60] sm:$0xff]
      %v1234 = vld [vmem:[#allocation2 + $0x68] sm:$0xff]
      %v1235 = vld [vmem:[#allocation2 + $0x70] sm:$0xff]
      %v1236 = vld [vmem:[#allocation2 + $0x78] sm:$0xff]
      %v1237 = vld [vmem:[#allocation2 + $0x80] sm:$0xff]
      %v1238 = vld [vmem:[#allocation2 + $0x88] sm:$0xff]
      %v1239 = vld [vmem:[#allocation2 + $0x90] sm:$0xff]
      %v1240 = vld [vmem:[#allocation2 + $0x98] sm:$0xff]
      %v1241 = vld [vmem:[#allocation2 + $0xa0] sm:$0xff]
      %v1242 = vld [vmem:[#allocation2 + $0xa8] sm:$0xff]
      %v1243 = vld [vmem:[#allocation2 + $0xb0] sm:$0xff]
      %v1244 = vld [vmem:[#allocation2 + $0xb8] sm:$0xff]
      %v1245 = vld [vmem:[#allocation2 + $0xc0] sm:$0xff]
      %v1246 = vld [vmem:[#allocation2 + $0xc8] sm:$0xff]
      %v1247 = vld [vmem:[#allocation2 + $0xd0] sm:$0xff]
      %v1248 = vld [vmem:[#allocation2 + $0xd8] sm:$0xff]
      %v1249 = vld [vmem:[#allocation2 + $0xe0] sm:$0xff]
      %v1250 = vld [vmem:[#allocation2 + $0xe8] sm:$0xff]
      %v1251 = vld [vmem:[#allocation2 + $0xf0] sm:$0xff]
      %v1252 = vld [vmem:[#allocation2 + $0xf8] sm:$0xff]
      %v1253 = vld [vmem:[%s2] sm:$0xff]
      %v1254 = vld [vmem:[%s2 + $0x8] sm:$0xf]
      %s1255 = scalar_lea.vmem %s287, 48
      %v1256 = vld [vmem:[%s1255] sm:$0xff]
      %v1257 = vld [vmem:[%s1255 + $0x8] sm:$0xff]
      %v1258 = vld [vmem:[%s1255 + $0x18] sm:$0xff]
      %v1259 = vld [vmem:[%s1255 + $0x20] sm:$0xff]
      %v1260 = vld [vmem:[%s1255 + $0x30] sm:$0xff]
      %v1261 = vld [vmem:[%s1255 + $0x38] sm:$0xff]
      %v1262 = vld [vmem:[%s1255 + $0x48] sm:$0xff]
      %v1263 = vld [vmem:[%s1255 + $0x50] sm:$0xff]
      %v1264 = vld [vmem:[%s1255 + $0x60] sm:$0xff]
      %v1265 = vld [vmem:[%s1255 + $0x68] sm:$0xff]
      %v1266 = vld [vmem:[%s1255 + $0x78] sm:$0xff]
      %v1267 = vld [vmem:[%s1255 + $0x80] sm:$0xff]
      %v1268 = vld [vmem:[%s1255 + $0x90] sm:$0xff]
      %v1269 = vld [vmem:[%s1255 + $0x98] sm:$0xff]
      %v1270 = vld [vmem:[%s1255 + $0xa8] sm:$0xff]
      %v1271 = vld [vmem:[%s1255 + $0xb0] sm:$0xff]
      %v1272 = vld [vmem:[%s1255 + $0xc0] sm:$0xff]
      %v1273 = vld [vmem:[%s1255 + $0xc8] sm:$0xff]
      %v1274 = vld [vmem:[%s1255 + $0xd8] sm:$0xff]
      %v1275 = vld [vmem:[%s1255 + $0xe0] sm:$0xff]
      %v1276 = vld [vmem:[%s1255 + $0xf0] sm:$0xff]
      %v1277 = vld [vmem:[%s1255 + $0xf8] sm:$0xff]
      %v1278 = vld [vmem:[%s1255 + $0x108] sm:$0xff]
      %v1279 = vld [vmem:[%s1255 + $0x110] sm:$0xff]
      %v1280 = vld [vmem:[%s1255 + $0x120] sm:$0xff]
      %v1281 = vld [vmem:[%s1255 + $0x128] sm:$0xff]
      %v1282 = vld [vmem:[%s1255 + $0x138] sm:$0xff]
      %v1283 = vld [vmem:[%s1255 + $0x140] sm:$0xff]
      %1284 = vst.msk [vmem:[#allocation2] sm:$0xff] %vm352, %v1256
      %1285 = vst.msk [vmem:[#allocation2 + $0x8] sm:$0xff] %vm352, %v1257
      %1286 = vst.msk [vmem:[#allocation2 + $0x10] sm:$0xff] %vm352, %v1258
      %1287 = vst.msk [vmem:[#allocation2 + $0x18] sm:$0xff] %vm352, %v1259
      %1288 = vst.msk [vmem:[#allocation2 + $0x20] sm:$0xff] %vm352, %v1260
      %1289 = vst.msk [vmem:[#allocation2 + $0x28] sm:$0xff] %vm352, %v1261
      %1290 = vst.msk [vmem:[#allocation2 + $0x30] sm:$0xff] %vm352, %v1262
      %1291 = vst.msk [vmem:[#allocation2 + $0x38] sm:$0xff] %vm352, %v1263
      %1292 = vst.msk [vmem:[#allocation2 + $0x40] sm:$0xff] %vm352, %v1264
      %1293 = vst.msk [vmem:[#allocation2 + $0x48] sm:$0xff] %vm352, %v1265
      %1294 = vst.msk [vmem:[#allocation2 + $0x50] sm:$0xff] %vm352, %v1266
      %1295 = vst.msk [vmem:[#allocation2 + $0x58] sm:$0xff] %vm352, %v1267
      %1296 = vst.msk [vmem:[#allocation2 + $0x60] sm:$0xff] %vm352, %v1268
      %1297 = vst.msk [vmem:[#allocation2 + $0x68] sm:$0xff] %vm352, %v1269
      %1298 = vst.msk [vmem:[#allocation2 + $0x70] sm:$0xff] %vm352, %v1270
      %1299 = vst.msk [vmem:[#allocation2 + $0x78] sm:$0xff] %vm352, %v1271
      %1300 = vst.msk [vmem:[#allocation2 + $0x80] sm:$0xff] %vm352, %v1272
      %1301 = vst.msk [vmem:[#allocation2 + $0x88] sm:$0xff] %vm352, %v1273
      %1302 = vst.msk [vmem:[#allocation2 + $0x90] sm:$0xff] %vm352, %v1274
      %1303 = vst.msk [vmem:[#allocation2 + $0x98] sm:$0xff] %vm352, %v1275
      %1304 = vst.msk [vmem:[#allocation2 + $0xa0] sm:$0xff] %vm352, %v1276
      %1305 = vst.msk [vmem:[#allocation2 + $0xa8] sm:$0xff] %vm352, %v1277
      %1306 = vst.msk [vmem:[#allocation2 + $0xb0] sm:$0xff] %vm352, %v1278
      %1307 = vst.msk [vmem:[#allocation2 + $0xb8] sm:$0xff] %vm352, %v1279
      %1308 = vst.msk [vmem:[#allocation2 + $0xc0] sm:$0xff] %vm352, %v1280
      %1309 = vst.msk [vmem:[#allocation2 + $0xc8] sm:$0xff] %vm352, %v1281
      %1310 = vst.msk [vmem:[#allocation2 + $0xd0] sm:$0xff] %vm352, %v1282
      %1311 = vst.msk [vmem:[#allocation2 + $0xd8] sm:$0xff] %vm352, %v1283
      %v1312 = vld [vmem:[%s305] sm:$0xff]
      %v1313 = vld [vmem:[%s305 + $0x8] sm:$0xff]
      %v1314 = vld [vmem:[%s305 + $0x18] sm:$0xff]
      %v1315 = vld [vmem:[%s305 + $0x20] sm:$0xff]
      %s1316 = scalar_lea.vmem [#allocation2], 224
      %1317 = vst.msk [vmem:[%s1316] sm:$0xff] %vm352, %v1312
      %1318 = vst.msk [vmem:[%s1316 + $0x8] sm:$0xff] %vm352, %v1313
      %1319 = vst.msk [vmem:[%s1316 + $0x10] sm:$0xff] %vm352, %v1314
      %1320 = vst.msk [vmem:[%s1316 + $0x18] sm:$0xff] %vm352, %v1315
      %v1321 = vld [vmem:[%s1255 + $0x1] sm:$0xff]
      %v1322 = vld [vmem:[%s1255 + $0x9] sm:$0xff]
      %v1323 = vld [vmem:[%s1255 + $0x19] sm:$0xff]
      %v1324 = vld [vmem:[%s1255 + $0x21] sm:$0xff]
      %v1325 = vld [vmem:[%s1255 + $0x31] sm:$0xff]
      %v1326 = vld [vmem:[%s1255 + $0x39] sm:$0xff]
      %v1327 = vld [vmem:[%s1255 + $0x49] sm:$0xff]
      %v1328 = vld [vmem:[%s1255 + $0x51] sm:$0xff]
      %v1329 = vld [vmem:[%s1255 + $0x61] sm:$0xff]
      %v1330 = vld [vmem:[%s1255 + $0x69] sm:$0xff]
      %v1331 = vld [vmem:[%s1255 + $0x79] sm:$0xff]
      %v1332 = vld [vmem:[%s1255 + $0x81] sm:$0xff]
      %v1333 = vld [vmem:[%s1255 + $0x91] sm:$0xff]
      %v1334 = vld [vmem:[%s1255 + $0x99] sm:$0xff]
      %v1335 = vld [vmem:[%s1255 + $0xa9] sm:$0xff]
      %v1336 = vld [vmem:[%s1255 + $0xb1] sm:$0xff]
      %v1337 = vld [vmem:[%s1255 + $0xc1] sm:$0xff]
      %v1338 = vld [vmem:[%s1255 + $0xc9] sm:$0xff]
      %v1339 = vld [vmem:[%s1255 + $0xd9] sm:$0xff]
      %v1340 = vld [vmem:[%s1255 + $0xe1] sm:$0xff]
      %v1341 = vld [vmem:[%s1255 + $0xf1] sm:$0xff]
      %v1342 = vld [vmem:[%s1255 + $0xf9] sm:$0xff]
      %v1343 = vld [vmem:[%s1255 + $0x109] sm:$0xff]
      %v1344 = vld [vmem:[%s1255 + $0x111] sm:$0xff]
      %v1345 = vld [vmem:[%s1255 + $0x121] sm:$0xff]
      %v1346 = vld [vmem:[%s1255 + $0x129] sm:$0xff]
      %v1347 = vld [vmem:[%s1255 + $0x139] sm:$0xff]
      %v1348 = vld [vmem:[%s1255 + $0x141] sm:$0xff]
      %1377 = vrot.lane.b32.xlu0 %v1321, 4
      %v1378 = vpop.permute.xlu0 %1377
      %1379 = vrot.lane.b32.xlu0 %v1322, 4
      %v1380 = vpop.permute.xlu0 %1379
      %1381 = vrot.lane.b32.xlu0 %v1323, 4
      %v1382 = vpop.permute.xlu0 %1381
      %1383 = vrot.lane.b32.xlu0 %v1324, 4
      %v1384 = vpop.permute.xlu0 %1383
      %1385 = vrot.lane.b32.xlu0 %v1325, 4
      %v1386 = vpop.permute.xlu0 %1385
      %1387 = vrot.lane.b32.xlu0 %v1326, 4
      %v1388 = vpop.permute.xlu0 %1387
      %1389 = vrot.lane.b32.xlu0 %v1327, 4
      %v1390 = vpop.permute.xlu0 %1389
      %1391 = vrot.lane.b32.xlu0 %v1328, 4
      %v1392 = vpop.permute.xlu0 %1391
      %1393 = vrot.lane.b32.xlu0 %v1329, 4
      %v1394 = vpop.permute.xlu0 %1393
      %1395 = vrot.lane.b32.xlu0 %v1330, 4
      %v1396 = vpop.permute.xlu0 %1395
      %1397 = vrot.lane.b32.xlu0 %v1331, 4
      %v1398 = vpop.permute.xlu0 %1397
      %1399 = vrot.lane.b32.xlu0 %v1332, 4
      %v1400 = vpop.permute.xlu0 %1399
      %1401 = vrot.lane.b32.xlu0 %v1333, 4
      %v1402 = vpop.permute.xlu0 %1401
      %1403 = vrot.lane.b32.xlu0 %v1334, 4
      %v1404 = vpop.permute.xlu0 %1403
      %1405 = vrot.lane.b32.xlu0 %v1335, 4
      %v1406 = vpop.permute.xlu0 %1405
      %1407 = vrot.lane.b32.xlu0 %v1336, 4
      %v1408 = vpop.permute.xlu0 %1407
      %1409 = vrot.lane.b32.xlu0 %v1337, 4
      %v1410 = vpop.permute.xlu0 %1409
      %1411 = vrot.lane.b32.xlu0 %v1338, 4
      %v1412 = vpop.permute.xlu0 %1411
      %1413 = vrot.lane.b32.xlu0 %v1339, 4
      %v1414 = vpop.permute.xlu0 %1413
      %1415 = vrot.lane.b32.xlu0 %v1340, 4
      %v1416 = vpop.permute.xlu0 %1415
      %1417 = vrot.lane.b32.xlu0 %v1341, 4
      %v1418 = vpop.permute.xlu0 %1417
      %1419 = vrot.lane.b32.xlu0 %v1342, 4
      %v1420 = vpop.permute.xlu0 %1419
      %1421 = vrot.lane.b32.xlu0 %v1343, 4
      %v1422 = vpop.permute.xlu0 %1421
      %1423 = vrot.lane.b32.xlu0 %v1344, 4
      %v1424 = vpop.permute.xlu0 %1423
      %1425 = vrot.lane.b32.xlu0 %v1345, 4
      %v1426 = vpop.permute.xlu0 %1425
      %1427 = vrot.lane.b32.xlu0 %v1346, 4
      %v1428 = vpop.permute.xlu0 %1427
      %1429 = vrot.lane.b32.xlu0 %v1347, 4
      %v1430 = vpop.permute.xlu0 %1429
      %1431 = vrot.lane.b32.xlu0 %v1348, 4
      %v1432 = vpop.permute.xlu0 %1431
      %1461 = vst.msk [vmem:[#allocation2] sm:$0xff] %vm545, %v1378
      %1462 = vst.msk [vmem:[#allocation2 + $0x8] sm:$0xff] %vm545, %v1380
      %1463 = vst.msk [vmem:[#allocation2 + $0x10] sm:$0xff] %vm545, %v1382
      %1464 = vst.msk [vmem:[#allocation2 + $0x18] sm:$0xff] %vm545, %v1384
      %1465 = vst.msk [vmem:[#allocation2 + $0x20] sm:$0xff] %vm545, %v1386
      %1466 = vst.msk [vmem:[#allocation2 + $0x28] sm:$0xff] %vm545, %v1388
      %1467 = vst.msk [vmem:[#allocation2 + $0x30] sm:$0xff] %vm545, %v1390
      %1468 = vst.msk [vmem:[#allocation2 + $0x38] sm:$0xff] %vm545, %v1392
      %1469 = vst.msk [vmem:[#allocation2 + $0x40] sm:$0xff] %vm545, %v1394
      %1470 = vst.msk [vmem:[#allocation2 + $0x48] sm:$0xff] %vm545, %v1396
      %1471 = vst.msk [vmem:[#allocation2 + $0x50] sm:$0xff] %vm545, %v1398
      %1472 = vst.msk [vmem:[#allocation2 + $0x58] sm:$0xff] %vm545, %v1400
      %1473 = vst.msk [vmem:[#allocation2 + $0x60] sm:$0xff] %vm545, %v1402
      %1474 = vst.msk [vmem:[#allocation2 + $0x68] sm:$0xff] %vm545, %v1404
      %1475 = vst.msk [vmem:[#allocation2 + $0x70] sm:$0xff] %vm545, %v1406
      %1476 = vst.msk [vmem:[#allocation2 + $0x78] sm:$0xff] %vm545, %v1408
      %1477 = vst.msk [vmem:[#allocation2 + $0x80] sm:$0xff] %vm545, %v1410
      %1478 = vst.msk [vmem:[#allocation2 + $0x88] sm:$0xff] %vm545, %v1412
      %1479 = vst.msk [vmem:[#allocation2 + $0x90] sm:$0xff] %vm545, %v1414
      %1480 = vst.msk [vmem:[#allocation2 + $0x98] sm:$0xff] %vm545, %v1416
      %1481 = vst.msk [vmem:[#allocation2 + $0xa0] sm:$0xff] %vm545, %v1418
      %1482 = vst.msk [vmem:[#allocation2 + $0xa8] sm:$0xff] %vm545, %v1420
      %1483 = vst.msk [vmem:[#allocation2 + $0xb0] sm:$0xff] %vm545, %v1422
      %1484 = vst.msk [vmem:[#allocation2 + $0xb8] sm:$0xff] %vm545, %v1424
      %1485 = vst.msk [vmem:[#allocation2 + $0xc0] sm:$0xff] %vm545, %v1426
      %1486 = vst.msk [vmem:[#allocation2 + $0xc8] sm:$0xff] %vm545, %v1428
      %1487 = vst.msk [vmem:[#allocation2 + $0xd0] sm:$0xff] %vm545, %v1430
      %1488 = vst.msk [vmem:[#allocation2 + $0xd8] sm:$0xff] %vm545, %v1432
      %v1489 = vld [vmem:[%s305 + $0x1] sm:$0xff]
      %v1490 = vld [vmem:[%s305 + $0x9] sm:$0xff]
      %v1491 = vld [vmem:[%s305 + $0x19] sm:$0xff]
      %v1492 = vld [vmem:[%s305 + $0x21] sm:$0xff]
      %1497 = vrot.lane.b32.xlu0 %v1489, 4
      %v1498 = vpop.permute.xlu0 %1497
      %1499 = vrot.lane.b32.xlu0 %v1490, 4
      %v1500 = vpop.permute.xlu0 %1499
      %1501 = vrot.lane.b32.xlu0 %v1491, 4
      %v1502 = vpop.permute.xlu0 %1501
      %1503 = vrot.lane.b32.xlu0 %v1492, 4
      %v1504 = vpop.permute.xlu0 %1503
      %1509 = vst.msk [vmem:[%s1316] sm:$0xff] %vm545, %v1498
      %1510 = vst.msk [vmem:[%s1316 + $0x8] sm:$0xff] %vm545, %v1500
      %1511 = vst.msk [vmem:[%s1316 + $0x10] sm:$0xff] %vm545, %v1502
      %1512 = vst.msk [vmem:[%s1316 + $0x18] sm:$0xff] %vm545, %v1504
      %v1513 = vld [vmem:[%s1255 + $0x2] sm:$0xff]
      %v1514 = vld [vmem:[%s1255 + $0xa] sm:$0xff]
      %v1515 = vld [vmem:[%s1255 + $0x1a] sm:$0xff]
      %v1516 = vld [vmem:[%s1255 + $0x22] sm:$0xff]
      %v1517 = vld [vmem:[%s1255 + $0x32] sm:$0xff]
      %v1518 = vld [vmem:[%s1255 + $0x3a] sm:$0xff]
      %v1519 = vld [vmem:[%s1255 + $0x4a] sm:$0xff]
      %v1520 = vld [vmem:[%s1255 + $0x52] sm:$0xff]
      %v1521 = vld [vmem:[%s1255 + $0x62] sm:$0xff]
      %v1522 = vld [vmem:[%s1255 + $0x6a] sm:$0xff]
      %v1523 = vld [vmem:[%s1255 + $0x7a] sm:$0xff]
      %v1524 = vld [vmem:[%s1255 + $0x82] sm:$0xff]
      %v1525 = vld [vmem:[%s1255 + $0x92] sm:$0xff]
      %v1526 = vld [vmem:[%s1255 + $0x9a] sm:$0xff]
      %v1527 = vld [vmem:[%s1255 + $0xaa] sm:$0xff]
      %v1528 = vld [vmem:[%s1255 + $0xb2] sm:$0xff]
      %v1529 = vld [vmem:[%s1255 + $0xc2] sm:$0xff]
      %v1530 = vld [vmem:[%s1255 + $0xca] sm:$0xff]
      %v1531 = vld [vmem:[%s1255 + $0xda] sm:$0xff]
      %v1532 = vld [vmem:[%s1255 + $0xe2] sm:$0xff]
      %v1533 = vld [vmem:[%s1255 + $0xf2] sm:$0xff]
      %v1534 = vld [vmem:[%s1255 + $0xfa] sm:$0xff]
      %v1535 = vld [vmem:[%s1255 + $0x10a] sm:$0xff]
      %v1536 = vld [vmem:[%s1255 + $0x112] sm:$0xff]
      %v1537 = vld [vmem:[%s1255 + $0x122] sm:$0xff]
      %v1538 = vld [vmem:[%s1255 + $0x12a] sm:$0xff]
      %v1539 = vld [vmem:[%s1255 + $0x13a] sm:$0xff]
      %v1540 = vld [vmem:[%s1255 + $0x142] sm:$0xff]
      %1569 = vrot.lane.b32.xlu0 %v1513, 8
      %v1570 = vpop.permute.xlu0 %1569
      %1571 = vrot.lane.b32.xlu0 %v1514, 8
      %v1572 = vpop.permute.xlu0 %1571
      %1573 = vrot.lane.b32.xlu0 %v1515, 8
      %v1574 = vpop.permute.xlu0 %1573
      %1575 = vrot.lane.b32.xlu0 %v1516, 8
      %v1576 = vpop.permute.xlu0 %1575
      %1577 = vrot.lane.b32.xlu0 %v1517, 8
      %v1578 = vpop.permute.xlu0 %1577
      %1579 = vrot.lane.b32.xlu0 %v1518, 8
      %v1580 = vpop.permute.xlu0 %1579
      %1581 = vrot.lane.b32.xlu0 %v1519, 8
      %v1582 = vpop.permute.xlu0 %1581
      %1583 = vrot.lane.b32.xlu0 %v1520, 8
      %v1584 = vpop.permute.xlu0 %1583
      %1585 = vrot.lane.b32.xlu0 %v1521, 8
      %v1586 = vpop.permute.xlu0 %1585
      %1587 = vrot.lane.b32.xlu0 %v1522, 8
      %v1588 = vpop.permute.xlu0 %1587
      %1589 = vrot.lane.b32.xlu0 %v1523, 8
      %v1590 = vpop.permute.xlu0 %1589
      %1591 = vrot.lane.b32.xlu0 %v1524, 8
      %v1592 = vpop.permute.xlu0 %1591
      %1593 = vrot.lane.b32.xlu0 %v1525, 8
      %v1594 = vpop.permute.xlu0 %1593
      %1595 = vrot.lane.b32.xlu0 %v1526, 8
      %v1596 = vpop.permute.xlu0 %1595
      %1597 = vrot.lane.b32.xlu0 %v1527, 8
      %v1598 = vpop.permute.xlu0 %1597
      %1599 = vrot.lane.b32.xlu0 %v1528, 8
      %v1600 = vpop.permute.xlu0 %1599
      %1601 = vrot.lane.b32.xlu0 %v1529, 8
      %v1602 = vpop.permute.xlu0 %1601
      %1603 = vrot.lane.b32.xlu0 %v1530, 8
      %v1604 = vpop.permute.xlu0 %1603
      %1605 = vrot.lane.b32.xlu0 %v1531, 8
      %v1606 = vpop.permute.xlu0 %1605
      %1607 = vrot.lane.b32.xlu0 %v1532, 8
      %v1608 = vpop.permute.xlu0 %1607
      %1609 = vrot.lane.b32.xlu0 %v1533, 8
      %v1610 = vpop.permute.xlu0 %1609
      %1611 = vrot.lane.b32.xlu0 %v1534, 8
      %v1612 = vpop.permute.xlu0 %1611
      %1613 = vrot.lane.b32.xlu0 %v1535, 8
      %v1614 = vpop.permute.xlu0 %1613
      %1615 = vrot.lane.b32.xlu0 %v1536, 8
      %v1616 = vpop.permute.xlu0 %1615
      %1617 = vrot.lane.b32.xlu0 %v1537, 8
      %v1618 = vpop.permute.xlu0 %1617
      %1619 = vrot.lane.b32.xlu0 %v1538, 8
      %v1620 = vpop.permute.xlu0 %1619
      %1621 = vrot.lane.b32.xlu0 %v1539, 8
      %v1622 = vpop.permute.xlu0 %1621
      %1623 = vrot.lane.b32.xlu0 %v1540, 8
      %v1624 = vpop.permute.xlu0 %1623
      %1653 = vst.msk [vmem:[#allocation2] sm:$0xff] %vm738, %v1570
      %1654 = vst.msk [vmem:[#allocation2 + $0x8] sm:$0xff] %vm738, %v1572
      %1655 = vst.msk [vmem:[#allocation2 + $0x10] sm:$0xff] %vm738, %v1574
      %1656 = vst.msk [vmem:[#allocation2 + $0x18] sm:$0xff] %vm738, %v1576
      %1657 = vst.msk [vmem:[#allocation2 + $0x20] sm:$0xff] %vm738, %v1578
      %1658 = vst.msk [vmem:[#allocation2 + $0x28] sm:$0xff] %vm738, %v1580
      %1659 = vst.msk [vmem:[#allocation2 + $0x30] sm:$0xff] %vm738, %v1582
      %1660 = vst.msk [vmem:[#allocation2 + $0x38] sm:$0xff] %vm738, %v1584
      %1661 = vst.msk [vmem:[#allocation2 + $0x40] sm:$0xff] %vm738, %v1586
      %1662 = vst.msk [vmem:[#allocation2 + $0x48] sm:$0xff] %vm738, %v1588
      %1663 = vst.msk [vmem:[#allocation2 + $0x50] sm:$0xff] %vm738, %v1590
      %1664 = vst.msk [vmem:[#allocation2 + $0x58] sm:$0xff] %vm738, %v1592
      %1665 = vst.msk [vmem:[#allocation2 + $0x60] sm:$0xff] %vm738, %v1594
      %1666 = vst.msk [vmem:[#allocation2 + $0x68] sm:$0xff] %vm738, %v1596
      %1667 = vst.msk [vmem:[#allocation2 + $0x70] sm:$0xff] %vm738, %v1598
      %1668 = vst.msk [vmem:[#allocation2 + $0x78] sm:$0xff] %vm738, %v1600
      %1669 = vst.msk [vmem:[#allocation2 + $0x80] sm:$0xff] %vm738, %v1602
      %1670 = vst.msk [vmem:[#allocation2 + $0x88] sm:$0xff] %vm738, %v1604
      %1671 = vst.msk [vmem:[#allocation2 + $0x90] sm:$0xff] %vm738, %v1606
      %1672 = vst.msk [vmem:[#allocation2 + $0x98] sm:$0xff] %vm738, %v1608
      %1673 = vst.msk [vmem:[#allocation2 + $0xa0] sm:$0xff] %vm738, %v1610
      %1674 = vst.msk [vmem:[#allocation2 + $0xa8] sm:$0xff] %vm738, %v1612
      %1675 = vst.msk [vmem:[#allocation2 + $0xb0] sm:$0xff] %vm738, %v1614
      %1676 = vst.msk [vmem:[#allocation2 + $0xb8] sm:$0xff] %vm738, %v1616
      %1677 = vst.msk [vmem:[#allocation2 + $0xc0] sm:$0xff] %vm738, %v1618
      %1678 = vst.msk [vmem:[#allocation2 + $0xc8] sm:$0xff] %vm738, %v1620
      %1679 = vst.msk [vmem:[#allocation2 + $0xd0] sm:$0xff] %vm738, %v1622
      %1680 = vst.msk [vmem:[#allocation2 + $0xd8] sm:$0xff] %vm738, %v1624
      %v1681 = vld [vmem:[%s305 + $0x2] sm:$0xff]
      %v1682 = vld [vmem:[%s305 + $0xa] sm:$0xff]
      %v1683 = vld [vmem:[%s305 + $0x1a] sm:$0xff]
      %v1684 = vld [vmem:[%s305 + $0x22] sm:$0xff]
      %1689 = vrot.lane.b32.xlu0 %v1681, 8
      %v1690 = vpop.permute.xlu0 %1689
      %1691 = vrot.lane.b32.xlu0 %v1682, 8
      %v1692 = vpop.permute.xlu0 %1691
      %1693 = vrot.lane.b32.xlu0 %v1683, 8
      %v1694 = vpop.permute.xlu0 %1693
      %1695 = vrot.lane.b32.xlu0 %v1684, 8
      %v1696 = vpop.permute.xlu0 %1695
      %1701 = vst.msk [vmem:[%s1316] sm:$0xff] %vm738, %v1690
      %1702 = vst.msk [vmem:[%s1316 + $0x8] sm:$0xff] %vm738, %v1692
      %1703 = vst.msk [vmem:[%s1316 + $0x10] sm:$0xff] %vm738, %v1694
      %1704 = vst.msk [vmem:[%s1316 + $0x18] sm:$0xff] %vm738, %v1696
      %v1705 = vld [vmem:[#allocation3] sm:$0xff]
      %v1706 = vld [vmem:[#allocation3 + $0x8] sm:$0xff]
      %v1707 = vld [vmem:[#allocation3 + $0x10] sm:$0xff]
      %v1708 = vld [vmem:[#allocation3 + $0x18] sm:$0xff]
      %v1709 = vld [vmem:[#allocation3 + $0x20] sm:$0xff]
      %v1710 = vld [vmem:[#allocation3 + $0x28] sm:$0xff]
      %v1711 = vld [vmem:[#allocation3 + $0x30] sm:$0xff]
      %v1712 = vld [vmem:[#allocation3 + $0x38] sm:$0xff]
      %v1713 = vld [vmem:[#allocation3 + $0x40] sm:$0xff]
      %v1714 = vld [vmem:[#allocation3 + $0x48] sm:$0xff]
      %v1715 = vld [vmem:[#allocation3 + $0x50] sm:$0xff]
      %v1716 = vld [vmem:[#allocation3 + $0x58] sm:$0xff]
      %v1717 = vld [vmem:[#allocation3 + $0x60] sm:$0xff]
      %v1718 = vld [vmem:[#allocation3 + $0x68] sm:$0xff]
      %v1719 = vld [vmem:[#allocation3 + $0x70] sm:$0xff]
      %v1720 = vld [vmem:[#allocation3 + $0x78] sm:$0xff]
      %v1721 = vld [vmem:[#allocation3 + $0x80] sm:$0xff]
      %v1722 = vld [vmem:[#allocation3 + $0x88] sm:$0xff]
      %v1723 = vld [vmem:[#allocation3 + $0x90] sm:$0xff]
      %v1724 = vld [vmem:[#allocation3 + $0x98] sm:$0xff]
      %v1725 = vld [vmem:[#allocation3 + $0xa0] sm:$0xff]
      %v1726 = vld [vmem:[#allocation3 + $0xa8] sm:$0xff]
      %v1727 = vld [vmem:[#allocation3 + $0xb0] sm:$0xff]
      %v1728 = vld [vmem:[#allocation3 + $0xb8] sm:$0xff]
      %v1729 = vld [vmem:[#allocation3 + $0xc0] sm:$0xff]
      %v1730 = vld [vmem:[#allocation3 + $0xc8] sm:$0xff]
      %v1731 = vld [vmem:[#allocation3 + $0xd0] sm:$0xff]
      %v1732 = vld [vmem:[#allocation3 + $0xd8] sm:$0xff]
      %v1733 = vld [vmem:[#allocation3 + $0xe0] sm:$0xff]
      %v1734 = vld [vmem:[#allocation3 + $0xe8] sm:$0xff]
      %v1735 = vld [vmem:[#allocation3 + $0xf0] sm:$0xff]
      %v1736 = vld [vmem:[#allocation3 + $0xf8] sm:$0xff]
      %s1737 = scalar_lea.vmem %s2, 16
      %v1738 = vld [vmem:[%s1737] sm:$0xff]
      %v1739 = vld [vmem:[%s1737 + $0x8] sm:$0xf]
      %vm1740 = vcmask 97280
      %v1742 = vsel %vm1740, %v1705, 0
      %v1745 = vsel %vm1740, %v1706, 0
      %v1748 = vsel %vm1740, %v1707, 0
      %v1751 = vsel %vm1740, %v1708, 0
      %v1754 = vsel %vm1740, %v1709, 0
      %v1757 = vsel %vm1740, %v1710, 0
      %v1760 = vsel %vm1740, %v1711, 0
      %v1763 = vsel %vm1740, %v1712, 0
      %v1766 = vsel %vm1740, %v1713, 0
      %v1769 = vsel %vm1740, %v1714, 0
      %v1772 = vsel %vm1740, %v1715, 0
      %v1775 = vsel %vm1740, %v1716, 0
      %v1778 = vsel %vm1740, %v1717, 0
      %v1781 = vsel %vm1740, %v1718, 0
      %v1784 = vsel %vm1740, %v1719, 0
      %v1787 = vsel %vm1740, %v1720, 0
      %v1790 = vsel %vm1740, %v1721, 0
      %v1793 = vsel %vm1740, %v1722, 0
      %v1796 = vsel %vm1740, %v1723, 0
      %v1799 = vsel %vm1740, %v1724, 0
      %v1802 = vsel %vm1740, %v1725, 0
      %v1805 = vsel %vm1740, %v1726, 0
      %v1808 = vsel %vm1740, %v1727, 0
      %v1811 = vsel %vm1740, %v1728, 0
      %v1814 = vsel %vm1740, %v1729, 0
      %v1817 = vsel %vm1740, %v1730, 0
      %v1820 = vsel %vm1740, %v1731, 0
      %v1823 = vsel %vm1740, %v1732, 0
      %v1826 = vsel %vm1740, %v1733, 0
      %v1829 = vsel %vm1740, %v1734, 0
      %v1832 = vsel %vm1740, %v1735, 0
      %v1835 = vsel %vm1740, %v1736, 0
      %vm1837 = vcmask 1043456
      %v1839 = vsel %vm1837, %v1739, 0
      %1841 = vmatprep.subr.mxu0 0.0
      %1842 = vmatpush1.msra.mxu0 %v1738
      %1843 = vmatprep.subr.mxu0 0.0
      %1844 = vmatpush1.msra.mxu0 %v1839
      %1845 = vmatprep.subr.mxu0 0.0
      %1846 = vmatpush1.msra.mxu0 0.0
      %1847 = vmatprep.subr.mxu0 0.0
      %1848 = vmatpush1.msra.mxu0 0.0
      %1849 = vmatprep.subr.mxu0 0.0
      %1850 = vmatpush1.msra.mxu0 0.0
      %1851 = vmatprep.subr.mxu0 0.0
      %1852 = vmatpush1.msra.mxu0 0.0
      %1853 = vmatprep.subr.mxu0 0.0
      %1854 = vmatpush1.msra.mxu0 0.0
      %1855 = vmatprep.subr.mxu0 0.0
      %1856 = vmatpush1.msra.mxu0 0.0
      %1857 = vmatprep.subr.mxu0 0.0
      %1858 = vmatpush1.msra.mxu0 0.0
      %1859 = vmatprep.subr.mxu0 0.0
      %1860 = vmatpush1.msra.mxu0 0.0
      %1861 = vmatprep.subr.mxu0 0.0
      %1862 = vmatpush1.msra.mxu0 0.0
      %1863 = vmatprep.subr.mxu0 0.0
      %1864 = vmatpush1.msra.mxu0 0.0
      %1865 = vmatprep.subr.mxu0 0.0
      %1866 = vmatpush1.msra.mxu0 0.0
      %1867 = vmatprep.subr.mxu0 0.0
      %1868 = vmatpush1.msra.mxu0 0.0
      %1869 = vmatprep.subr.mxu0 0.0
      %1870 = vmatpush1.msra.mxu0 0.0
      %1871 = vmatprep.subr.mxu0 0.0
      %1872 = vmatpush1.msra.mxu0 0.0
      %1873 = vmatprep.subr.mxu0 0.0
      %1874 = vmatpush1.msra.mxu0 0.0
      %1875 = vmatprep.subr.mxu0 0.0
      %1876 = vmatpush1.msra.mxu0 0.0
      %1877 = vmatprep.subr.mxu0 0.0
      %1878 = vmatpush1.msra.mxu0 0.0
      %1879 = vmatprep.subr.mxu0 0.0
      %1880 = vmatpush1.msra.mxu0 0.0
      %1881 = vmatprep.subr.mxu0 0.0
      %1882 = vmatpush1.msra.mxu0 0.0
      %1883 = vmatprep.subr.mxu0 0.0
      %1884 = vmatpush1.msra.mxu0 0.0
      %1885 = vmatprep.subr.mxu0 0.0
      %1886 = vmatpush1.msra.mxu0 0.0
      %1887 = vmatprep.subr.mxu0 0.0
      %1888 = vmatpush1.msra.mxu0 0.0
      %1889 = vmatprep.subr.mxu0 0.0
      %1890 = vmatpush1.msra.mxu0 0.0
      %1891 = vmatprep.subr.mxu0 0.0
      %1892 = vmatpush1.msra.mxu0 0.0
      %1893 = vmatprep.subr.mxu0 0.0
      %1894 = vmatpush1.msra.mxu0 0.0
      %1895 = vmatprep.subr.mxu0 0.0
      %1896 = vmatpush1.msra.mxu0 0.0
      %1897 = vmatprep.subr.mxu0 0.0
      %1898 = vmatpush1.msra.mxu0 0.0
      %1899 = vmatprep.subr.mxu0 0.0
      %1900 = vmatpush1.msra.mxu0 0.0
      %1901 = vmatprep.subr.mxu0 0.0
      %1902 = vmatpush1.msra.mxu0 0.0
      %1903 = vmatprep.subr.mxu0 0.0
      %1904 = vmatpush1.msra.mxu0 0.0
      %1905 = vmatprep.mubr.f32.mxu0 0.0
      %1906 = vmatmul.mubr.f32.gmra.mrb[0].mxu0 %v1742
      %v1907 = vpop.f32.mrb[0].mxu0
      %v1908 = vadd.f32 0.0, %v1907
      %v1909 = vpop.f32.mrb[0].mxu0
      %1910 = vmatprep.mubr.f32.mxu0 0.0
      %1911 = vmatmul.mubr.f32.gmra.mrb[0].mxu0 %v1745
      %v1912 = vpop.f32.mrb[0].mxu0
      %v1913 = vadd.f32 0.0, %v1912
      %v1914 = vpop.f32.mrb[0].mxu0
      %1915 = vmatprep.mubr.f32.mxu0 0.0
      %1916 = vmatmul.mubr.f32.gmra.mrb[0].mxu0 %v1748
      %v1917 = vpop.f32.mrb[0].mxu0
      %v1918 = vadd.f32 0.0, %v1917
      %v1919 = vpop.f32.mrb[0].mxu0
      %1920 = vmatprep.mubr.f32.mxu0 0.0
      %1921 = vmatmul.mubr.f32.gmra.mrb[0].mxu0 %v1751
      %v1922 = vpop.f32.mrb[0].mxu0
      %v1923 = vadd.f32 0.0, %v1922
      %v1924 = vpop.f32.mrb[0].mxu0
      %1925 = vmatprep.mubr.f32.mxu0 0.0
      %1926 = vmatmul.mubr.f32.gmra.mrb[0].mxu0 %v1754
      %v1927 = vpop.f32.mrb[0].mxu0
      %v1928 = vadd.f32 0.0, %v1927
      %v1929 = vpop.f32.mrb[0].mxu0
      %1930 = vmatprep.mubr.f32.mxu0 0.0
      %1931 = vmatmul.mubr.f32.gmra.mrb[0].mxu0 %v1757
      %v1932 = vpop.f32.mrb[0].mxu0
      %v1933 = vadd.f32 0.0, %v1932
      %v1934 = vpop.f32.mrb[0].mxu0
      %1935 = vmatprep.mubr.f32.mxu0 0.0
      %1936 = vmatmul.mubr.f32.gmra.mrb[0].mxu0 %v1760
      %v1937 = vpop.f32.mrb[0].mxu0
      %v1938 = vadd.f32 0.0, %v1937
      %v1939 = vpop.f32.mrb[0].mxu0
      %1940 = vmatprep.mubr.f32.mxu0 0.0
      %1941 = vmatmul.mubr.f32.gmra.mrb[0].mxu0 %v1763
      %v1942 = vpop.f32.mrb[0].mxu0
      %v1943 = vadd.f32 0.0, %v1942
      %v1944 = vpop.f32.mrb[0].mxu0
      %1945 = vmatprep.mubr.f32.mxu0 0.0
      %1946 = vmatmul.mubr.f32.gmra.mrb[0].mxu0 %v1766
      %v1947 = vpop.f32.mrb[0].mxu0
      %v1948 = vadd.f32 0.0, %v1947
      %v1949 = vpop.f32.mrb[0].mxu0
      %1950 = vmatprep.mubr.f32.mxu0 0.0
      %1951 = vmatmul.mubr.f32.gmra.mrb[0].mxu0 %v1769
      %v1952 = vpop.f32.mrb[0].mxu0
      %v1953 = vadd.f32 0.0, %v1952
      %v1954 = vpop.f32.mrb[0].mxu0
      %1955 = vmatprep.mubr.f32.mxu0 0.0
      %1956 = vmatmul.mubr.f32.gmra.mrb[0].mxu0 %v1772
      %v1957 = vpop.f32.mrb[0].mxu0
      %v1958 = vadd.f32 0.0, %v1957
      %v1959 = vpop.f32.mrb[0].mxu0
      %1960 = vmatprep.mubr.f32.mxu0 0.0
      %1961 = vmatmul.mubr.f32.gmra.mrb[0].mxu0 %v1775
      %v1962 = vpop.f32.mrb[0].mxu0
      %v1963 = vadd.f32 0.0, %v1962
      %v1964 = vpop.f32.mrb[0].mxu0
      %1965 = vmatprep.mubr.f32.mxu0 0.0
      %1966 = vmatmul.mubr.f32.gmra.mrb[0].mxu0 %v1778
      %v1967 = vpop.f32.mrb[0].mxu0
      %v1968 = vadd.f32 0.0, %v1967
      %v1969 = vpop.f32.mrb[0].mxu0
      %1970 = vmatprep.mubr.f32.mxu0 0.0
      %1971 = vmatmul.mubr.f32.gmra.mrb[0].mxu0 %v1781
      %v1972 = vpop.f32.mrb[0].mxu0
      %v1973 = vadd.f32 0.0, %v1972
      %v1974 = vpop.f32.mrb[0].mxu0
      %1975 = vmatprep.mubr.f32.mxu0 0.0
      %1976 = vmatmul.mubr.f32.gmra.mrb[0].mxu0 %v1784
      %v1977 = vpop.f32.mrb[0].mxu0
      %v1978 = vadd.f32 0.0, %v1977
      %v1979 = vpop.f32.mrb[0].mxu0
      %1980 = vmatprep.mubr.f32.mxu0 0.0
      %1981 = vmatmul.mubr.f32.gmra.mrb[0].mxu0 %v1787
      %v1982 = vpop.f32.mrb[0].mxu0
      %v1983 = vadd.f32 0.0, %v1982
      %v1984 = vpop.f32.mrb[0].mxu0
      %1985 = vmatprep.mubr.f32.mxu0 0.0
      %1986 = vmatmul.mubr.f32.gmra.mrb[0].mxu0 %v1790
      %v1987 = vpop.f32.mrb[0].mxu0
      %v1988 = vadd.f32 0.0, %v1987
      %v1989 = vpop.f32.mrb[0].mxu0
      %1990 = vmatprep.mubr.f32.mxu0 0.0
      %1991 = vmatmul.mubr.f32.gmra.mrb[0].mxu0 %v1793
      %v1992 = vpop.f32.mrb[0].mxu0
      %v1993 = vadd.f32 0.0, %v1992
      %v1994 = vpop.f32.mrb[0].mxu0
      %1995 = vmatprep.mubr.f32.mxu0 0.0
      %1996 = vmatmul.mubr.f32.gmra.mrb[0].mxu0 %v1796
      %v1997 = vpop.f32.mrb[0].mxu0
      %v1998 = vadd.f32 0.0, %v1997
      %v1999 = vpop.f32.mrb[0].mxu0
      %2000 = vmatprep.mubr.f32.mxu0 0.0
      %2001 = vmatmul.mubr.f32.gmra.mrb[0].mxu0 %v1799
      %v2002 = vpop.f32.mrb[0].mxu0
      %v2003 = vadd.f32 0.0, %v2002
      %v2004 = vpop.f32.mrb[0].mxu0
      %2005 = vmatprep.mubr.f32.mxu0 0.0
      %2006 = vmatmul.mubr.f32.gmra.mrb[0].mxu0 %v1802
      %v2007 = vpop.f32.mrb[0].mxu0
      %v2008 = vadd.f32 0.0, %v2007
      %v2009 = vpop.f32.mrb[0].mxu0
      %2010 = vmatprep.mubr.f32.mxu0 0.0
      %2011 = vmatmul.mubr.f32.gmra.mrb[0].mxu0 %v1805
      %v2012 = vpop.f32.mrb[0].mxu0
      %v2013 = vadd.f32 0.0, %v2012
      %v2014 = vpop.f32.mrb[0].mxu0
      %2015 = vmatprep.mubr.f32.mxu0 0.0
      %2016 = vmatmul.mubr.f32.gmra.mrb[0].mxu0 %v1808
      %v2017 = vpop.f32.mrb[0].mxu0
      %v2018 = vadd.f32 0.0, %v2017
      %v2019 = vpop.f32.mrb[0].mxu0
      %2020 = vmatprep.mubr.f32.mxu0 0.0
      %2021 = vmatmul.mubr.f32.gmra.mrb[0].mxu0 %v1811
      %v2022 = vpop.f32.mrb[0].mxu0
      %v2023 = vadd.f32 0.0, %v2022
      %v2024 = vpop.f32.mrb[0].mxu0
      %2025 = vmatprep.mubr.f32.mxu0 0.0
      %2026 = vmatmul.mubr.f32.gmra.mrb[0].mxu0 %v1814
      %v2027 = vpop.f32.mrb[0].mxu0
      %v2028 = vadd.f32 0.0, %v2027
      %v2029 = vpop.f32.mrb[0].mxu0
      %2030 = vmatprep.mubr.f32.mxu0 0.0
      %2031 = vmatmul.mubr.f32.gmra.mrb[0].mxu0 %v1817
      %v2032 = vpop.f32.mrb[0].mxu0
      %v2033 = vadd.f32 0.0, %v2032
      %v2034 = vpop.f32.mrb[0].mxu0
      %2035 = vmatprep.mubr.f32.mxu0 0.0
      %2036 = vmatmul.mubr.f32.gmra.mrb[0].mxu0 %v1820
      %v2037 = vpop.f32.mrb[0].mxu0
      %v2038 = vadd.f32 0.0, %v2037
      %v2039 = vpop.f32.mrb[0].mxu0
      %2040 = vmatprep.mubr.f32.mxu0 0.0
      %2041 = vmatmul.mubr.f32.gmra.mrb[0].mxu0 %v1823
      %v2042 = vpop.f32.mrb[0].mxu0
      %v2043 = vadd.f32 0.0, %v2042
      %v2044 = vpop.f32.mrb[0].mxu0
      %2045 = vmatprep.mubr.f32.mxu0 0.0
      %2046 = vmatmul.mubr.f32.gmra.mrb[0].mxu0 %v1826
      %v2047 = vpop.f32.mrb[0].mxu0
      %v2048 = vadd.f32 0.0, %v2047
      %v2049 = vpop.f32.mrb[0].mxu0
      %2050 = vmatprep.mubr.f32.mxu0 0.0
      %2051 = vmatmul.mubr.f32.gmra.mrb[0].mxu0 %v1829
      %v2052 = vpop.f32.mrb[0].mxu0
      %v2053 = vadd.f32 0.0, %v2052
      %v2054 = vpop.f32.mrb[0].mxu0
      %2055 = vmatprep.mubr.f32.mxu0 0.0
      %2056 = vmatmul.mubr.f32.gmra.mrb[0].mxu0 %v1832
      %v2057 = vpop.f32.mrb[0].mxu0
      %v2058 = vadd.f32 0.0, %v2057
      %v2059 = vpop.f32.mrb[0].mxu0
      %2060 = vmatprep.mubr.f32.mxu0 0.0
      %2061 = vmatmul.mubr.f32.gmra.mrb[0].mxu0 %v1835
      %v2062 = vpop.f32.mrb[0].mxu0
      %v2063 = vadd.f32 0.0, %v2062
      %v2064 = vpop.f32.mrb[0].mxu0
      %2065 = vdwg.mxu0
      %v2067 = vsel %vm1740, %v1221, 0
      %v2070 = vsel %vm1740, %v1222, 0
      %v2073 = vsel %vm1740, %v1223, 0
      %v2076 = vsel %vm1740, %v1224, 0
      %v2079 = vsel %vm1740, %v1225, 0
      %v2082 = vsel %vm1740, %v1226, 0
      %v2085 = vsel %vm1740, %v1227, 0
      %v2088 = vsel %vm1740, %v1228, 0
      %v2091 = vsel %vm1740, %v1229, 0
      %v2094 = vsel %vm1740, %v1230, 0
      %v2097 = vsel %vm1740, %v1231, 0
      %v2100 = vsel %vm1740, %v1232, 0
      %v2103 = vsel %vm1740, %v1233, 0
      %v2106 = vsel %vm1740, %v1234, 0
      %v2109 = vsel %vm1740, %v1235, 0
      %v2112 = vsel %vm1740, %v1236, 0
      %v2115 = vsel %vm1740, %v1237, 0
      %v2118 = vsel %vm1740, %v1238, 0
      %v2121 = vsel %vm1740, %v1239, 0
      %v2124 = vsel %vm1740, %v1240, 0
      %v2127 = vsel %vm1740, %v1241, 0
      %v2130 = vsel %vm1740, %v1242, 0
      %v2133 = vsel %vm1740, %v1243, 0
      %v2136 = vsel %vm1740, %v1244, 0
      %v2139 = vsel %vm1740, %v1245, 0
      %v2142 = vsel %vm1740, %v1246, 0
      %v2145 = vsel %vm1740, %v1247, 0
      %v2148 = vsel %vm1740, %v1248, 0
      %v2151 = vsel %vm1740, %v1249, 0
      %v2154 = vsel %vm1740, %v1250, 0
      %v2157 = vsel %vm1740, %v1251, 0
      %v2160 = vsel %vm1740, %v1252, 0
      %v2163 = vsel %vm1837, %v1254, 0
      %2165 = vmatprep.subr.mxu0 0.0
      %2166 = vmatpush1.msra.mxu0 %v1253
      %2167 = vmatprep.subr.mxu0 0.0
      %2168 = vmatpush1.msra.mxu0 %v2163
      %2169 = vmatprep.subr.mxu0 0.0
      %2170 = vmatpush1.msra.mxu0 0.0
      %2171 = vmatprep.subr.mxu0 0.0
      %2172 = vmatpush1.msra.mxu0 0.0
      %2173 = vmatprep.subr.mxu0 0.0
      %2174 = vmatpush1.msra.mxu0 0.0
      %2175 = vmatprep.subr.mxu0 0.0
      %2176 = vmatpush1.msra.mxu0 0.0
      %2177 = vmatprep.subr.mxu0 0.0
      %2178 = vmatpush1.msra.mxu0 0.0
      %2179 = vmatprep.subr.mxu0 0.0
      %2180 = vmatpush1.msra.mxu0 0.0
      %2181 = vmatprep.subr.mxu0 0.0
      %2182 = vmatpush1.msra.mxu0 0.0
      %2183 = vmatprep.subr.mxu0 0.0
      %2184 = vmatpush1.msra.mxu0 0.0
      %2185 = vmatprep.subr.mxu0 0.0
      %2186 = vmatpush1.msra.mxu0 0.0
      %2187 = vmatprep.subr.mxu0 0.0
      %2188 = vmatpush1.msra.mxu0 0.0
      %2189 = vmatprep.subr.mxu0 0.0
      %2190 = vmatpush1.msra.mxu0 0.0
      %2191 = vmatprep.subr.mxu0 0.0
      %2192 = vmatpush1.msra.mxu0 0.0
      %2193 = vmatprep.subr.mxu0 0.0
      %2194 = vmatpush1.msra.mxu0 0.0
      %2195 = vmatprep.subr.mxu0 0.0
      %2196 = vmatpush1.msra.mxu0 0.0
      %2197 = vmatprep.subr.mxu0 0.0
      %2198 = vmatpush1.msra.mxu0 0.0
      %2199 = vmatprep.subr.mxu0 0.0
      %2200 = vmatpush1.msra.mxu0 0.0
      %2201 = vmatprep.subr.mxu0 0.0
      %2202 = vmatpush1.msra.mxu0 0.0
      %2203 = vmatprep.subr.mxu0 0.0
      %2204 = vmatpush1.msra.mxu0 0.0
      %2205 = vmatprep.subr.mxu0 0.0
      %2206 = vmatpush1.msra.mxu0 0.0
      %2207 = vmatprep.subr.mxu0 0.0
      %2208 = vmatpush1.msra.mxu0 0.0
      %2209 = vmatprep.subr.mxu0 0.0
      %2210 = vmatpush1.msra.mxu0 0.0
      %2211 = vmatprep.subr.mxu0 0.0
      %2212 = vmatpush1.msra.mxu0 0.0
      %2213 = vmatprep.subr.mxu0 0.0
      %2214 = vmatpush1.msra.mxu0 0.0
      %2215 = vmatprep.subr.mxu0 0.0
      %2216 = vmatpush1.msra.mxu0 0.0
      %2217 = vmatprep.subr.mxu0 0.0
      %2218 = vmatpush1.msra.mxu0 0.0
      %2219 = vmatprep.subr.mxu0 0.0
      %2220 = vmatpush1.msra.mxu0 0.0
      %2221 = vmatprep.subr.mxu0 0.0
      %2222 = vmatpush1.msra.mxu0 0.0
      %2223 = vmatprep.subr.mxu0 0.0
      %2224 = vmatpush1.msra.mxu0 0.0
      %2225 = vmatprep.subr.mxu0 0.0
      %2226 = vmatpush1.msra.mxu0 0.0
      %2227 = vmatprep.subr.mxu0 0.0
      %2228 = vmatpush1.msra.mxu0 0.0
      %2229 = vmatprep.mubr.f32.mxu0 0.0
      %2230 = vmatmul.mubr.f32.gmra.mrb[0].mxu0 %v2067
      %v2231 = vpop.f32.mrb[0].mxu0
      %v2232 = vadd.f32 %v1908, %v2231
      %v2233 = vpop.f32.mrb[0].mxu0
      %2234 = vmatprep.mubr.f32.mxu0 0.0
      %2235 = vmatmul.mubr.f32.gmra.mrb[0].mxu0 %v2070
      %v2236 = vpop.f32.mrb[0].mxu0
      %v2237 = vadd.f32 %v1913, %v2236
      %v2238 = vpop.f32.mrb[0].mxu0
      %2239 = vmatprep.mubr.f32.mxu0 0.0
      %2240 = vmatmul.mubr.f32.gmra.mrb[0].mxu0 %v2073
      %v2241 = vpop.f32.mrb[0].mxu0
      %v2242 = vadd.f32 %v1918, %v2241
      %v2243 = vpop.f32.mrb[0].mxu0
      %2244 = vmatprep.mubr.f32.mxu0 0.0
      %2245 = vmatmul.mubr.f32.gmra.mrb[0].mxu0 %v2076
      %v2246 = vpop.f32.mrb[0].mxu0
      %v2247 = vadd.f32 %v1923, %v2246
      %v2248 = vpop.f32.mrb[0].mxu0
      %2249 = vmatprep.mubr.f32.mxu0 0.0
      %2250 = vmatmul.mubr.f32.gmra.mrb[0].mxu0 %v2079
      %v2251 = vpop.f32.mrb[0].mxu0
      %v2252 = vadd.f32 %v1928, %v2251
      %v2253 = vpop.f32.mrb[0].mxu0
      %2254 = vmatprep.mubr.f32.mxu0 0.0
      %2255 = vmatmul.mubr.f32.gmra.mrb[0].mxu0 %v2082
      %v2256 = vpop.f32.mrb[0].mxu0
      %v2257 = vadd.f32 %v1933, %v2256
      %v2258 = vpop.f32.mrb[0].mxu0
      %2259 = vmatprep.mubr.f32.mxu0 0.0
      %2260 = vmatmul.mubr.f32.gmra.mrb[0].mxu0 %v2085
      %v2261 = vpop.f32.mrb[0].mxu0
      %v2262 = vadd.f32 %v1938, %v2261
      %v2263 = vpop.f32.mrb[0].mxu0
      %2264 = vmatprep.mubr.f32.mxu0 0.0
      %2265 = vmatmul.mubr.f32.gmra.mrb[0].mxu0 %v2088
      %v2266 = vpop.f32.mrb[0].mxu0
      %v2267 = vadd.f32 %v1943, %v2266
      %v2268 = vpop.f32.mrb[0].mxu0
      %2269 = vmatprep.mubr.f32.mxu0 0.0
      %2270 = vmatmul.mubr.f32.gmra.mrb[0].mxu0 %v2091
      %v2271 = vpop.f32.mrb[0].mxu0
      %v2272 = vadd.f32 %v1948, %v2271
      %v2273 = vpop.f32.mrb[0].mxu0
      %2274 = vmatprep.mubr.f32.mxu0 0.0
      %2275 = vmatmul.mubr.f32.gmra.mrb[0].mxu0 %v2094
      %v2276 = vpop.f32.mrb[0].mxu0
      %v2277 = vadd.f32 %v1953, %v2276
      %v2278 = vpop.f32.mrb[0].mxu0
      %2279 = vmatprep.mubr.f32.mxu0 0.0
      %2280 = vmatmul.mubr.f32.gmra.mrb[0].mxu0 %v2097
      %v2281 = vpop.f32.mrb[0].mxu0
      %v2282 = vadd.f32 %v1958, %v2281
      %v2283 = vpop.f32.mrb[0].mxu0
      %2284 = vmatprep.mubr.f32.mxu0 0.0
      %2285 = vmatmul.mubr.f32.gmra.mrb[0].mxu0 %v2100
      %v2286 = vpop.f32.mrb[0].mxu0
      %v2287 = vadd.f32 %v1963, %v2286
      %v2288 = vpop.f32.mrb[0].mxu0
      %2289 = vmatprep.mubr.f32.mxu0 0.0
      %2290 = vmatmul.mubr.f32.gmra.mrb[0].mxu0 %v2103
      %v2291 = vpop.f32.mrb[0].mxu0
      %v2292 = vadd.f32 %v1968, %v2291
      %v2293 = vpop.f32.mrb[0].mxu0
      %2294 = vmatprep.mubr.f32.mxu0 0.0
      %2295 = vmatmul.mubr.f32.gmra.mrb[0].mxu0 %v2106
      %v2296 = vpop.f32.mrb[0].mxu0
      %v2297 = vadd.f32 %v1973, %v2296
      %v2298 = vpop.f32.mrb[0].mxu0
      %2299 = vmatprep.mubr.f32.mxu0 0.0
      %2300 = vmatmul.mubr.f32.gmra.mrb[0].mxu0 %v2109
      %v2301 = vpop.f32.mrb[0].mxu0
      %v2302 = vadd.f32 %v1978, %v2301
      %v2303 = vpop.f32.mrb[0].mxu0
      %2304 = vmatprep.mubr.f32.mxu0 0.0
      %2305 = vmatmul.mubr.f32.gmra.mrb[0].mxu0 %v2112
      %v2306 = vpop.f32.mrb[0].mxu0
      %v2307 = vadd.f32 %v1983, %v2306
      %v2308 = vpop.f32.mrb[0].mxu0
      %2309 = vmatprep.mubr.f32.mxu0 0.0
      %2310 = vmatmul.mubr.f32.gmra.mrb[0].mxu0 %v2115
      %v2311 = vpop.f32.mrb[0].mxu0
      %v2312 = vadd.f32 %v1988, %v2311
      %v2313 = vpop.f32.mrb[0].mxu0
      %2314 = vmatprep.mubr.f32.mxu0 0.0
      %2315 = vmatmul.mubr.f32.gmra.mrb[0].mxu0 %v2118
      %v2316 = vpop.f32.mrb[0].mxu0
      %v2317 = vadd.f32 %v1993, %v2316
      %v2318 = vpop.f32.mrb[0].mxu0
      %2319 = vmatprep.mubr.f32.mxu0 0.0
      %2320 = vmatmul.mubr.f32.gmra.mrb[0].mxu0 %v2121
      %v2321 = vpop.f32.mrb[0].mxu0
      %v2322 = vadd.f32 %v1998, %v2321
      %v2323 = vpop.f32.mrb[0].mxu0
      %2324 = vmatprep.mubr.f32.mxu0 0.0
      %2325 = vmatmul.mubr.f32.gmra.mrb[0].mxu0 %v2124
      %v2326 = vpop.f32.mrb[0].mxu0
      %v2327 = vadd.f32 %v2003, %v2326
      %v2328 = vpop.f32.mrb[0].mxu0
      %2329 = vmatprep.mubr.f32.mxu0 0.0
      %2330 = vmatmul.mubr.f32.gmra.mrb[0].mxu0 %v2127
      %v2331 = vpop.f32.mrb[0].mxu0
      %v2332 = vadd.f32 %v2008, %v2331
      %v2333 = vpop.f32.mrb[0].mxu0
      %2334 = vmatprep.mubr.f32.mxu0 0.0
      %2335 = vmatmul.mubr.f32.gmra.mrb[0].mxu0 %v2130
      %v2336 = vpop.f32.mrb[0].mxu0
      %v2337 = vadd.f32 %v2013, %v2336
      %v2338 = vpop.f32.mrb[0].mxu0
      %2339 = vmatprep.mubr.f32.mxu0 0.0
      %2340 = vmatmul.mubr.f32.gmra.mrb[0].mxu0 %v2133
      %v2341 = vpop.f32.mrb[0].mxu0
      %v2342 = vadd.f32 %v2018, %v2341
      %v2343 = vpop.f32.mrb[0].mxu0
      %2344 = vmatprep.mubr.f32.mxu0 0.0
      %2345 = vmatmul.mubr.f32.gmra.mrb[0].mxu0 %v2136
      %v2346 = vpop.f32.mrb[0].mxu0
      %v2347 = vadd.f32 %v2023, %v2346
      %v2348 = vpop.f32.mrb[0].mxu0
      %2349 = vmatprep.mubr.f32.mxu0 0.0
      %2350 = vmatmul.mubr.f32.gmra.mrb[0].mxu0 %v2139
      %v2351 = vpop.f32.mrb[0].mxu0
      %v2352 = vadd.f32 %v2028, %v2351
      %v2353 = vpop.f32.mrb[0].mxu0
      %2354 = vmatprep.mubr.f32.mxu0 0.0
      %2355 = vmatmul.mubr.f32.gmra.mrb[0].mxu0 %v2142
      %v2356 = vpop.f32.mrb[0].mxu0
      %v2357 = vadd.f32 %v2033, %v2356
      %v2358 = vpop.f32.mrb[0].mxu0
      %2359 = vmatprep.mubr.f32.mxu0 0.0
      %2360 = vmatmul.mubr.f32.gmra.mrb[0].mxu0 %v2145
      %v2361 = vpop.f32.mrb[0].mxu0
      %v2362 = vadd.f32 %v2038, %v2361
      %v2363 = vpop.f32.mrb[0].mxu0
      %2364 = vmatprep.mubr.f32.mxu0 0.0
      %2365 = vmatmul.mubr.f32.gmra.mrb[0].mxu0 %v2148
      %v2366 = vpop.f32.mrb[0].mxu0
      %v2367 = vadd.f32 %v2043, %v2366
      %v2368 = vpop.f32.mrb[0].mxu0
      %2369 = vmatprep.mubr.f32.mxu0 0.0
      %2370 = vmatmul.mubr.f32.gmra.mrb[0].mxu0 %v2151
      %v2371 = vpop.f32.mrb[0].mxu0
      %v2372 = vadd.f32 %v2048, %v2371
      %v2373 = vpop.f32.mrb[0].mxu0
      %2374 = vmatprep.mubr.f32.mxu0 0.0
      %2375 = vmatmul.mubr.f32.gmra.mrb[0].mxu0 %v2154
      %v2376 = vpop.f32.mrb[0].mxu0
      %v2377 = vadd.f32 %v2053, %v2376
      %v2378 = vpop.f32.mrb[0].mxu0
      %2379 = vmatprep.mubr.f32.mxu0 0.0
      %2380 = vmatmul.mubr.f32.gmra.mrb[0].mxu0 %v2157
      %v2381 = vpop.f32.mrb[0].mxu0
      %v2382 = vadd.f32 %v2058, %v2381
      %v2383 = vpop.f32.mrb[0].mxu0
      %2384 = vmatprep.mubr.f32.mxu0 0.0
      %2385 = vmatmul.mubr.f32.gmra.mrb[0].mxu0 %v2160
      %v2386 = vpop.f32.mrb[0].mxu0
      %v2387 = vadd.f32 %v2063, %v2386
      %v2388 = vpop.f32.mrb[0].mxu0
      %2389 = vdwg.mxu0
      %v2390 = vld [vmem:[#allocation2] sm:$0xff]
      %v2391 = vld [vmem:[#allocation2 + $0x8] sm:$0xff]
      %v2392 = vld [vmem:[#allocation2 + $0x10] sm:$0xff]
      %v2393 = vld [vmem:[#allocation2 + $0x18] sm:$0xff]
      %v2394 = vld [vmem:[#allocation2 + $0x20] sm:$0xff]
      %v2395 = vld [vmem:[#allocation2 + $0x28] sm:$0xff]
      %v2396 = vld [vmem:[#allocation2 + $0x30] sm:$0xff]
      %v2397 = vld [vmem:[#allocation2 + $0x38] sm:$0xff]
      %v2398 = vld [vmem:[#allocation2 + $0x40] sm:$0xff]
      %v2399 = vld [vmem:[#allocation2 + $0x48] sm:$0xff]
      %v2400 = vld [vmem:[#allocation2 + $0x50] sm:$0xff]
      %v2401 = vld [vmem:[#allocation2 + $0x58] sm:$0xff]
      %v2402 = vld [vmem:[#allocation2 + $0x60] sm:$0xff]
      %v2403 = vld [vmem:[#allocation2 + $0x68] sm:$0xff]
      %v2404 = vld [vmem:[#allocation2 + $0x70] sm:$0xff]
      %v2405 = vld [vmem:[#allocation2 + $0x78] sm:$0xff]
      %v2406 = vld [vmem:[#allocation2 + $0x80] sm:$0xff]
      %v2407 = vld [vmem:[#allocation2 + $0x88] sm:$0xff]
      %v2408 = vld [vmem:[#allocation2 + $0x90] sm:$0xff]
      %v2409 = vld [vmem:[#allocation2 + $0x98] sm:$0xff]
      %v2410 = vld [vmem:[#allocation2 + $0xa0] sm:$0xff]
      %v2411 = vld [vmem:[#allocation2 + $0xa8] sm:$0xff]
      %v2412 = vld [vmem:[#allocation2 + $0xb0] sm:$0xff]
      %v2413 = vld [vmem:[#allocation2 + $0xb8] sm:$0xff]
      %v2414 = vld [vmem:[#allocation2 + $0xc0] sm:$0xff]
      %v2415 = vld [vmem:[#allocation2 + $0xc8] sm:$0xff]
      %v2416 = vld [vmem:[#allocation2 + $0xd0] sm:$0xff]
      %v2417 = vld [vmem:[#allocation2 + $0xd8] sm:$0xff]
      %v2418 = vld [vmem:[#allocation2 + $0xe0] sm:$0xff]
      %v2419 = vld [vmem:[#allocation2 + $0xe8] sm:$0xff]
      %v2420 = vld [vmem:[#allocation2 + $0xf0] sm:$0xff]
      %v2421 = vld [vmem:[#allocation2 + $0xf8] sm:$0xff]
      %s2422 = scalar_lea.vmem %s2, 32
      %v2423 = vld [vmem:[%s2422] sm:$0xff]
      %v2424 = vld [vmem:[%s2422 + $0x8] sm:$0xf]
      %v2426 = vsel %vm1740, %v2390, 0
      %v2429 = vsel %vm1740, %v2391, 0
      %v2432 = vsel %vm1740, %v2392, 0
      %v2435 = vsel %vm1740, %v2393, 0
      %v2438 = vsel %vm1740, %v2394, 0
      %v2441 = vsel %vm1740, %v2395, 0
      %v2444 = vsel %vm1740, %v2396, 0
      %v2447 = vsel %vm1740, %v2397, 0
      %v2450 = vsel %vm1740, %v2398, 0
      %v2453 = vsel %vm1740, %v2399, 0
      %v2456 = vsel %vm1740, %v2400, 0
      %v2459 = vsel %vm1740, %v2401, 0
      %v2462 = vsel %vm1740, %v2402, 0
      %v2465 = vsel %vm1740, %v2403, 0
      %v2468 = vsel %vm1740, %v2404, 0
      %v2471 = vsel %vm1740, %v2405, 0
      %v2474 = vsel %vm1740, %v2406, 0
      %v2477 = vsel %vm1740, %v2407, 0
      %v2480 = vsel %vm1740, %v2408, 0
      %v2483 = vsel %vm1740, %v2409, 0
      %v2486 = vsel %vm1740, %v2410, 0
      %v2489 = vsel %vm1740, %v2411, 0
      %v2492 = vsel %vm1740, %v2412, 0
      %v2495 = vsel %vm1740, %v2413, 0
      %v2498 = vsel %vm1740, %v2414, 0
      %v2501 = vsel %vm1740, %v2415, 0
      %v2504 = vsel %vm1740, %v2416, 0
      %v2507 = vsel %vm1740, %v2417, 0
      %v2510 = vsel %vm1740, %v2418, 0
      %v2513 = vsel %vm1740, %v2419, 0
      %v2516 = vsel %vm1740, %v2420, 0
      %v2519 = vsel %vm1740, %v2421, 0
      %v2522 = vsel %vm1837, %v2424, 0
      %2524 = vmatprep.subr.mxu0 0.0
      %2525 = vmatpush1.msra.mxu0 %v2423
      %2526 = vmatprep.subr.mxu0 0.0
      %2527 = vmatpush1.msra.mxu0 %v2522
      %2528 = vmatprep.subr.mxu0 0.0
      %2529 = vmatpush1.msra.mxu0 0.0
      %2530 = vmatprep.subr.mxu0 0.0
      %2531 = vmatpush1.msra.mxu0 0.0
      %2532 = vmatprep.subr.mxu0 0.0
      %2533 = vmatpush1.msra.mxu0 0.0
      %2534 = vmatprep.subr.mxu0 0.0
      %2535 = vmatpush1.msra.mxu0 0.0
      %2536 = vmatprep.subr.mxu0 0.0
      %2537 = vmatpush1.msra.mxu0 0.0
      %2538 = vmatprep.subr.mxu0 0.0
      %2539 = vmatpush1.msra.mxu0 0.0
      %2540 = vmatprep.subr.mxu0 0.0
      %2541 = vmatpush1.msra.mxu0 0.0
      %2542 = vmatprep.subr.mxu0 0.0
      %2543 = vmatpush1.msra.mxu0 0.0
      %2544 = vmatprep.subr.mxu0 0.0
      %2545 = vmatpush1.msra.mxu0 0.0
      %2546 = vmatprep.subr.mxu0 0.0
      %2547 = vmatpush1.msra.mxu0 0.0
      %2548 = vmatprep.subr.mxu0 0.0
      %2549 = vmatpush1.msra.mxu0 0.0
      %2550 = vmatprep.subr.mxu0 0.0
      %2551 = vmatpush1.msra.mxu0 0.0
      %2552 = vmatprep.subr.mxu0 0.0
      %2553 = vmatpush1.msra.mxu0 0.0
      %2554 = vmatprep.subr.mxu0 0.0
      %2555 = vmatpush1.msra.mxu0 0.0
      %2556 = vmatprep.subr.mxu0 0.0
      %2557 = vmatpush1.msra.mxu0 0.0
      %2558 = vmatprep.subr.mxu0 0.0
      %2559 = vmatpush1.msra.mxu0 0.0
      %2560 = vmatprep.subr.mxu0 0.0
      %2561 = vmatpush1.msra.mxu0 0.0
      %2562 = vmatprep.subr.mxu0 0.0
      %2563 = vmatpush1.msra.mxu0 0.0
      %2564 = vmatprep.subr.mxu0 0.0
      %2565 = vmatpush1.msra.mxu0 0.0
      %2566 = vmatprep.subr.mxu0 0.0
      %2567 = vmatpush1.msra.mxu0 0.0
      %2568 = vmatprep.subr.mxu0 0.0
      %2569 = vmatpush1.msra.mxu0 0.0
      %2570 = vmatprep.subr.mxu0 0.0
      %2571 = vmatpush1.msra.mxu0 0.0
      %2572 = vmatprep.subr.mxu0 0.0
      %2573 = vmatpush1.msra.mxu0 0.0
      %2574 = vmatprep.subr.mxu0 0.0
      %2575 = vmatpush1.msra.mxu0 0.0
      %2576 = vmatprep.subr.mxu0 0.0
      %2577 = vmatpush1.msra.mxu0 0.0
      %2578 = vmatprep.subr.mxu0 0.0
      %2579 = vmatpush1.msra.mxu0 0.0
      %2580 = vmatprep.subr.mxu0 0.0
      %2581 = vmatpush1.msra.mxu0 0.0
      %2582 = vmatprep.subr.mxu0 0.0
      %2583 = vmatpush1.msra.mxu0 0.0
      %2584 = vmatprep.subr.mxu0 0.0
      %2585 = vmatpush1.msra.mxu0 0.0
      %2586 = vmatprep.subr.mxu0 0.0
      %2587 = vmatpush1.msra.mxu0 0.0
      %2588 = vmatprep.mubr.f32.mxu0 0.0
      %2589 = vmatmul.mubr.f32.gmra.mrb[0].mxu0 %v2426
      %v2590 = vpop.f32.mrb[0].mxu0
      %v2591 = vadd.f32 0.0, %v2590
      %v2592 = vpop.f32.mrb[0].mxu0
      %2593 = vmatprep.mubr.f32.mxu0 0.0
      %2594 = vmatmul.mubr.f32.gmra.mrb[0].mxu0 %v2429
      %v2595 = vpop.f32.mrb[0].mxu0
      %v2596 = vadd.f32 0.0, %v2595
      %v2597 = vpop.f32.mrb[0].mxu0
      %2598 = vmatprep.mubr.f32.mxu0 0.0
      %2599 = vmatmul.mubr.f32.gmra.mrb[0].mxu0 %v2432
      %v2600 = vpop.f32.mrb[0].mxu0
      %v2601 = vadd.f32 0.0, %v2600
      %v2602 = vpop.f32.mrb[0].mxu0
      %2603 = vmatprep.mubr.f32.mxu0 0.0
      %2604 = vmatmul.mubr.f32.gmra.mrb[0].mxu0 %v2435
      %v2605 = vpop.f32.mrb[0].mxu0
      %v2606 = vadd.f32 0.0, %v2605
      %v2607 = vpop.f32.mrb[0].mxu0
      %2608 = vmatprep.mubr.f32.mxu0 0.0
      %2609 = vmatmul.mubr.f32.gmra.mrb[0].mxu0 %v2438
      %v2610 = vpop.f32.mrb[0].mxu0
      %v2611 = vadd.f32 0.0, %v2610
      %v2612 = vpop.f32.mrb[0].mxu0
      %2613 = vmatprep.mubr.f32.mxu0 0.0
      %2614 = vmatmul.mubr.f32.gmra.mrb[0].mxu0 %v2441
      %v2615 = vpop.f32.mrb[0].mxu0
      %v2616 = vadd.f32 0.0, %v2615
      %v2617 = vpop.f32.mrb[0].mxu0
      %2618 = vmatprep.mubr.f32.mxu0 0.0
      %2619 = vmatmul.mubr.f32.gmra.mrb[0].mxu0 %v2444
      %v2620 = vpop.f32.mrb[0].mxu0
      %v2621 = vadd.f32 0.0, %v2620
      %v2622 = vpop.f32.mrb[0].mxu0
      %2623 = vmatprep.mubr.f32.mxu0 0.0
      %2624 = vmatmul.mubr.f32.gmra.mrb[0].mxu0 %v2447
      %v2625 = vpop.f32.mrb[0].mxu0
      %v2626 = vadd.f32 0.0, %v2625
      %v2627 = vpop.f32.mrb[0].mxu0
      %2628 = vmatprep.mubr.f32.mxu0 0.0
      %2629 = vmatmul.mubr.f32.gmra.mrb[0].mxu0 %v2450
      %v2630 = vpop.f32.mrb[0].mxu0
      %v2631 = vadd.f32 0.0, %v2630
      %v2632 = vpop.f32.mrb[0].mxu0
      %2633 = vmatprep.mubr.f32.mxu0 0.0
      %2634 = vmatmul.mubr.f32.gmra.mrb[0].mxu0 %v2453
      %v2635 = vpop.f32.mrb[0].mxu0
      %v2636 = vadd.f32 0.0, %v2635
      %v2637 = vpop.f32.mrb[0].mxu0
      %2638 = vmatprep.mubr.f32.mxu0 0.0
      %2639 = vmatmul.mubr.f32.gmra.mrb[0].mxu0 %v2456
      %v2640 = vpop.f32.mrb[0].mxu0
      %v2641 = vadd.f32 0.0, %v2640
      %v2642 = vpop.f32.mrb[0].mxu0
      %2643 = vmatprep.mubr.f32.mxu0 0.0
      %2644 = vmatmul.mubr.f32.gmra.mrb[0].mxu0 %v2459
      %v2645 = vpop.f32.mrb[0].mxu0
      %v2646 = vadd.f32 0.0, %v2645
      %v2647 = vpop.f32.mrb[0].mxu0
      %2648 = vmatprep.mubr.f32.mxu0 0.0
      %2649 = vmatmul.mubr.f32.gmra.mrb[0].mxu0 %v2462
      %v2650 = vpop.f32.mrb[0].mxu0
      %v2651 = vadd.f32 0.0, %v2650
      %v2652 = vpop.f32.mrb[0].mxu0
      %2653 = vmatprep.mubr.f32.mxu0 0.0
      %2654 = vmatmul.mubr.f32.gmra.mrb[0].mxu0 %v2465
      %v2655 = vpop.f32.mrb[0].mxu0
      %v2656 = vadd.f32 0.0, %v2655
      %v2657 = vpop.f32.mrb[0].mxu0
      %2658 = vmatprep.mubr.f32.mxu0 0.0
      %2659 = vmatmul.mubr.f32.gmra.mrb[0].mxu0 %v2468
      %v2660 = vpop.f32.mrb[0].mxu0
      %v2661 = vadd.f32 0.0, %v2660
      %v2662 = vpop.f32.mrb[0].mxu0
      %2663 = vmatprep.mubr.f32.mxu0 0.0
      %2664 = vmatmul.mubr.f32.gmra.mrb[0].mxu0 %v2471
      %v2665 = vpop.f32.mrb[0].mxu0
      %v2666 = vadd.f32 0.0, %v2665
      %v2667 = vpop.f32.mrb[0].mxu0
      %2668 = vmatprep.mubr.f32.mxu0 0.0
      %2669 = vmatmul.mubr.f32.gmra.mrb[0].mxu0 %v2474
      %v2670 = vpop.f32.mrb[0].mxu0
      %v2671 = vadd.f32 0.0, %v2670
      %v2672 = vpop.f32.mrb[0].mxu0
      %2673 = vmatprep.mubr.f32.mxu0 0.0
      %2674 = vmatmul.mubr.f32.gmra.mrb[0].mxu0 %v2477
      %v2675 = vpop.f32.mrb[0].mxu0
      %v2676 = vadd.f32 0.0, %v2675
      %v2677 = vpop.f32.mrb[0].mxu0
      %2678 = vmatprep.mubr.f32.mxu0 0.0
      %2679 = vmatmul.mubr.f32.gmra.mrb[0].mxu0 %v2480
      %v2680 = vpop.f32.mrb[0].mxu0
      %v2681 = vadd.f32 0.0, %v2680
      %v2682 = vpop.f32.mrb[0].mxu0
      %2683 = vmatprep.mubr.f32.mxu0 0.0
      %2684 = vmatmul.mubr.f32.gmra.mrb[0].mxu0 %v2483
      %v2685 = vpop.f32.mrb[0].mxu0
      %v2686 = vadd.f32 0.0, %v2685
      %v2687 = vpop.f32.mrb[0].mxu0
      %2688 = vmatprep.mubr.f32.mxu0 0.0
      %2689 = vmatmul.mubr.f32.gmra.mrb[0].mxu0 %v2486
      %v2690 = vpop.f32.mrb[0].mxu0
      %v2691 = vadd.f32 0.0, %v2690
      %v2692 = vpop.f32.mrb[0].mxu0
      %2693 = vmatprep.mubr.f32.mxu0 0.0
      %2694 = vmatmul.mubr.f32.gmra.mrb[0].mxu0 %v2489
      %v2695 = vpop.f32.mrb[0].mxu0
      %v2696 = vadd.f32 0.0, %v2695
      %v2697 = vpop.f32.mrb[0].mxu0
      %2698 = vmatprep.mubr.f32.mxu0 0.0
      %2699 = vmatmul.mubr.f32.gmra.mrb[0].mxu0 %v2492
      %v2700 = vpop.f32.mrb[0].mxu0
      %v2701 = vadd.f32 0.0, %v2700
      %v2702 = vpop.f32.mrb[0].mxu0
      %2703 = vmatprep.mubr.f32.mxu0 0.0
      %2704 = vmatmul.mubr.f32.gmra.mrb[0].mxu0 %v2495
      %v2705 = vpop.f32.mrb[0].mxu0
      %v2706 = vadd.f32 0.0, %v2705
      %v2707 = vpop.f32.mrb[0].mxu0
      %2708 = vmatprep.mubr.f32.mxu0 0.0
      %2709 = vmatmul.mubr.f32.gmra.mrb[0].mxu0 %v2498
      %v2710 = vpop.f32.mrb[0].mxu0
      %v2711 = vadd.f32 0.0, %v2710
      %v2712 = vpop.f32.mrb[0].mxu0
      %2713 = vmatprep.mubr.f32.mxu0 0.0
      %2714 = vmatmul.mubr.f32.gmra.mrb[0].mxu0 %v2501
      %v2715 = vpop.f32.mrb[0].mxu0
      %v2716 = vadd.f32 0.0, %v2715
      %v2717 = vpop.f32.mrb[0].mxu0
      %2718 = vmatprep.mubr.f32.mxu0 0.0
      %2719 = vmatmul.mubr.f32.gmra.mrb[0].mxu0 %v2504
      %v2720 = vpop.f32.mrb[0].mxu0
      %v2721 = vadd.f32 0.0, %v2720
      %v2722 = vpop.f32.mrb[0].mxu0
      %2723 = vmatprep.mubr.f32.mxu0 0.0
      %2724 = vmatmul.mubr.f32.gmra.mrb[0].mxu0 %v2507
      %v2725 = vpop.f32.mrb[0].mxu0
      %v2726 = vadd.f32 0.0, %v2725
      %v2727 = vpop.f32.mrb[0].mxu0
      %2728 = vmatprep.mubr.f32.mxu0 0.0
      %2729 = vmatmul.mubr.f32.gmra.mrb[0].mxu0 %v2510
      %v2730 = vpop.f32.mrb[0].mxu0
      %v2731 = vadd.f32 0.0, %v2730
      %v2732 = vpop.f32.mrb[0].mxu0
      %2733 = vmatprep.mubr.f32.mxu0 0.0
      %2734 = vmatmul.mubr.f32.gmra.mrb[0].mxu0 %v2513
      %v2735 = vpop.f32.mrb[0].mxu0
      %v2736 = vadd.f32 0.0, %v2735
      %v2737 = vpop.f32.mrb[0].mxu0
      %2738 = vmatprep.mubr.f32.mxu0 0.0
      %2739 = vmatmul.mubr.f32.gmra.mrb[0].mxu0 %v2516
      %v2740 = vpop.f32.mrb[0].mxu0
      %v2741 = vadd.f32 0.0, %v2740
      %v2742 = vpop.f32.mrb[0].mxu0
      %2743 = vmatprep.mubr.f32.mxu0 0.0
      %2744 = vmatmul.mubr.f32.gmra.mrb[0].mxu0 %v2519
      %v2745 = vpop.f32.mrb[0].mxu0
      %v2746 = vadd.f32 0.0, %v2745
      %v2747 = vpop.f32.mrb[0].mxu0
      %2748 = vdwg.mxu0
      %v2749 = vadd.f32 %v2232, %v2591
      %v2750 = vadd.f32 %v2237, %v2596
      %v2751 = vadd.f32 %v2242, %v2601
      %v2752 = vadd.f32 %v2247, %v2606
      %v2753 = vadd.f32 %v2252, %v2611
      %v2754 = vadd.f32 %v2257, %v2616
      %v2755 = vadd.f32 %v2262, %v2621
      %v2756 = vadd.f32 %v2267, %v2626
      %v2757 = vadd.f32 %v2272, %v2631
      %v2758 = vadd.f32 %v2277, %v2636
      %v2759 = vadd.f32 %v2282, %v2641
      %v2760 = vadd.f32 %v2287, %v2646
      %v2761 = vadd.f32 %v2292, %v2651
      %v2762 = vadd.f32 %v2297, %v2656
      %v2763 = vadd.f32 %v2302, %v2661
      %v2764 = vadd.f32 %v2307, %v2666
      %v2765 = vadd.f32 %v2312, %v2671
      %v2766 = vadd.f32 %v2317, %v2676
      %v2767 = vadd.f32 %v2322, %v2681
      %v2768 = vadd.f32 %v2327, %v2686
      %v2769 = vadd.f32 %v2332, %v2691
      %v2770 = vadd.f32 %v2337, %v2696
      %v2771 = vadd.f32 %v2342, %v2701
      %v2772 = vadd.f32 %v2347, %v2706
      %v2773 = vadd.f32 %v2352, %v2711
      %v2774 = vadd.f32 %v2357, %v2716
      %v2775 = vadd.f32 %v2362, %v2721
      %v2776 = vadd.f32 %v2367, %v2726
      %v2777 = vadd.f32 %v2372, %v2731
      %v2778 = vadd.f32 %v2377, %v2736
      %v2779 = vadd.f32 %v2382, %v2741
      %v2780 = vadd.f32 %v2387, %v2746
      %v2781 = vld [vmem:[%s3] sm:$0x1]
      %v2783 = vlaneseq
      %v2784 = vshrl.u32 %v2783, 7
      %v2785 = vsub.s32 0, %v2784
      %v2786 = vrot.slane %v2781, %v2785
      %v2788 = vadd.f32 %v2749, %v2786
      %v2789 = vadd.f32 %v2750, %v2786
      %v2790 = vadd.f32 %v2751, %v2786
      %v2791 = vadd.f32 %v2752, %v2786
      %v2792 = vadd.f32 %v2753, %v2786
      %v2793 = vadd.f32 %v2754, %v2786
      %v2794 = vadd.f32 %v2755, %v2786
      %v2795 = vadd.f32 %v2756, %v2786
      %v2796 = vadd.f32 %v2757, %v2786
      %v2797 = vadd.f32 %v2758, %v2786
      %v2798 = vadd.f32 %v2759, %v2786
      %v2799 = vadd.f32 %v2760, %v2786
      %v2800 = vadd.f32 %v2761, %v2786
      %v2801 = vadd.f32 %v2762, %v2786
      %v2802 = vadd.f32 %v2763, %v2786
      %v2803 = vadd.f32 %v2764, %v2786
      %v2804 = vadd.f32 %v2765, %v2786
      %v2805 = vadd.f32 %v2766, %v2786
      %v2806 = vadd.f32 %v2767, %v2786
      %v2807 = vadd.f32 %v2768, %v2786
      %v2808 = vadd.f32 %v2769, %v2786
      %v2809 = vadd.f32 %v2770, %v2786
      %v2810 = vadd.f32 %v2771, %v2786
      %v2811 = vadd.f32 %v2772, %v2786
      %v2812 = vadd.f32 %v2773, %v2786
      %v2813 = vadd.f32 %v2774, %v2786
      %v2814 = vadd.f32 %v2775, %v2786
      %v2815 = vadd.f32 %v2776, %v2786
      %v2816 = vadd.f32 %v2777, %v2786
      %v2817 = vadd.f32 %v2778, %v2786
      %v2818 = vadd.f32 %v2779, %v2786
      %v2819 = vadd.f32 %v2780, %v2786
      %v2820 = vmax.f32 %v2788, 0.0
      %v2821 = vmax.f32 %v2789, 0.0
      %v2822 = vmax.f32 %v2790, 0.0
      %v2823 = vmax.f32 %v2791, 0.0
      %v2824 = vmax.f32 %v2792, 0.0
      %v2825 = vmax.f32 %v2793, 0.0
      %v2826 = vmax.f32 %v2794, 0.0
      %v2827 = vmax.f32 %v2795, 0.0
      %v2828 = vmax.f32 %v2796, 0.0
      %v2829 = vmax.f32 %v2797, 0.0
      %v2830 = vmax.f32 %v2798, 0.0
      %v2831 = vmax.f32 %v2799, 0.0
      %v2832 = vmax.f32 %v2800, 0.0
      %v2833 = vmax.f32 %v2801, 0.0
      %v2834 = vmax.f32 %v2802, 0.0
      %v2835 = vmax.f32 %v2803, 0.0
      %v2836 = vmax.f32 %v2804, 0.0
      %v2837 = vmax.f32 %v2805, 0.0
      %v2838 = vmax.f32 %v2806, 0.0
      %v2839 = vmax.f32 %v2807, 0.0
      %v2840 = vmax.f32 %v2808, 0.0
      %v2841 = vmax.f32 %v2809, 0.0
      %v2842 = vmax.f32 %v2810, 0.0
      %v2843 = vmax.f32 %v2811, 0.0
      %v2844 = vmax.f32 %v2812, 0.0
      %v2845 = vmax.f32 %v2813, 0.0
      %v2846 = vmax.f32 %v2814, 0.0
      %v2847 = vmax.f32 %v2815, 0.0
      %v2848 = vmax.f32 %v2816, 0.0
      %v2849 = vmax.f32 %v2817, 0.0
      %v2850 = vmax.f32 %v2818, 0.0
      %v2851 = vmax.f32 %v2819, 0.0
      %vm2852 = vcmask 64512
      %2853 = vst.msk [vmem:[%s318] sm:$0xff] %vm2852, %v2820
      %2854 = vst.msk [vmem:[%s318 + $0x8] sm:$0xff] %vm2852, %v2821
      %2855 = vst.msk [vmem:[%s318 + $0x10] sm:$0xff] %vm2852, %v2822
      %2856 = vst.msk [vmem:[%s318 + $0x18] sm:$0xff] %vm2852, %v2823
      %2857 = vst.msk [vmem:[%s318 + $0x20] sm:$0xff] %vm2852, %v2824
      %2858 = vst.msk [vmem:[%s318 + $0x28] sm:$0xff] %vm2852, %v2825
      %2859 = vst.msk [vmem:[%s318 + $0x30] sm:$0xff] %vm2852, %v2826
      %2860 = vst.msk [vmem:[%s318 + $0x38] sm:$0xff] %vm2852, %v2827
      %2861 = vst.msk [vmem:[%s318 + $0x40] sm:$0xff] %vm2852, %v2828
      %2862 = vst.msk [vmem:[%s318 + $0x48] sm:$0xff] %vm2852, %v2829
      %2863 = vst.msk [vmem:[%s318 + $0x50] sm:$0xff] %vm2852, %v2830
      %2864 = vst.msk [vmem:[%s318 + $0x58] sm:$0xff] %vm2852, %v2831
      %2865 = vst.msk [vmem:[%s318 + $0x60] sm:$0xff] %vm2852, %v2832
      %2866 = vst.msk [vmem:[%s318 + $0x68] sm:$0xff] %vm2852, %v2833
      %2867 = vst.msk [vmem:[%s318 + $0x70] sm:$0xff] %vm2852, %v2834
      %2868 = vst.msk [vmem:[%s318 + $0x78] sm:$0xff] %vm2852, %v2835
      %2869 = vst.msk [vmem:[%s318 + $0x80] sm:$0xff] %vm2852, %v2836
      %2870 = vst.msk [vmem:[%s318 + $0x88] sm:$0xff] %vm2852, %v2837
      %2871 = vst.msk [vmem:[%s318 + $0x90] sm:$0xff] %vm2852, %v2838
      %2872 = vst.msk [vmem:[%s318 + $0x98] sm:$0xff] %vm2852, %v2839
      %2873 = vst.msk [vmem:[%s318 + $0xa0] sm:$0xff] %vm2852, %v2840
      %2874 = vst.msk [vmem:[%s318 + $0xa8] sm:$0xff] %vm2852, %v2841
      %2875 = vst.msk [vmem:[%s318 + $0xb0] sm:$0xff] %vm2852, %v2842
      %2876 = vst.msk [vmem:[%s318 + $0xb8] sm:$0xff] %vm2852, %v2843
      %2877 = vst.msk [vmem:[%s318 + $0xc0] sm:$0xff] %vm2852, %v2844
      %2878 = vst.msk [vmem:[%s318 + $0xc8] sm:$0xff] %vm2852, %v2845
      %2879 = vst.msk [vmem:[%s318 + $0xd0] sm:$0xff] %vm2852, %v2846
      %2880 = vst.msk [vmem:[%s318 + $0xd8] sm:$0xff] %vm2852, %v2847
      %2881 = vst.msk [vmem:[%s318 + $0xe0] sm:$0xff] %vm2852, %v2848
      %2882 = vst.msk [vmem:[%s318 + $0xe8] sm:$0xff] %vm2852, %v2849
      %2883 = vst.msk [vmem:[%s318 + $0xf0] sm:$0xff] %vm2852, %v2850
      %2884 = vst.msk [vmem:[%s318 + $0xf8] sm:$0xff] %vm2852, %v2851
      %s2885 = smul.u32 16, %s20
      %p2886 = scmp.lt.s32.totalorder %s19, 1
      %s2887 = scalar_select %p2886, %s19, 1
      %p2888 = scmp.lt.s32.totalorder %s2885, 15
      %s2889 = scalar_select %p2888, %s2885, 15
      %s2890 = smul.addr %s2889, 2
      %s2891 = smul.addr %s2887, 32
      %s2892 = sadd.s32 %s2890, %s2891
      %s2893 = smul.addr %s2892, 8
      %s2894 = scalar_lea.vmem %s4, %s2893
      // Predicated region
      $region37: #{tpu_custom_call.1} parent=35 // pred_check
        %p2895 = pneg %p149
      $region38: #{tpu_custom_call.1} parent=35 // pred_check_branch
        %2897 = sbr.rel (%p2895) target = $region40
      $region39: #{tpu_custom_call.1} parent=35 // pred_region
        %s2898 = smul.u32 16, %s20
      $region40: #{tpu_custom_call.1} parent=35 // pred_fallthru
        _
    $region36: #{tpu_custom_call.1} parent=5 // pred_fallthru
      _
    %p2899 = scmp.le.s32.totalorder 2, %s10
    // Predicated region
    $region41: #{tpu_custom_call.1} parent=5 // pred_check
      %p2900 = pneg %p2899
    $region42: #{tpu_custom_call.1} parent=5 // pred_check_branch
      %2902 = sbr.rel (%p2900) target = $region44
    $region43: #{tpu_custom_call.1} parent=5 // pred_region
      %s2903 = ssub.s32 %s10, 2
      // Predicated region
      $region45: #{tpu_custom_call.1} parent=43 // pred_check
        %p2904 = pneg %p155
      $region46: #{tpu_custom_call.1} parent=43 // pred_check_branch
        %2906 = sbr.rel (%p2904) target = $region48
      $region47: #{tpu_custom_call.1} parent=43 // pred_region
        %s2907 = smul.u32 16, %s22
        %p2908 = scmp.lt.s32.totalorder %s21, 1
        %s2909 = scalar_select %p2908, %s21, 1
        %p2910 = scmp.lt.s32.totalorder %s2907, 15
        %s2911 = scalar_select %p2910, %s2907, 15
        %s2912 = smul.addr %s2911, 2
        %s2913 = smul.addr %s2909, 32
        %s2914 = sadd.s32 %s2912, %s2913
        %s2915 = smul.addr %s2914, 8
        %s2916 = scalar_lea.vmem %s4, %s2915
      $region48: #{tpu_custom_call.1} parent=43 // pred_fallthru
        _
    $region44: #{tpu_custom_call.1} parent=5 // pred_fallthru
      _
  $region6: #{tpu_custom_call.1} parent=0 // loop_footer
    %s14 = sadd.s32 1, %s10
  $region7: #{tpu_custom_call.1} parent=0 // loop_footer_branch
    %9 = sbr.rel target = $region3
  $region8: #{tpu_custom_call.1} parent=0 // loop_exit
    _

</llo_original>
